<compile_context>
chip_gen: v7x
topology: tpu7x:2x2x1
jax: 0.10.0
libtpu: 0.0.40
codegen_flags: <defaults>
</compile_context>

<pallas_src>
import functools

import jax
import jax.numpy as jnp
from jax.experimental import pallas as pl
from jax.experimental.pallas import tpu as pltpu

_EPS = 1e-5

_PARAM_ORDER = (
    "sa_wq", "sa_wk", "sa_wv", "sa_wo", "sa_bo", "sa_ln_g", "sa_ln_b",
    "ca_wq", "ca_wk", "ca_wv", "ca_wo", "ca_bo", "ca_ln_g", "ca_ln_b",
    "ff_w1", "ff_b1", "ff_w2", "ff_b2", "ff_ln_g", "ff_ln_b",
)

_MATMUL_WEIGHTS = ("sa_wq", "sa_wk", "sa_wv", "sa_wo",
                   "ca_wq", "ca_wk", "ca_wv", "ca_wo",
                   "ff_w1", "ff_w2")


# ----------------------------- in-kernel helpers ----------------------------

def _layer_norm(x, gamma, beta, eps):
    mu = jnp.mean(x, axis=-1, keepdims=True)
    var = jnp.mean(jnp.square(x - mu), axis=-1, keepdims=True)
    return (x - mu) * jax.lax.rsqrt(var + eps) * gamma + beta


def _mha_scrambled(q, kv, bias, wq, wk, wv, asm_ref, *, num_heads, scale, cd):
    """Multi-head attention for one batch element.

    q: (S, D) f32, kv: (T, D) f32, wq/wk/wv: (D, D), bias: (S, T) additive
    bias or None.  Writes the torch `y.reshape(N, S, -1)` row-mixed layout
    directly into the lane-dense (S, D) f32 scratch `asm_ref` and returns it.
    """
    S = q.shape[0]
    D = wq.shape[1]
    Dh = D // num_heads
    # Fused lane-dense projections: one big matmul per Q/K/V, not H tiny ones.
    qp = jnp.dot(q.astype(cd), wq.astype(cd), preferred_element_type=jnp.float32)   # (S, D)
    kp = jnp.dot(kv.astype(cd), wk.astype(cd), preferred_element_type=jnp.float32)  # (T, D)
    vp = jnp.dot(kv.astype(cd), wv.astype(cd), preferred_element_type=jnp.float32)  # (T, D)
    qp = qp * scale                       # fold 1/sqrt(Dh) once (not per score tile)
    for h in range(num_heads):            # static loop: one head live at a time
        lo = h * Dh
        qh = qp[:, lo:lo + Dh].astype(cd)
        kh = kp[:, lo:lo + Dh].astype(cd)
        vh = vp[:, lo:lo + Dh].astype(cd)
        s = jax.lax.dot_general(qh, kh, (((1,), (1,)), ((), ())),
                                preferred_element_type=jnp.float32)                 # (S, T)
        if bias is not None:
            s = s + bias
        m = jnp.max(s, axis=-1, keepdims=True)
        e = jnp.exp(s - m)
        p = e * pl.reciprocal(jnp.sum(e, axis=-1, keepdims=True), approx=True)
        yh = jnp.dot(p.astype(cd), vh, preferred_element_type=jnp.float32)          # (S, Dh)
        # torch quirk: (N, H, S, Dh).reshape(N, S, D) mixes heads and sequence
        # rows.  Scatter head h's rows straight to their final positions using
        # only static (1, Dh) slice stores — stays on-chip, never touches HBM.
        for s_idx in range(S):
            r = h * S + s_idx
            dst_row = r // num_heads
            dst_col = (r % num_heads) * Dh
            asm_ref[dst_row:dst_row + 1, dst_col:dst_col + Dh] = yh[s_idx:s_idx + 1, :]
    return asm_ref[...]                   # (S, D) f32, lane-dense


# -------------------------------- Pallas kernel -------------------------------

def _decoder_layer_kernel(
        seq_ref, cond_ref, bias_ref,
        sa_wq_ref, sa_wk_ref, sa_wv_ref, sa_wo_ref, sa_bo_ref, sa_g_ref, sa_b_ref,
        ca_wq_ref, ca_wk_ref, ca_wv_ref, ca_wo_ref, ca_bo_ref, ca_g_ref, ca_b_ref,
        ff_w1_ref, ff_b1_ref, ff_w2_ref, ff_b2_ref, ff_g_ref, ff_b_ref,
        out_ref, asm_ref, *, num_heads, scale, eps, compute_dtype):
    cd = compute_dtype
    seq = seq_ref[...]                                            # (S, D) f32

    # ---- self-attention block (additive mask bias, precomputed on host) ----
    y1 = _mha_scrambled(seq, seq, bias_ref[...],
                        sa_wq_ref[...], sa_wk_ref[...], sa_wv_ref[...], asm_ref,
                        num_heads=num_heads, scale=scale, cd=cd)
    a1 = jnp.dot(y1.astype(cd), sa_wo_ref[...].astype(cd),
                 preferred_element_type=jnp.float32) + sa_bo_ref[...]
    out1 = _layer_norm(seq + a1, sa_g_ref[...], sa_b_ref[...], eps)

    # ---- cross-attention block (no mask) ----
    y2 = _mha_scrambled(out1, cond_ref[...], None,
                        ca_wq_ref[...], ca_wk_ref[...], ca_wv_ref[...], asm_ref,
                        num_heads=num_heads, scale=scale, cd=cd)
    a2 = jnp.dot(y2.astype(cd), ca_wo_ref[...].astype(cd),
                 preferred_element_type=jnp.float32) + ca_bo_ref[...]
    out2 = _layer_norm(out1 + a2, ca_g_ref[...], ca_b_ref[...], eps)

    # ---- feed-forward block ----
    h = jnp.dot(out2.astype(cd), ff_w1_ref[...].astype(cd),
                preferred_element_type=jnp.float32) + ff_b1_ref[...]
    h = jnp.maximum(h, 0.0)
    y = jnp.dot(h.astype(cd), ff_w2_ref[...].astype(cd),
                preferred_element_type=jnp.float32) + ff_b2_ref[...]
    out_ref[...] = _layer_norm(out2 + y, ff_g_ref[...], ff_b_ref[...], eps
                               ).astype(out_ref.dtype)
    # TODO(synk): tile F / add flash-style KV tiling for production-size S, T, F.


# ----------------------------------- wrapper ----------------------------------

@functools.partial(jax.jit, static_argnames=("num_heads", "compute_dtype"))
def decoder_layer(seq, cond, mask, params, *, num_heads, compute_dtype=jnp.float32):
    N, S, D = seq.shape
    scale = float(1.0 / (D / num_heads) ** 0.5)
    # Additive mask bias, built once on host (keeps arbitrary-mask semantics of
    # the module; removes the (S,S) compare/select from every grid step).
    bias = jnp.where(mask == 0, jnp.float32(-1e8), jnp.float32(0.0))

    kernel = functools.partial(_decoder_layer_kernel, num_heads=num_heads,
                               scale=scale, eps=_EPS, compute_dtype=compute_dtype)

    def batch_spec(shape):
        # one batch element per grid step, full trailing dims.
        return pl.BlockSpec((None,) + tuple(shape[1:]), lambda n: (n, 0, 0))

    def const_spec(shape):
        nd = len(shape)
        return pl.BlockSpec(tuple(shape), lambda n, _nd=nd: (0,) * _nd)

    in_specs = ([batch_spec(seq.shape), batch_spec(cond.shape), const_spec(bias.shape)]
                + [const_spec(params[k].shape) for k in _PARAM_ORDER])

    return pl.pallas_call(
        kernel,
        out_shape=jax.ShapeDtypeStruct((N, S, D), jnp.float32),
        grid=(N,),
        in_specs=in_specs,
        out_specs=batch_spec((N, S, D)),
        scratch_shapes=[pltpu.VMEM((S, D), jnp.float32)],   # head-scramble scratch
        compiler_params=pltpu.CompilerParams(
            dimension_semantics=("parallel",),
            vmem_limit_bytes=64 * 1024 * 1024),
    )(seq, cond, bias, *[params[k] for k in _PARAM_ORDER])


# ------------------------------- parameter setup -------------------------------

def cast_matmul_weights(params, dtype):
    """Cast MXU-facing weight matrices on host (biases / LN params stay f32), so
    the in-kernel `.astype(compute_dtype)` is a no-op and HBM traffic halves."""
    return {k: (v.astype(dtype) if k in _MATMUL_WEIGHTS else v) for k, v in params.items()}


def init_params(key, D, F):
    ks = jax.random.split(key, 10)
    s = 0.1
    p = {
        "sa_wq": s * jax.random.normal(ks[0], (D, D), jnp.float32),
        "sa_wk": s * jax.random.normal(ks[1], (D, D), jnp.float32),
        "sa_wv": s * jax.random.normal(ks[2], (D, D), jnp.float32),
        "sa_wo": s * jax.random.normal(ks[3], (D, D), jnp.float32),
        "sa_bo": s * jax.random.normal(ks[4], (1, D), jnp.float32),
        "sa_ln_g": jnp.ones((1, D), jnp.float32),
        "sa_ln_b": jnp.zeros((1, D), jnp.float32),
        "ca_wq": s * jax.random.normal(ks[5], (D, D), jnp.float32),
        "ca_wk": s * jax.random.normal(ks[6], (D, D), jnp.float32),
        "ca_wv": s * jax.random.normal(ks[7], (D, D), jnp.float32),
        "ca_wo": s * jax.random.normal(ks[8], (D, D), jnp.float32),
        "ca_bo": s * jax.random.normal(ks[9], (1, D), jnp.float32),
        "ca_ln_g": jnp.ones((1, D), jnp.float32),
        "ca_ln_b": jnp.zeros((1, D), jnp.float32),
    }
    kf = jax.random.split(jax.random.fold_in(key, 123), 4)
    p.update({
        "ff_w1": s * jax.random.normal(kf[0], (D, F), jnp.float32),
        "ff_b1": s * jax.random.normal(kf[1], (1, F), jnp.float32),
        "ff_w2": s * jax.random.normal(kf[2], (F, D), jnp.float32),
        "ff_b2": s * jax.random.normal(kf[3], (1, D), jnp.float32),
        "ff_ln_g": jnp.ones((1, D), jnp.float32),
        "ff_ln_b": jnp.zeros((1, D), jnp.float32),
    })
    return p


# ------------------------------ pure-JAX reference ------------------------------

def _mha_ref(q, kv, mask, wq, wk, wv, wo, bo, H):
    N, S, D = q.shape
    qp, kp, vp = q @ wq, kv @ wk, kv @ wv
    qh = jnp.stack(jnp.split(qp, H, axis=2), axis=1)   # (N, H, S, Dh)
    kh = jnp.stack(jnp.split(kp, H, axis=2), axis=1)
    vh = jnp.stack(jnp.split(vp, H, axis=2), axis=1)
    s = jnp.einsum("nhsd,nhtd->nhst", qh, kh) / jnp.sqrt(D / H)
    if mask is not None:
        s = jnp.where(mask == 0, -1e8, s)
    p = jax.nn.softmax(s, axis=-1)
    y = jnp.einsum("nhst,nhtd->nhsd", p, vh)
    y = y.reshape(N, S, -1)       # torch quirk: raw reshape of (N, H, S, Dh)
    return y @ wo + bo


def _ln_ref(x, g, b, eps=_EPS):
    mu = x.mean(-1, keepdims=True)
    var = ((x - mu) ** 2).mean(-1, keepdims=True)
    return (x - mu) / jnp.sqrt(var + eps) * g + b


def decoder_layer_ref(seq, cond, mask, p, *, num_heads):
    H = num_heads
    x = _mha_ref(seq, seq, mask, p["sa_wq"], p["sa_wk"], p["sa_wv"], p["sa_wo"], p["sa_bo"], H)
    out1 = _ln_ref(seq + x, p["sa_ln_g"], p["sa_ln_b"])
    x = _mha_ref(out1, cond, None, p["ca_wq"], p["ca_wk"], p["ca_wv"], p["ca_wo"], p["ca_bo"], H)
    out2 = _ln_ref(out1 + x, p["ca_ln_g"], p["ca_ln_b"])
    h = jnp.maximum(out2 @ p["ff_w1"] + p["ff_b1"], 0.0)
    x = h @ p["ff_w2"] + p["ff_b2"]
    return _ln_ref(out2 + x, p["ff_ln_g"], p["ff_ln_b"])


# -------------------------------------- main ------------------------------------

if __name__ == "__main__":
    N, S, T, D, H, F = 2, 8, 16, 32, 4, 64

    key = jax.random.PRNGKey(0)
    k_seq, k_cond, k_par = jax.random.split(key, 3)
    seq = jax.random.normal(k_seq, (N, S, D), jnp.float32)
    cond = jax.random.normal(k_cond, (N, T, D), jnp.float32)
    mask = jnp.tril(jnp.ones((S, S), jnp.float32))   # causal: 1 = keep, 0 = masked
    params = init_params(k_par, D, F)

    ref = decoder_layer_ref(seq, cond, mask, params, num_heads=H)

    # f32 MXU path (only the approx EUP reciprocal differs from the reference).
    out_f32 = jax.block_until_ready(
        decoder_layer(seq, cond, mask, params, num_heads=H, compute_dtype=jnp.float32))
    assert out_f32.shape == (N, S, D)
    err32 = float(jnp.max(jnp.abs(out_f32 - ref)))
    assert jnp.allclose(out_f32, ref, rtol=1e-2, atol=1e-2), f"f32 max abs err = {err32}"

    # bf16-fed MXU path (recommended production config): bf16 matmul operands,
    # f32 accumulation, f32 softmax / LayerNorm math, weights pre-cast on host.
    bf16_params = cast_matmul_weights(params, jnp.bfloat16)
    out_bf16 = jax.block_until_ready(
        decoder_layer(seq, cond, mask, bf16_params, num_heads=H, compute_dtype=jnp.bfloat16))
    err16 = float(jnp.max(jnp.abs(out_bf16 - ref)))
    assert jnp.allclose(out_bf16, ref, rtol=5e-2, atol=5e-2), f"bf16 max abs err = {err16}"

    print("KERNEL_OK")
</pallas_src>

<mosaic_0001>
module attributes {stable_mosaic.version = 11 : i64} {
  func.func @_decoder_layer_kernel(%arg0: i32, %arg1: memref<1x8x32xf32, #tpu.memory_space<vmem>>, %arg2: memref<1x16x32xf32, #tpu.memory_space<vmem>>, %arg3: memref<8x8xf32, #tpu.memory_space<vmem>>, %arg4: memref<32x32xf32, #tpu.memory_space<vmem>>, %arg5: memref<32x32xf32, #tpu.memory_space<vmem>>, %arg6: memref<32x32xf32, #tpu.memory_space<vmem>>, %arg7: memref<32x32xf32, #tpu.memory_space<vmem>>, %arg8: memref<1x32xf32, #tpu.memory_space<vmem>>, %arg9: memref<1x32xf32, #tpu.memory_space<vmem>>, %arg10: memref<1x32xf32, #tpu.memory_space<vmem>>, %arg11: memref<32x32xf32, #tpu.memory_space<vmem>>, %arg12: memref<32x32xf32, #tpu.memory_space<vmem>>, %arg13: memref<32x32xf32, #tpu.memory_space<vmem>>, %arg14: memref<32x32xf32, #tpu.memory_space<vmem>>, %arg15: memref<1x32xf32, #tpu.memory_space<vmem>>, %arg16: memref<1x32xf32, #tpu.memory_space<vmem>>, %arg17: memref<1x32xf32, #tpu.memory_space<vmem>>, %arg18: memref<32x64xf32, #tpu.memory_space<vmem>>, %arg19: memref<1x64xf32, #tpu.memory_space<vmem>>, %arg20: memref<64x32xf32, #tpu.memory_space<vmem>>, %arg21: memref<1x32xf32, #tpu.memory_space<vmem>>, %arg22: memref<1x32xf32, #tpu.memory_space<vmem>>, %arg23: memref<1x32xf32, #tpu.memory_space<vmem>>, %arg24: memref<1x8x32xf32, #tpu.memory_space<vmem>>, %arg25: memref<8x32xf32, #tpu.memory_space<vmem>>) attributes {dimension_semantics = [#tpu.dimension_semantics<parallel>], iteration_bounds = array<i64: 2>, scalar_prefetch = 0 : i64, scratch_operands = 1 : i64, tpu.core_type = #tpu.core_type<tc>, window_params = [{transform_indices = @transform_0, window_bounds = array<i64: 1, 8, 32>}, {transform_indices = @transform_1, window_bounds = array<i64: 1, 16, 32>}, {pipeline_mode = #tpu.pipeline_mode<synchronous>, transform_indices = @transform_2, window_bounds = array<i64: 8, 8>}, {pipeline_mode = #tpu.pipeline_mode<synchronous>, transform_indices = @transform_3, window_bounds = array<i64: 32, 32>}, {pipeline_mode = #tpu.pipeline_mode<synchronous>, transform_indices = @transform_4, window_bounds = array<i64: 32, 32>}, {pipeline_mode = #tpu.pipeline_mode<synchronous>, transform_indices = @transform_5, window_bounds = array<i64: 32, 32>}, {pipeline_mode = #tpu.pipeline_mode<synchronous>, transform_indices = @transform_6, window_bounds = array<i64: 32, 32>}, {pipeline_mode = #tpu.pipeline_mode<synchronous>, transform_indices = @transform_7, window_bounds = array<i64: 1, 32>}, {pipeline_mode = #tpu.pipeline_mode<synchronous>, transform_indices = @transform_8, window_bounds = array<i64: 1, 32>}, {pipeline_mode = #tpu.pipeline_mode<synchronous>, transform_indices = @transform_9, window_bounds = array<i64: 1, 32>}, {pipeline_mode = #tpu.pipeline_mode<synchronous>, transform_indices = @transform_10, window_bounds = array<i64: 32, 32>}, {pipeline_mode = #tpu.pipeline_mode<synchronous>, transform_indices = @transform_11, window_bounds = array<i64: 32, 32>}, {pipeline_mode = #tpu.pipeline_mode<synchronous>, transform_indices = @transform_12, window_bounds = array<i64: 32, 32>}, {pipeline_mode = #tpu.pipeline_mode<synchronous>, transform_indices = @transform_13, window_bounds = array<i64: 32, 32>}, {pipeline_mode = #tpu.pipeline_mode<synchronous>, transform_indices = @transform_14, window_bounds = array<i64: 1, 32>}, {pipeline_mode = #tpu.pipeline_mode<synchronous>, transform_indices = @transform_15, window_bounds = array<i64: 1, 32>}, {pipeline_mode = #tpu.pipeline_mode<synchronous>, transform_indices = @transform_16, window_bounds = array<i64: 1, 32>}, {pipeline_mode = #tpu.pipeline_mode<synchronous>, transform_indices = @transform_17, window_bounds = array<i64: 32, 64>}, {pipeline_mode = #tpu.pipeline_mode<synchronous>, transform_indices = @transform_18, window_bounds = array<i64: 1, 64>}, {pipeline_mode = #tpu.pipeline_mode<synchronous>, transform_indices = @transform_19, window_bounds = array<i64: 64, 32>}, {pipeline_mode = #tpu.pipeline_mode<synchronous>, transform_indices = @transform_20, window_bounds = array<i64: 1, 32>}, {pipeline_mode = #tpu.pipeline_mode<synchronous>, transform_indices = @transform_21, window_bounds = array<i64: 1, 32>}, {pipeline_mode = #tpu.pipeline_mode<synchronous>, transform_indices = @transform_22, window_bounds = array<i64: 1, 32>}, {transform_indices = @transform_23, window_bounds = array<i64: 1, 8, 32>}]} {
    %c0 = arith.constant 0 : index
    %c0_0 = arith.constant 0 : index
    %c0_1 = arith.constant 0 : index
    %0 = vector.load %arg1[%c0, %c0_0, %c0_1] : memref<1x8x32xf32, #tpu.memory_space<vmem>>, vector<1x8x32xf32>
    %1 = vector.shape_cast %0 : vector<1x8x32xf32> to vector<8x32xf32>
    %c0_2 = arith.constant 0 : index
    %c0_3 = arith.constant 0 : index
    %2 = vector.load %arg3[%c0_2, %c0_3] : memref<8x8xf32, #tpu.memory_space<vmem>>, vector<8x8xf32>
    %c0_4 = arith.constant 0 : index
    %c0_5 = arith.constant 0 : index
    %3 = vector.load %arg4[%c0_4, %c0_5] : memref<32x32xf32, #tpu.memory_space<vmem>>, vector<32x32xf32>
    %c0_6 = arith.constant 0 : index
    %c0_7 = arith.constant 0 : index
    %4 = vector.load %arg5[%c0_6, %c0_7] : memref<32x32xf32, #tpu.memory_space<vmem>>, vector<32x32xf32>
    %c0_8 = arith.constant 0 : index
    %c0_9 = arith.constant 0 : index
    %5 = vector.load %arg6[%c0_8, %c0_9] : memref<32x32xf32, #tpu.memory_space<vmem>>, vector<32x32xf32>
    %cst = arith.constant dense<0.000000e+00> : vector<8x32xf32>
    %6 = tpu.matmul %1, %3, %cst {dimension_numbers = #tpu.dot_dimension_numbers<[1], [0], [0], [1], [0, 0, 1, 1], [], []>} : vector<8x32xf32>, vector<32x32xf32>, vector<8x32xf32> -> vector<8x32xf32>
    %cst_10 = arith.constant dense<0.000000e+00> : vector<8x32xf32>
    %7 = tpu.matmul %1, %4, %cst_10 {dimension_numbers = #tpu.dot_dimension_numbers<[1], [0], [0], [1], [0, 0, 1, 1], [], []>} : vector<8x32xf32>, vector<32x32xf32>, vector<8x32xf32> -> vector<8x32xf32>
    %cst_11 = arith.constant dense<0.000000e+00> : vector<8x32xf32>
    %8 = tpu.matmul %1, %5, %cst_11 {dimension_numbers = #tpu.dot_dimension_numbers<[1], [0], [0], [1], [0, 0, 1, 1], [], []>} : vector<8x32xf32>, vector<32x32xf32>, vector<8x32xf32> -> vector<8x32xf32>
    %cst_12 = arith.constant 0.353553385 : f32
    %9 = vector.broadcast %cst_12 : f32 to vector<8x32xf32>
    %10 = arith.mulf %6, %9 : vector<8x32xf32>
    %11 = vector.extract_strided_slice %10 {offsets = [0, 0], sizes = [8, 8], strides = [1, 1]} : vector<8x32xf32> to vector<8x8xf32>
    %12 = vector.extract_strided_slice %7 {offsets = [0, 0], sizes = [8, 8], strides = [1, 1]} : vector<8x32xf32> to vector<8x8xf32>
    %13 = vector.extract_strided_slice %8 {offsets = [0, 0], sizes = [8, 8], strides = [1, 1]} : vector<8x32xf32> to vector<8x8xf32>
    %cst_13 = arith.constant dense<0.000000e+00> : vector<8x8xf32>
    %14 = tpu.matmul %11, %12, %cst_13 {dimension_numbers = #tpu.dot_dimension_numbers<[1], [1], [0], [0], [0, 0, 1, 0], [], []>} : vector<8x8xf32>, vector<8x8xf32>, vector<8x8xf32> -> vector<8x8xf32>
    %15 = arith.addf %14, %2 : vector<8x8xf32>
    %cst_14 = arith.constant dense<0xFF800000> : vector<8xf32>
    %16 = vector.multi_reduction <maximumf>, %15, %cst_14 [1] : vector<8x8xf32> to vector<8xf32>
    %17 = vector.shape_cast %16 : vector<8xf32> to vector<8x1xf32>
    %18 = vector.broadcast %17 : vector<8x1xf32> to vector<8x8xf32>
    %19 = arith.subf %15, %18 : vector<8x8xf32>
    %20 = math.exp %19 : vector<8x8xf32>
    %cst_15 = arith.constant dense<0.000000e+00> : vector<8xf32>
    %21 = vector.multi_reduction <add>, %20, %cst_15 [1] : vector<8x8xf32> to vector<8xf32>
    %22 = vector.shape_cast %21 : vector<8xf32> to vector<8x1xf32>
    %23 = tpu.reciprocal %22 {approx = true} : vector<8x1xf32> -> vector<8x1xf32>
    %24 = vector.broadcast %23 : vector<8x1xf32> to vector<8x8xf32>
    %25 = arith.mulf %20, %24 : vector<8x8xf32>
    %cst_16 = arith.constant dense<0.000000e+00> : vector<8x8xf32>
    %26 = tpu.matmul %25, %13, %cst_16 {dimension_numbers = #tpu.dot_dimension_numbers<[1], [0], [0], [1], [0, 0, 1, 1], [], []>} : vector<8x8xf32>, vector<8x8xf32>, vector<8x8xf32> -> vector<8x8xf32>
    %27 = vector.extract_strided_slice %26 {offsets = [0, 0], sizes = [1, 8], strides = [1, 1]} : vector<8x8xf32> to vector<1x8xf32>
    %c0_17 = arith.constant 0 : index
    %c0_18 = arith.constant 0 : index
    %28 = vector.load %arg25[%c0_17, %c0_18] : memref<8x32xf32, #tpu.memory_space<vmem>>, vector<1x8xf32>
    tpu.vector_store %arg25[%c0_17, %c0_18], %27 {strides = array<i32>} : memref<8x32xf32, #tpu.memory_space<vmem>>, vector<1x8xf32>,
    %29 = vector.extract_strided_slice %26 {offsets = [1, 0], sizes = [1, 8], strides = [1, 1]} : vector<8x8xf32> to vector<1x8xf32>
    %c0_19 = arith.constant 0 : index
    %c8 = arith.constant 8 : index
    %30 = vector.load %arg25[%c0_19, %c8] : memref<8x32xf32, #tpu.memory_space<vmem>>, vector<1x8xf32>
    tpu.vector_store %arg25[%c0_19, %c8], %29 {strides = array<i32>} : memref<8x32xf32, #tpu.memory_space<vmem>>, vector<1x8xf32>,
    %31 = vector.extract_strided_slice %26 {offsets = [2, 0], sizes = [1, 8], strides = [1, 1]} : vector<8x8xf32> to vector<1x8xf32>
    %c0_20 = arith.constant 0 : index
    %c16 = arith.constant 16 : index
    %32 = vector.load %arg25[%c0_20, %c16] : memref<8x32xf32, #tpu.memory_space<vmem>>, vector<1x8xf32>
    tpu.vector_store %arg25[%c0_20, %c16], %31 {strides = array<i32>} : memref<8x32xf32, #tpu.memory_space<vmem>>, vector<1x8xf32>,
    %33 = vector.extract_strided_slice %26 {offsets = [3, 0], sizes = [1, 8], strides = [1, 1]} : vector<8x8xf32> to vector<1x8xf32>
    %c0_21 = arith.constant 0 : index
    %c24 = arith.constant 24 : index
    %34 = vector.load %arg25[%c0_21, %c24] : memref<8x32xf32, #tpu.memory_space<vmem>>, vector<1x8xf32>
    tpu.vector_store %arg25[%c0_21, %c24], %33 {strides = array<i32>} : memref<8x32xf32, #tpu.memory_space<vmem>>, vector<1x8xf32>,
    %35 = vector.extract_strided_slice %26 {offsets = [4, 0], sizes = [1, 8], strides = [1, 1]} : vector<8x8xf32> to vector<1x8xf32>
    %c1 = arith.constant 1 : index
    %c0_22 = arith.constant 0 : index
    %36 = vector.load %arg25[%c1, %c0_22] : memref<8x32xf32, #tpu.memory_space<vmem>>, vector<1x8xf32>
    tpu.vector_store %arg25[%c1, %c0_22], %35 {strides = array<i32>} : memref<8x32xf32, #tpu.memory_space<vmem>>, vector<1x8xf32>,
    %37 = vector.extract_strided_slice %26 {offsets = [5, 0], sizes = [1, 8], strides = [1, 1]} : vector<8x8xf32> to vector<1x8xf32>
    %c1_23 = arith.constant 1 : index
    %c8_24 = arith.constant 8 : index
    %38 = vector.load %arg25[%c1_23, %c8_24] : memref<8x32xf32, #tpu.memory_space<vmem>>, vector<1x8xf32>
    tpu.vector_store %arg25[%c1_23, %c8_24], %37 {strides = array<i32>} : memref<8x32xf32, #tpu.memory_space<vmem>>, vector<1x8xf32>,
    %39 = vector.extract_strided_slice %26 {offsets = [6, 0], sizes = [1, 8], strides = [1, 1]} : vector<8x8xf32> to vector<1x8xf32>
    %c1_25 = arith.constant 1 : index
    %c16_26 = arith.constant 16 : index
    %40 = vector.load %arg25[%c1_25, %c16_26] : memref<8x32xf32, #tpu.memory_space<vmem>>, vector<1x8xf32>
    tpu.vector_store %arg25[%c1_25, %c16_26], %39 {strides = array<i32>} : memref<8x32xf32, #tpu.memory_space<vmem>>, vector<1x8xf32>,
    %41 = vector.extract_strided_slice %26 {offsets = [7, 0], sizes = [1, 8], strides = [1, 1]} : vector<8x8xf32> to vector<1x8xf32>
    %c1_27 = arith.constant 1 : index
    %c24_28 = arith.constant 24 : index
    %42 = vector.load %arg25[%c1_27, %c24_28] : memref<8x32xf32, #tpu.memory_space<vmem>>, vector<1x8xf32>
    tpu.vector_store %arg25[%c1_27, %c24_28], %41 {strides = array<i32>} : memref<8x32xf32, #tpu.memory_space<vmem>>, vector<1x8xf32>,
    %43 = vector.extract_strided_slice %10 {offsets = [0, 8], sizes = [8, 8], strides = [1, 1]} : vector<8x32xf32> to vector<8x8xf32>
    %44 = vector.extract_strided_slice %7 {offsets = [0, 8], sizes = [8, 8], strides = [1, 1]} : vector<8x32xf32> to vector<8x8xf32>
    %45 = vector.extract_strided_slice %8 {offsets = [0, 8], sizes = [8, 8], strides = [1, 1]} : vector<8x32xf32> to vector<8x8xf32>
    %cst_29 = arith.constant dense<0.000000e+00> : vector<8x8xf32>
    %46 = tpu.matmul %43, %44, %cst_29 {dimension_numbers = #tpu.dot_dimension_numbers<[1], [1], [0], [0], [0, 0, 1, 0], [], []>} : vector<8x8xf32>, vector<8x8xf32>, vector<8x8xf32> -> vector<8x8xf32>
    %47 = arith.addf %46, %2 : vector<8x8xf32>
    %cst_30 = arith.constant dense<0xFF800000> : vector<8xf32>
    %48 = vector.multi_reduction <maximumf>, %47, %cst_30 [1] : vector<8x8xf32> to vector<8xf32>
    %49 = vector.shape_cast %48 : vector<8xf32> to vector<8x1xf32>
    %50 = vector.broadcast %49 : vector<8x1xf32> to vector<8x8xf32>
    %51 = arith.subf %47, %50 : vector<8x8xf32>
    %52 = math.exp %51 : vector<8x8xf32>
    %cst_31 = arith.constant dense<0.000000e+00> : vector<8xf32>
    %53 = vector.multi_reduction <add>, %52, %cst_31 [1] : vector<8x8xf32> to vector<8xf32>
    %54 = vector.shape_cast %53 : vector<8xf32> to vector<8x1xf32>
    %55 = tpu.reciprocal %54 {approx = true} : vector<8x1xf32> -> vector<8x1xf32>
    %56 = vector.broadcast %55 : vector<8x1xf32> to vector<8x8xf32>
    %57 = arith.mulf %52, %56 : vector<8x8xf32>
    %cst_32 = arith.constant dense<0.000000e+00> : vector<8x8xf32>
    %58 = tpu.matmul %57, %45, %cst_32 {dimension_numbers = #tpu.dot_dimension_numbers<[1], [0], [0], [1], [0, 0, 1, 1], [], []>} : vector<8x8xf32>, vector<8x8xf32>, vector<8x8xf32> -> vector<8x8xf32>
    %59 = vector.extract_strided_slice %58 {offsets = [0, 0], sizes = [1, 8], strides = [1, 1]} : vector<8x8xf32> to vector<1x8xf32>
    %c2 = arith.constant 2 : index
    %c0_33 = arith.constant 0 : index
    %60 = vector.load %arg25[%c2, %c0_33] : memref<8x32xf32, #tpu.memory_space<vmem>>, vector<1x8xf32>
    tpu.vector_store %arg25[%c2, %c0_33], %59 {strides = array<i32>} : memref<8x32xf32, #tpu.memory_space<vmem>>, vector<1x8xf32>,
    %61 = vector.extract_strided_slice %58 {offsets = [1, 0], sizes = [1, 8], strides = [1, 1]} : vector<8x8xf32> to vector<1x8xf32>
    %c2_34 = arith.constant 2 : index
    %c8_35 = arith.constant 8 : index
    %62 = vector.load %arg25[%c2_34, %c8_35] : memref<8x32xf32, #tpu.memory_space<vmem>>, vector<1x8xf32>
    tpu.vector_store %arg25[%c2_34, %c8_35], %61 {strides = array<i32>} : memref<8x32xf32, #tpu.memory_space<vmem>>, vector<1x8xf32>,
    %63 = vector.extract_strided_slice %58 {offsets = [2, 0], sizes = [1, 8], strides = [1, 1]} : vector<8x8xf32> to vector<1x8xf32>
    %c2_36 = arith.constant 2 : index
    %c16_37 = arith.constant 16 : index
    %64 = vector.load %arg25[%c2_36, %c16_37] : memref<8x32xf32, #tpu.memory_space<vmem>>, vector<1x8xf32>
    tpu.vector_store %arg25[%c2_36, %c16_37], %63 {strides = array<i32>} : memref<8x32xf32, #tpu.memory_space<vmem>>, vector<1x8xf32>,
    %65 = vector.extract_strided_slice %58 {offsets = [3, 0], sizes = [1, 8], strides = [1, 1]} : vector<8x8xf32> to vector<1x8xf32>
    %c2_38 = arith.constant 2 : index
    %c24_39 = arith.constant 24 : index
    %66 = vector.load %arg25[%c2_38, %c24_39] : memref<8x32xf32, #tpu.memory_space<vmem>>, vector<1x8xf32>
    tpu.vector_store %arg25[%c2_38, %c24_39], %65 {strides = array<i32>} : memref<8x32xf32, #tpu.memory_space<vmem>>, vector<1x8xf32>,
    %67 = vector.extract_strided_slice %58 {offsets = [4, 0], sizes = [1, 8], strides = [1, 1]} : vector<8x8xf32> to vector<1x8xf32>
    %c3 = arith.constant 3 : index
    %c0_40 = arith.constant 0 : index
    %68 = vector.load %arg25[%c3, %c0_40] : memref<8x32xf32, #tpu.memory_space<vmem>>, vector<1x8xf32>
    tpu.vector_store %arg25[%c3, %c0_40], %67 {strides = array<i32>} : memref<8x32xf32, #tpu.memory_space<vmem>>, vector<1x8xf32>,
    %69 = vector.extract_strided_slice %58 {offsets = [5, 0], sizes = [1, 8], strides = [1, 1]} : vector<8x8xf32> to vector<1x8xf32>
    %c3_41 = arith.constant 3 : index
    %c8_42 = arith.constant 8 : index
    %70 = vector.load %arg25[%c3_41, %c8_42] : memref<8x32xf32, #tpu.memory_space<vmem>>, vector<1x8xf32>
    tpu.vector_store %arg25[%c3_41, %c8_42], %69 {strides = array<i32>} : memref<8x32xf32, #tpu.memory_space<vmem>>, vector<1x8xf32>,
    %71 = vector.extract_strided_slice %58 {offsets = [6, 0], sizes = [1, 8], strides = [1, 1]} : vector<8x8xf32> to vector<1x8xf32>
    %c3_43 = arith.constant 3 : index
    %c16_44 = arith.constant 16 : index
    %72 = vector.load %arg25[%c3_43, %c16_44] : memref<8x32xf32, #tpu.memory_space<vmem>>, vector<1x8xf32>
    tpu.vector_store %arg25[%c3_43, %c16_44], %71 {strides = array<i32>} : memref<8x32xf32, #tpu.memory_space<vmem>>, vector<1x8xf32>,
    %73 = vector.extract_strided_slice %58 {offsets = [7, 0], sizes = [1, 8], strides = [1, 1]} : vector<8x8xf32> to vector<1x8xf32>
    %c3_45 = arith.constant 3 : index
    %c24_46 = arith.constant 24 : index
    %74 = vector.load %arg25[%c3_45, %c24_46] : memref<8x32xf32, #tpu.memory_space<vmem>>, vector<1x8xf32>
    tpu.vector_store %arg25[%c3_45, %c24_46], %73 {strides = array<i32>} : memref<8x32xf32, #tpu.memory_space<vmem>>, vector<1x8xf32>,
    %75 = vector.extract_strided_slice %10 {offsets = [0, 16], sizes = [8, 8], strides = [1, 1]} : vector<8x32xf32> to vector<8x8xf32>
    %76 = vector.extract_strided_slice %7 {offsets = [0, 16], sizes = [8, 8], strides = [1, 1]} : vector<8x32xf32> to vector<8x8xf32>
    %77 = vector.extract_strided_slice %8 {offsets = [0, 16], sizes = [8, 8], strides = [1, 1]} : vector<8x32xf32> to vector<8x8xf32>
    %cst_47 = arith.constant dense<0.000000e+00> : vector<8x8xf32>
    %78 = tpu.matmul %75, %76, %cst_47 {dimension_numbers = #tpu.dot_dimension_numbers<[1], [1], [0], [0], [0, 0, 1, 0], [], []>} : vector<8x8xf32>, vector<8x8xf32>, vector<8x8xf32> -> vector<8x8xf32>
    %79 = arith.addf %78, %2 : vector<8x8xf32>
    %cst_48 = arith.constant dense<0xFF800000> : vector<8xf32>
    %80 = vector.multi_reduction <maximumf>, %79, %cst_48 [1] : vector<8x8xf32> to vector<8xf32>
    %81 = vector.shape_cast %80 : vector<8xf32> to vector<8x1xf32>
    %82 = vector.broadcast %81 : vector<8x1xf32> to vector<8x8xf32>
    %83 = arith.subf %79, %82 : vector<8x8xf32>
    %84 = math.exp %83 : vector<8x8xf32>
    %cst_49 = arith.constant dense<0.000000e+00> : vector<8xf32>
    %85 = vector.multi_reduction <add>, %84, %cst_49 [1] : vector<8x8xf32> to vector<8xf32>
    %86 = vector.shape_cast %85 : vector<8xf32> to vector<8x1xf32>
    %87 = tpu.reciprocal %86 {approx = true} : vector<8x1xf32> -> vector<8x1xf32>
    %88 = vector.broadcast %87 : vector<8x1xf32> to vector<8x8xf32>
    %89 = arith.mulf %84, %88 : vector<8x8xf32>
    %cst_50 = arith.constant dense<0.000000e+00> : vector<8x8xf32>
    %90 = tpu.matmul %89, %77, %cst_50 {dimension_numbers = #tpu.dot_dimension_numbers<[1], [0], [0], [1], [0, 0, 1, 1], [], []>} : vector<8x8xf32>, vector<8x8xf32>, vector<8x8xf32> -> vector<8x8xf32>
    %91 = vector.extract_strided_slice %90 {offsets = [0, 0], sizes = [1, 8], strides = [1, 1]} : vector<8x8xf32> to vector<1x8xf32>
    %c4 = arith.constant 4 : index
    %c0_51 = arith.constant 0 : index
    %92 = vector.load %arg25[%c4, %c0_51] : memref<8x32xf32, #tpu.memory_space<vmem>>, vector<1x8xf32>
    tpu.vector_store %arg25[%c4, %c0_51], %91 {strides = array<i32>} : memref<8x32xf32, #tpu.memory_space<vmem>>, vector<1x8xf32>,
    %93 = vector.extract_strided_slice %90 {offsets = [1, 0], sizes = [1, 8], strides = [1, 1]} : vector<8x8xf32> to vector<1x8xf32>
    %c4_52 = arith.constant 4 : index
    %c8_53 = arith.constant 8 : index
    %94 = vector.load %arg25[%c4_52, %c8_53] : memref<8x32xf32, #tpu.memory_space<vmem>>, vector<1x8xf32>
    tpu.vector_store %arg25[%c4_52, %c8_53], %93 {strides = array<i32>} : memref<8x32xf32, #tpu.memory_space<vmem>>, vector<1x8xf32>,
    %95 = vector.extract_strided_slice %90 {offsets = [2, 0], sizes = [1, 8], strides = [1, 1]} : vector<8x8xf32> to vector<1x8xf32>
    %c4_54 = arith.constant 4 : index
    %c16_55 = arith.constant 16 : index
    %96 = vector.load %arg25[%c4_54, %c16_55] : memref<8x32xf32, #tpu.memory_space<vmem>>, vector<1x8xf32>
    tpu.vector_store %arg25[%c4_54, %c16_55], %95 {strides = array<i32>} : memref<8x32xf32, #tpu.memory_space<vmem>>, vector<1x8xf32>,
    %97 = vector.extract_strided_slice %90 {offsets = [3, 0], sizes = [1, 8], strides = [1, 1]} : vector<8x8xf32> to vector<1x8xf32>
    %c4_56 = arith.constant 4 : index
    %c24_57 = arith.constant 24 : index
    %98 = vector.load %arg25[%c4_56, %c24_57] : memref<8x32xf32, #tpu.memory_space<vmem>>, vector<1x8xf32>
    tpu.vector_store %arg25[%c4_56, %c24_57], %97 {strides = array<i32>} : memref<8x32xf32, #tpu.memory_space<vmem>>, vector<1x8xf32>,
    %99 = vector.extract_strided_slice %90 {offsets = [4, 0], sizes = [1, 8], strides = [1, 1]} : vector<8x8xf32> to vector<1x8xf32>
    %c5 = arith.constant 5 : index
    %c0_58 = arith.constant 0 : index
    %100 = vector.load %arg25[%c5, %c0_58] : memref<8x32xf32, #tpu.memory_space<vmem>>, vector<1x8xf32>
    tpu.vector_store %arg25[%c5, %c0_58], %99 {strides = array<i32>} : memref<8x32xf32, #tpu.memory_space<vmem>>, vector<1x8xf32>,
    %101 = vector.extract_strided_slice %90 {offsets = [5, 0], sizes = [1, 8], strides = [1, 1]} : vector<8x8xf32> to vector<1x8xf32>
    %c5_59 = arith.constant 5 : index
    %c8_60 = arith.constant 8 : index
    %102 = vector.load %arg25[%c5_59, %c8_60] : memref<8x32xf32, #tpu.memory_space<vmem>>, vector<1x8xf32>
    tpu.vector_store %arg25[%c5_59, %c8_60], %101 {strides = array<i32>} : memref<8x32xf32, #tpu.memory_space<vmem>>, vector<1x8xf32>,
    %103 = vector.extract_strided_slice %90 {offsets = [6, 0], sizes = [1, 8], strides = [1, 1]} : vector<8x8xf32> to vector<1x8xf32>
    %c5_61 = arith.constant 5 : index
    %c16_62 = arith.constant 16 : index
    %104 = vector.load %arg25[%c5_61, %c16_62] : memref<8x32xf32, #tpu.memory_space<vmem>>, vector<1x8xf32>
    tpu.vector_store %arg25[%c5_61, %c16_62], %103 {strides = array<i32>} : memref<8x32xf32, #tpu.memory_space<vmem>>, vector<1x8xf32>,
    %105 = vector.extract_strided_slice %90 {offsets = [7, 0], sizes = [1, 8], strides = [1, 1]} : vector<8x8xf32> to vector<1x8xf32>
    %c5_63 = arith.constant 5 : index
    %c24_64 = arith.constant 24 : index
    %106 = vector.load %arg25[%c5_63, %c24_64] : memref<8x32xf32, #tpu.memory_space<vmem>>, vector<1x8xf32>
    tpu.vector_store %arg25[%c5_63, %c24_64], %105 {strides = array<i32>} : memref<8x32xf32, #tpu.memory_space<vmem>>, vector<1x8xf32>,
    %107 = vector.extract_strided_slice %10 {offsets = [0, 24], sizes = [8, 8], strides = [1, 1]} : vector<8x32xf32> to vector<8x8xf32>
    %108 = vector.extract_strided_slice %7 {offsets = [0, 24], sizes = [8, 8], strides = [1, 1]} : vector<8x32xf32> to vector<8x8xf32>
    %109 = vector.extract_strided_slice %8 {offsets = [0, 24], sizes = [8, 8], strides = [1, 1]} : vector<8x32xf32> to vector<8x8xf32>
    %cst_65 = arith.constant dense<0.000000e+00> : vector<8x8xf32>
    %110 = tpu.matmul %107, %108, %cst_65 {dimension_numbers = #tpu.dot_dimension_numbers<[1], [1], [0], [0], [0, 0, 1, 0], [], []>} : vector<8x8xf32>, vector<8x8xf32>, vector<8x8xf32> -> vector<8x8xf32>
    %111 = arith.addf %110, %2 : vector<8x8xf32>
    %cst_66 = arith.constant dense<0xFF800000> : vector<8xf32>
    %112 = vector.multi_reduction <maximumf>, %111, %cst_66 [1] : vector<8x8xf32> to vector<8xf32>
    %113 = vector.shape_cast %112 : vector<8xf32> to vector<8x1xf32>
    %114 = vector.broadcast %113 : vector<8x1xf32> to vector<8x8xf32>
    %115 = arith.subf %111, %114 : vector<8x8xf32>
    %116 = math.exp %115 : vector<8x8xf32>
    %cst_67 = arith.constant dense<0.000000e+00> : vector<8xf32>
    %117 = vector.multi_reduction <add>, %116, %cst_67 [1] : vector<8x8xf32> to vector<8xf32>
    %118 = vector.shape_cast %117 : vector<8xf32> to vector<8x1xf32>
    %119 = tpu.reciprocal %118 {approx = true} : vector<8x1xf32> -> vector<8x1xf32>
    %120 = vector.broadcast %119 : vector<8x1xf32> to vector<8x8xf32>
    %121 = arith.mulf %116, %120 : vector<8x8xf32>
    %cst_68 = arith.constant dense<0.000000e+00> : vector<8x8xf32>
    %122 = tpu.matmul %121, %109, %cst_68 {dimension_numbers = #tpu.dot_dimension_numbers<[1], [0], [0], [1], [0, 0, 1, 1], [], []>} : vector<8x8xf32>, vector<8x8xf32>, vector<8x8xf32> -> vector<8x8xf32>
    %123 = vector.extract_strided_slice %122 {offsets = [0, 0], sizes = [1, 8], strides = [1, 1]} : vector<8x8xf32> to vector<1x8xf32>
    %c6 = arith.constant 6 : index
    %c0_69 = arith.constant 0 : index
    %124 = vector.load %arg25[%c6, %c0_69] : memref<8x32xf32, #tpu.memory_space<vmem>>, vector<1x8xf32>
    tpu.vector_store %arg25[%c6, %c0_69], %123 {strides = array<i32>} : memref<8x32xf32, #tpu.memory_space<vmem>>, vector<1x8xf32>,
    %125 = vector.extract_strided_slice %122 {offsets = [1, 0], sizes = [1, 8], strides = [1, 1]} : vector<8x8xf32> to vector<1x8xf32>
    %c6_70 = arith.constant 6 : index
    %c8_71 = arith.constant 8 : index
    %126 = vector.load %arg25[%c6_70, %c8_71] : memref<8x32xf32, #tpu.memory_space<vmem>>, vector<1x8xf32>
    tpu.vector_store %arg25[%c6_70, %c8_71], %125 {strides = array<i32>} : memref<8x32xf32, #tpu.memory_space<vmem>>, vector<1x8xf32>,
    %127 = vector.extract_strided_slice %122 {offsets = [2, 0], sizes = [1, 8], strides = [1, 1]} : vector<8x8xf32> to vector<1x8xf32>
    %c6_72 = arith.constant 6 : index
    %c16_73 = arith.constant 16 : index
    %128 = vector.load %arg25[%c6_72, %c16_73] : memref<8x32xf32, #tpu.memory_space<vmem>>, vector<1x8xf32>
    tpu.vector_store %arg25[%c6_72, %c16_73], %127 {strides = array<i32>} : memref<8x32xf32, #tpu.memory_space<vmem>>, vector<1x8xf32>,
    %129 = vector.extract_strided_slice %122 {offsets = [3, 0], sizes = [1, 8], strides = [1, 1]} : vector<8x8xf32> to vector<1x8xf32>
    %c6_74 = arith.constant 6 : index
    %c24_75 = arith.constant 24 : index
    %130 = vector.load %arg25[%c6_74, %c24_75] : memref<8x32xf32, #tpu.memory_space<vmem>>, vector<1x8xf32>
    tpu.vector_store %arg25[%c6_74, %c24_75], %129 {strides = array<i32>} : memref<8x32xf32, #tpu.memory_space<vmem>>, vector<1x8xf32>,
    %131 = vector.extract_strided_slice %122 {offsets = [4, 0], sizes = [1, 8], strides = [1, 1]} : vector<8x8xf32> to vector<1x8xf32>
    %c7 = arith.constant 7 : index
    %c0_76 = arith.constant 0 : index
    %132 = vector.load %arg25[%c7, %c0_76] : memref<8x32xf32, #tpu.memory_space<vmem>>, vector<1x8xf32>
    tpu.vector_store %arg25[%c7, %c0_76], %131 {strides = array<i32>} : memref<8x32xf32, #tpu.memory_space<vmem>>, vector<1x8xf32>,
    %133 = vector.extract_strided_slice %122 {offsets = [5, 0], sizes = [1, 8], strides = [1, 1]} : vector<8x8xf32> to vector<1x8xf32>
    %c7_77 = arith.constant 7 : index
    %c8_78 = arith.constant 8 : index
    %134 = vector.load %arg25[%c7_77, %c8_78] : memref<8x32xf32, #tpu.memory_space<vmem>>, vector<1x8xf32>
    tpu.vector_store %arg25[%c7_77, %c8_78], %133 {strides = array<i32>} : memref<8x32xf32, #tpu.memory_space<vmem>>, vector<1x8xf32>,
    %135 = vector.extract_strided_slice %122 {offsets = [6, 0], sizes = [1, 8], strides = [1, 1]} : vector<8x8xf32> to vector<1x8xf32>
    %c7_79 = arith.constant 7 : index
    %c16_80 = arith.constant 16 : index
    %136 = vector.load %arg25[%c7_79, %c16_80] : memref<8x32xf32, #tpu.memory_space<vmem>>, vector<1x8xf32>
    tpu.vector_store %arg25[%c7_79, %c16_80], %135 {strides = array<i32>} : memref<8x32xf32, #tpu.memory_space<vmem>>, vector<1x8xf32>,
    %137 = vector.extract_strided_slice %122 {offsets = [7, 0], sizes = [1, 8], strides = [1, 1]} : vector<8x8xf32> to vector<1x8xf32>
    %c7_81 = arith.constant 7 : index
    %c24_82 = arith.constant 24 : index
    %138 = vector.load %arg25[%c7_81, %c24_82] : memref<8x32xf32, #tpu.memory_space<vmem>>, vector<1x8xf32>
    tpu.vector_store %arg25[%c7_81, %c24_82], %137 {strides = array<i32>} : memref<8x32xf32, #tpu.memory_space<vmem>>, vector<1x8xf32>,
    %c0_83 = arith.constant 0 : index
    %c0_84 = arith.constant 0 : index
    %139 = vector.load %arg25[%c0_83, %c0_84] : memref<8x32xf32, #tpu.memory_space<vmem>>, vector<8x32xf32>
    %c0_85 = arith.constant 0 : index
    %c0_86 = arith.constant 0 : index
    %140 = vector.load %arg7[%c0_85, %c0_86] : memref<32x32xf32, #tpu.memory_space<vmem>>, vector<32x32xf32>
    %cst_87 = arith.constant dense<0.000000e+00> : vector<8x32xf32>
    %141 = tpu.matmul %139, %140, %cst_87 {dimension_numbers = #tpu.dot_dimension_numbers<[1], [0], [0], [1], [0, 0, 1, 1], [], []>} : vector<8x32xf32>, vector<32x32xf32>, vector<8x32xf32> -> vector<8x32xf32>
    %c0_88 = arith.constant 0 : index
    %c0_89 = arith.constant 0 : index
    %142 = vector.load %arg8[%c0_88, %c0_89] : memref<1x32xf32, #tpu.memory_space<vmem>>, vector<1x32xf32>
    %143 = vector.broadcast %142 : vector<1x32xf32> to vector<8x32xf32>
    %144 = arith.addf %141, %143 : vector<8x32xf32>
    %145 = arith.addf %1, %144 : vector<8x32xf32>
    %c0_90 = arith.constant 0 : index
    %c0_91 = arith.constant 0 : index
    %146 = vector.load %arg9[%c0_90, %c0_91] : memref<1x32xf32, #tpu.memory_space<vmem>>, vector<1x32xf32>
    %c0_92 = arith.constant 0 : index
    %c0_93 = arith.constant 0 : index
    %147 = vector.load %arg10[%c0_92, %c0_93] : memref<1x32xf32, #tpu.memory_space<vmem>>, vector<1x32xf32>
    %cst_94 = arith.constant dense<0.000000e+00> : vector<8xf32>
    %148 = vector.multi_reduction <add>, %145, %cst_94 [1] : vector<8x32xf32> to vector<8xf32>
    %149 = vector.shape_cast %148 : vector<8xf32> to vector<8x1xf32>
    %cst_95 = arith.constant 3.200000e+01 : f32
    %150 = vector.broadcast %cst_95 : f32 to vector<8x1xf32>
    %151 = arith.divf %149, %150 : vector<8x1xf32>
    %152 = vector.broadcast %151 : vector<8x1xf32> to vector<8x32xf32>
    %153 = arith.subf %145, %152 : vector<8x32xf32>
    %154 = arith.mulf %153, %153 : vector<8x32xf32>
    %cst_96 = arith.constant dense<0.000000e+00> : vector<8xf32>
    %155 = vector.multi_reduction <add>, %154, %cst_96 [1] : vector<8x32xf32> to vector<8xf32>
    %156 = vector.shape_cast %155 : vector<8xf32> to vector<8x1xf32>
    %cst_97 = arith.constant 3.200000e+01 : f32
    %157 = vector.broadcast %cst_97 : f32 to vector<8x1xf32>
    %158 = arith.divf %156, %157 : vector<8x1xf32>
    %159 = vector.broadcast %151 : vector<8x1xf32> to vector<8x32xf32>
    %160 = arith.subf %145, %159 : vector<8x32xf32>
    %cst_98 = arith.constant 9.99999974E-6 : f32
    %161 = vector.broadcast %cst_98 : f32 to vector<8x1xf32>
    %162 = arith.addf %158, %161 : vector<8x1xf32>
    %163 = math.rsqrt %162 : vector<8x1xf32>
    %164 = vector.broadcast %163 : vector<8x1xf32> to vector<8x32xf32>
    %165 = arith.mulf %160, %164 : vector<8x32xf32>
    %166 = vector.broadcast %146 : vector<1x32xf32> to vector<8x32xf32>
    %167 = arith.mulf %165, %166 : vector<8x32xf32>
    %168 = vector.broadcast %147 : vector<1x32xf32> to vector<8x32xf32>
    %169 = arith.addf %167, %168 : vector<8x32xf32>
    %c0_99 = arith.constant 0 : index
    %c0_100 = arith.constant 0 : index
    %c0_101 = arith.constant 0 : index
    %170 = vector.load %arg2[%c0_99, %c0_100, %c0_101] : memref<1x16x32xf32, #tpu.memory_space<vmem>>, vector<1x16x32xf32>
    %171 = vector.shape_cast %170 : vector<1x16x32xf32> to vector<16x32xf32>
    %c0_102 = arith.constant 0 : index
    %c0_103 = arith.constant 0 : index
    %172 = vector.load %arg11[%c0_102, %c0_103] : memref<32x32xf32, #tpu.memory_space<vmem>>, vector<32x32xf32>
    %c0_104 = arith.constant 0 : index
    %c0_105 = arith.constant 0 : index
    %173 = vector.load %arg12[%c0_104, %c0_105] : memref<32x32xf32, #tpu.memory_space<vmem>>, vector<32x32xf32>
    %c0_106 = arith.constant 0 : index
    %c0_107 = arith.constant 0 : index
    %174 = vector.load %arg13[%c0_106, %c0_107] : memref<32x32xf32, #tpu.memory_space<vmem>>, vector<32x32xf32>
    %cst_108 = arith.constant dense<0.000000e+00> : vector<8x32xf32>
    %175 = tpu.matmul %169, %172, %cst_108 {dimension_numbers = #tpu.dot_dimension_numbers<[1], [0], [0], [1], [0, 0, 1, 1], [], []>} : vector<8x32xf32>, vector<32x32xf32>, vector<8x32xf32> -> vector<8x32xf32>
    %cst_109 = arith.constant dense<0.000000e+00> : vector<16x32xf32>
    %176 = tpu.matmul %171, %173, %cst_109 {dimension_numbers = #tpu.dot_dimension_numbers<[1], [0], [0], [1], [0, 0, 1, 1], [], []>} : vector<16x32xf32>, vector<32x32xf32>, vector<16x32xf32> -> vector<16x32xf32>
    %cst_110 = arith.constant dense<0.000000e+00> : vector<16x32xf32>
    %177 = tpu.matmul %171, %174, %cst_110 {dimension_numbers = #tpu.dot_dimension_numbers<[1], [0], [0], [1], [0, 0, 1, 1], [], []>} : vector<16x32xf32>, vector<32x32xf32>, vector<16x32xf32> -> vector<16x32xf32>
    %cst_111 = arith.constant 0.353553385 : f32
    %178 = vector.broadcast %cst_111 : f32 to vector<8x32xf32>
    %179 = arith.mulf %175, %178 : vector<8x32xf32>
    %180 = vector.extract_strided_slice %179 {offsets = [0, 0], sizes = [8, 8], strides = [1, 1]} : vector<8x32xf32> to vector<8x8xf32>
    %181 = vector.extract_strided_slice %176 {offsets = [0, 0], sizes = [16, 8], strides = [1, 1]} : vector<16x32xf32> to vector<16x8xf32>
    %182 = vector.extract_strided_slice %177 {offsets = [0, 0], sizes = [16, 8], strides = [1, 1]} : vector<16x32xf32> to vector<16x8xf32>
    %cst_112 = arith.constant dense<0.000000e+00> : vector<8x16xf32>
    %183 = tpu.matmul %180, %181, %cst_112 {dimension_numbers = #tpu.dot_dimension_numbers<[1], [1], [0], [0], [0, 0, 1, 0], [], []>} : vector<8x8xf32>, vector<16x8xf32>, vector<8x16xf32> -> vector<8x16xf32>
    %cst_113 = arith.constant dense<0xFF800000> : vector<8xf32>
    %184 = vector.multi_reduction <maximumf>, %183, %cst_113 [1] : vector<8x16xf32> to vector<8xf32>
    %185 = vector.shape_cast %184 : vector<8xf32> to vector<8x1xf32>
    %186 = vector.broadcast %185 : vector<8x1xf32> to vector<8x16xf32>
    %187 = arith.subf %183, %186 : vector<8x16xf32>
    %188 = math.exp %187 : vector<8x16xf32>
    %cst_114 = arith.constant dense<0.000000e+00> : vector<8xf32>
    %189 = vector.multi_reduction <add>, %188, %cst_114 [1] : vector<8x16xf32> to vector<8xf32>
    %190 = vector.shape_cast %189 : vector<8xf32> to vector<8x1xf32>
    %191 = tpu.reciprocal %190 {approx = true} : vector<8x1xf32> -> vector<8x1xf32>
    %192 = vector.broadcast %191 : vector<8x1xf32> to vector<8x16xf32>
    %193 = arith.mulf %188, %192 : vector<8x16xf32>
    %cst_115 = arith.constant dense<0.000000e+00> : vector<8x8xf32>
    %194 = tpu.matmul %193, %182, %cst_115 {dimension_numbers = #tpu.dot_dimension_numbers<[1], [0], [0], [1], [0, 0, 1, 1], [], []>} : vector<8x16xf32>, vector<16x8xf32>, vector<8x8xf32> -> vector<8x8xf32>
    %195 = vector.extract_strided_slice %194 {offsets = [0, 0], sizes = [1, 8], strides = [1, 1]} : vector<8x8xf32> to vector<1x8xf32>
    %c0_116 = arith.constant 0 : index
    %c0_117 = arith.constant 0 : index
    %196 = vector.load %arg25[%c0_116, %c0_117] : memref<8x32xf32, #tpu.memory_space<vmem>>, vector<1x8xf32>
    tpu.vector_store %arg25[%c0_116, %c0_117], %195 {strides = array<i32>} : memref<8x32xf32, #tpu.memory_space<vmem>>, vector<1x8xf32>,
    %197 = vector.extract_strided_slice %194 {offsets = [1, 0], sizes = [1, 8], strides = [1, 1]} : vector<8x8xf32> to vector<1x8xf32>
    %c0_118 = arith.constant 0 : index
    %c8_119 = arith.constant 8 : index
    %198 = vector.load %arg25[%c0_118, %c8_119] : memref<8x32xf32, #tpu.memory_space<vmem>>, vector<1x8xf32>
    tpu.vector_store %arg25[%c0_118, %c8_119], %197 {strides = array<i32>} : memref<8x32xf32, #tpu.memory_space<vmem>>, vector<1x8xf32>,
    %199 = vector.extract_strided_slice %194 {offsets = [2, 0], sizes = [1, 8], strides = [1, 1]} : vector<8x8xf32> to vector<1x8xf32>
    %c0_120 = arith.constant 0 : index
    %c16_121 = arith.constant 16 : index
    %200 = vector.load %arg25[%c0_120, %c16_121] : memref<8x32xf32, #tpu.memory_space<vmem>>, vector<1x8xf32>
    tpu.vector_store %arg25[%c0_120, %c16_121], %199 {strides = array<i32>} : memref<8x32xf32, #tpu.memory_space<vmem>>, vector<1x8xf32>,
    %201 = vector.extract_strided_slice %194 {offsets = [3, 0], sizes = [1, 8], strides = [1, 1]} : vector<8x8xf32> to vector<1x8xf32>
    %c0_122 = arith.constant 0 : index
    %c24_123 = arith.constant 24 : index
    %202 = vector.load %arg25[%c0_122, %c24_123] : memref<8x32xf32, #tpu.memory_space<vmem>>, vector<1x8xf32>
    tpu.vector_store %arg25[%c0_122, %c24_123], %201 {strides = array<i32>} : memref<8x32xf32, #tpu.memory_space<vmem>>, vector<1x8xf32>,
    %203 = vector.extract_strided_slice %194 {offsets = [4, 0], sizes = [1, 8], strides = [1, 1]} : vector<8x8xf32> to vector<1x8xf32>
    %c1_124 = arith.constant 1 : index
    %c0_125 = arith.constant 0 : index
    %204 = vector.load %arg25[%c1_124, %c0_125] : memref<8x32xf32, #tpu.memory_space<vmem>>, vector<1x8xf32>
    tpu.vector_store %arg25[%c1_124, %c0_125], %203 {strides = array<i32>} : memref<8x32xf32, #tpu.memory_space<vmem>>, vector<1x8xf32>,
    %205 = vector.extract_strided_slice %194 {offsets = [5, 0], sizes = [1, 8], strides = [1, 1]} : vector<8x8xf32> to vector<1x8xf32>
    %c1_126 = arith.constant 1 : index
    %c8_127 = arith.constant 8 : index
    %206 = vector.load %arg25[%c1_126, %c8_127] : memref<8x32xf32, #tpu.memory_space<vmem>>, vector<1x8xf32>
    tpu.vector_store %arg25[%c1_126, %c8_127], %205 {strides = array<i32>} : memref<8x32xf32, #tpu.memory_space<vmem>>, vector<1x8xf32>,
    %207 = vector.extract_strided_slice %194 {offsets = [6, 0], sizes = [1, 8], strides = [1, 1]} : vector<8x8xf32> to vector<1x8xf32>
    %c1_128 = arith.constant 1 : index
    %c16_129 = arith.constant 16 : index
    %208 = vector.load %arg25[%c1_128, %c16_129] : memref<8x32xf32, #tpu.memory_space<vmem>>, vector<1x8xf32>
    tpu.vector_store %arg25[%c1_128, %c16_129], %207 {strides = array<i32>} : memref<8x32xf32, #tpu.memory_space<vmem>>, vector<1x8xf32>,
    %209 = vector.extract_strided_slice %194 {offsets = [7, 0], sizes = [1, 8], strides = [1, 1]} : vector<8x8xf32> to vector<1x8xf32>
    %c1_130 = arith.constant 1 : index
    %c24_131 = arith.constant 24 : index
    %210 = vector.load %arg25[%c1_130, %c24_131] : memref<8x32xf32, #tpu.memory_space<vmem>>, vector<1x8xf32>
    tpu.vector_store %arg25[%c1_130, %c24_131], %209 {strides = array<i32>} : memref<8x32xf32, #tpu.memory_space<vmem>>, vector<1x8xf32>,
    %211 = vector.extract_strided_slice %179 {offsets = [0, 8], sizes = [8, 8], strides = [1, 1]} : vector<8x32xf32> to vector<8x8xf32>
    %212 = vector.extract_strided_slice %176 {offsets = [0, 8], sizes = [16, 8], strides = [1, 1]} : vector<16x32xf32> to vector<16x8xf32>
    %213 = vector.extract_strided_slice %177 {offsets = [0, 8], sizes = [16, 8], strides = [1, 1]} : vector<16x32xf32> to vector<16x8xf32>
    %cst_132 = arith.constant dense<0.000000e+00> : vector<8x16xf32>
    %214 = tpu.matmul %211, %212, %cst_132 {dimension_numbers = #tpu.dot_dimension_numbers<[1], [1], [0], [0], [0, 0, 1, 0], [], []>} : vector<8x8xf32>, vector<16x8xf32>, vector<8x16xf32> -> vector<8x16xf32>
    %cst_133 = arith.constant dense<0xFF800000> : vector<8xf32>
    %215 = vector.multi_reduction <maximumf>, %214, %cst_133 [1] : vector<8x16xf32> to vector<8xf32>
    %216 = vector.shape_cast %215 : vector<8xf32> to vector<8x1xf32>
    %217 = vector.broadcast %216 : vector<8x1xf32> to vector<8x16xf32>
    %218 = arith.subf %214, %217 : vector<8x16xf32>
    %219 = math.exp %218 : vector<8x16xf32>
    %cst_134 = arith.constant dense<0.000000e+00> : vector<8xf32>
    %220 = vector.multi_reduction <add>, %219, %cst_134 [1] : vector<8x16xf32> to vector<8xf32>
    %221 = vector.shape_cast %220 : vector<8xf32> to vector<8x1xf32>
    %222 = tpu.reciprocal %221 {approx = true} : vector<8x1xf32> -> vector<8x1xf32>
    %223 = vector.broadcast %222 : vector<8x1xf32> to vector<8x16xf32>
    %224 = arith.mulf %219, %223 : vector<8x16xf32>
    %cst_135 = arith.constant dense<0.000000e+00> : vector<8x8xf32>
    %225 = tpu.matmul %224, %213, %cst_135 {dimension_numbers = #tpu.dot_dimension_numbers<[1], [0], [0], [1], [0, 0, 1, 1], [], []>} : vector<8x16xf32>, vector<16x8xf32>, vector<8x8xf32> -> vector<8x8xf32>
    %226 = vector.extract_strided_slice %225 {offsets = [0, 0], sizes = [1, 8], strides = [1, 1]} : vector<8x8xf32> to vector<1x8xf32>
    %c2_136 = arith.constant 2 : index
    %c0_137 = arith.constant 0 : index
    %227 = vector.load %arg25[%c2_136, %c0_137] : memref<8x32xf32, #tpu.memory_space<vmem>>, vector<1x8xf32>
    tpu.vector_store %arg25[%c2_136, %c0_137], %226 {strides = array<i32>} : memref<8x32xf32, #tpu.memory_space<vmem>>, vector<1x8xf32>,
    %228 = vector.extract_strided_slice %225 {offsets = [1, 0], sizes = [1, 8], strides = [1, 1]} : vector<8x8xf32> to vector<1x8xf32>
    %c2_138 = arith.constant 2 : index
    %c8_139 = arith.constant 8 : index
    %229 = vector.load %arg25[%c2_138, %c8_139] : memref<8x32xf32, #tpu.memory_space<vmem>>, vector<1x8xf32>
    tpu.vector_store %arg25[%c2_138, %c8_139], %228 {strides = array<i32>} : memref<8x32xf32, #tpu.memory_space<vmem>>, vector<1x8xf32>,
    %230 = vector.extract_strided_slice %225 {offsets = [2, 0], sizes = [1, 8], strides = [1, 1]} : vector<8x8xf32> to vector<1x8xf32>
    %c2_140 = arith.constant 2 : index
    %c16_141 = arith.constant 16 : index
    %231 = vector.load %arg25[%c2_140, %c16_141] : memref<8x32xf32, #tpu.memory_space<vmem>>, vector<1x8xf32>
    tpu.vector_store %arg25[%c2_140, %c16_141], %230 {strides = array<i32>} : memref<8x32xf32, #tpu.memory_space<vmem>>, vector<1x8xf32>,
    %232 = vector.extract_strided_slice %225 {offsets = [3, 0], sizes = [1, 8], strides = [1, 1]} : vector<8x8xf32> to vector<1x8xf32>
    %c2_142 = arith.constant 2 : index
    %c24_143 = arith.constant 24 : index
    %233 = vector.load %arg25[%c2_142, %c24_143] : memref<8x32xf32, #tpu.memory_space<vmem>>, vector<1x8xf32>
    tpu.vector_store %arg25[%c2_142, %c24_143], %232 {strides = array<i32>} : memref<8x32xf32, #tpu.memory_space<vmem>>, vector<1x8xf32>,
    %234 = vector.extract_strided_slice %225 {offsets = [4, 0], sizes = [1, 8], strides = [1, 1]} : vector<8x8xf32> to vector<1x8xf32>
    %c3_144 = arith.constant 3 : index
    %c0_145 = arith.constant 0 : index
    %235 = vector.load %arg25[%c3_144, %c0_145] : memref<8x32xf32, #tpu.memory_space<vmem>>, vector<1x8xf32>
    tpu.vector_store %arg25[%c3_144, %c0_145], %234 {strides = array<i32>} : memref<8x32xf32, #tpu.memory_space<vmem>>, vector<1x8xf32>,
    %236 = vector.extract_strided_slice %225 {offsets = [5, 0], sizes = [1, 8], strides = [1, 1]} : vector<8x8xf32> to vector<1x8xf32>
    %c3_146 = arith.constant 3 : index
    %c8_147 = arith.constant 8 : index
    %237 = vector.load %arg25[%c3_146, %c8_147] : memref<8x32xf32, #tpu.memory_space<vmem>>, vector<1x8xf32>
    tpu.vector_store %arg25[%c3_146, %c8_147], %236 {strides = array<i32>} : memref<8x32xf32, #tpu.memory_space<vmem>>, vector<1x8xf32>,
    %238 = vector.extract_strided_slice %225 {offsets = [6, 0], sizes = [1, 8], strides = [1, 1]} : vector<8x8xf32> to vector<1x8xf32>
    %c3_148 = arith.constant 3 : index
    %c16_149 = arith.constant 16 : index
    %239 = vector.load %arg25[%c3_148, %c16_149] : memref<8x32xf32, #tpu.memory_space<vmem>>, vector<1x8xf32>
    tpu.vector_store %arg25[%c3_148, %c16_149], %238 {strides = array<i32>} : memref<8x32xf32, #tpu.memory_space<vmem>>, vector<1x8xf32>,
    %240 = vector.extract_strided_slice %225 {offsets = [7, 0], sizes = [1, 8], strides = [1, 1]} : vector<8x8xf32> to vector<1x8xf32>
    %c3_150 = arith.constant 3 : index
    %c24_151 = arith.constant 24 : index
    %241 = vector.load %arg25[%c3_150, %c24_151] : memref<8x32xf32, #tpu.memory_space<vmem>>, vector<1x8xf32>
    tpu.vector_store %arg25[%c3_150, %c24_151], %240 {strides = array<i32>} : memref<8x32xf32, #tpu.memory_space<vmem>>, vector<1x8xf32>,
    %242 = vector.extract_strided_slice %179 {offsets = [0, 16], sizes = [8, 8], strides = [1, 1]} : vector<8x32xf32> to vector<8x8xf32>
    %243 = vector.extract_strided_slice %176 {offsets = [0, 16], sizes = [16, 8], strides = [1, 1]} : vector<16x32xf32> to vector<16x8xf32>
    %244 = vector.extract_strided_slice %177 {offsets = [0, 16], sizes = [16, 8], strides = [1, 1]} : vector<16x32xf32> to vector<16x8xf32>
    %cst_152 = arith.constant dense<0.000000e+00> : vector<8x16xf32>
    %245 = tpu.matmul %242, %243, %cst_152 {dimension_numbers = #tpu.dot_dimension_numbers<[1], [1], [0], [0], [0, 0, 1, 0], [], []>} : vector<8x8xf32>, vector<16x8xf32>, vector<8x16xf32> -> vector<8x16xf32>
    %cst_153 = arith.constant dense<0xFF800000> : vector<8xf32>
    %246 = vector.multi_reduction <maximumf>, %245, %cst_153 [1] : vector<8x16xf32> to vector<8xf32>
    %247 = vector.shape_cast %246 : vector<8xf32> to vector<8x1xf32>
    %248 = vector.broadcast %247 : vector<8x1xf32> to vector<8x16xf32>
    %249 = arith.subf %245, %248 : vector<8x16xf32>
    %250 = math.exp %249 : vector<8x16xf32>
    %cst_154 = arith.constant dense<0.000000e+00> : vector<8xf32>
    %251 = vector.multi_reduction <add>, %250, %cst_154 [1] : vector<8x16xf32> to vector<8xf32>
    %252 = vector.shape_cast %251 : vector<8xf32> to vector<8x1xf32>
    %253 = tpu.reciprocal %252 {approx = true} : vector<8x1xf32> -> vector<8x1xf32>
    %254 = vector.broadcast %253 : vector<8x1xf32> to vector<8x16xf32>
    %255 = arith.mulf %250, %254 : vector<8x16xf32>
    %cst_155 = arith.constant dense<0.000000e+00> : vector<8x8xf32>
    %256 = tpu.matmul %255, %244, %cst_155 {dimension_numbers = #tpu.dot_dimension_numbers<[1], [0], [0], [1], [0, 0, 1, 1], [], []>} : vector<8x16xf32>, vector<16x8xf32>, vector<8x8xf32> -> vector<8x8xf32>
    %257 = vector.extract_strided_slice %256 {offsets = [0, 0], sizes = [1, 8], strides = [1, 1]} : vector<8x8xf32> to vector<1x8xf32>
    %c4_156 = arith.constant 4 : index
    %c0_157 = arith.constant 0 : index
    %258 = vector.load %arg25[%c4_156, %c0_157] : memref<8x32xf32, #tpu.memory_space<vmem>>, vector<1x8xf32>
    tpu.vector_store %arg25[%c4_156, %c0_157], %257 {strides = array<i32>} : memref<8x32xf32, #tpu.memory_space<vmem>>, vector<1x8xf32>,
    %259 = vector.extract_strided_slice %256 {offsets = [1, 0], sizes = [1, 8], strides = [1, 1]} : vector<8x8xf32> to vector<1x8xf32>
    %c4_158 = arith.constant 4 : index
    %c8_159 = arith.constant 8 : index
    %260 = vector.load %arg25[%c4_158, %c8_159] : memref<8x32xf32, #tpu.memory_space<vmem>>, vector<1x8xf32>
    tpu.vector_store %arg25[%c4_158, %c8_159], %259 {strides = array<i32>} : memref<8x32xf32, #tpu.memory_space<vmem>>, vector<1x8xf32>,
    %261 = vector.extract_strided_slice %256 {offsets = [2, 0], sizes = [1, 8], strides = [1, 1]} : vector<8x8xf32> to vector<1x8xf32>
    %c4_160 = arith.constant 4 : index
    %c16_161 = arith.constant 16 : index
    %262 = vector.load %arg25[%c4_160, %c16_161] : memref<8x32xf32, #tpu.memory_space<vmem>>, vector<1x8xf32>
    tpu.vector_store %arg25[%c4_160, %c16_161], %261 {strides = array<i32>} : memref<8x32xf32, #tpu.memory_space<vmem>>, vector<1x8xf32>,
    %263 = vector.extract_strided_slice %256 {offsets = [3, 0], sizes = [1, 8], strides = [1, 1]} : vector<8x8xf32> to vector<1x8xf32>
    %c4_162 = arith.constant 4 : index
    %c24_163 = arith.constant 24 : index
    %264 = vector.load %arg25[%c4_162, %c24_163] : memref<8x32xf32, #tpu.memory_space<vmem>>, vector<1x8xf32>
    tpu.vector_store %arg25[%c4_162, %c24_163], %263 {strides = array<i32>} : memref<8x32xf32, #tpu.memory_space<vmem>>, vector<1x8xf32>,
    %265 = vector.extract_strided_slice %256 {offsets = [4, 0], sizes = [1, 8], strides = [1, 1]} : vector<8x8xf32> to vector<1x8xf32>
    %c5_164 = arith.constant 5 : index
    %c0_165 = arith.constant 0 : index
    %266 = vector.load %arg25[%c5_164, %c0_165] : memref<8x32xf32, #tpu.memory_space<vmem>>, vector<1x8xf32>
    tpu.vector_store %arg25[%c5_164, %c0_165], %265 {strides = array<i32>} : memref<8x32xf32, #tpu.memory_space<vmem>>, vector<1x8xf32>,
    %267 = vector.extract_strided_slice %256 {offsets = [5, 0], sizes = [1, 8], strides = [1, 1]} : vector<8x8xf32> to vector<1x8xf32>
    %c5_166 = arith.constant 5 : index
    %c8_167 = arith.constant 8 : index
    %268 = vector.load %arg25[%c5_166, %c8_167] : memref<8x32xf32, #tpu.memory_space<vmem>>, vector<1x8xf32>
    tpu.vector_store %arg25[%c5_166, %c8_167], %267 {strides = array<i32>} : memref<8x32xf32, #tpu.memory_space<vmem>>, vector<1x8xf32>,
    %269 = vector.extract_strided_slice %256 {offsets = [6, 0], sizes = [1, 8], strides = [1, 1]} : vector<8x8xf32> to vector<1x8xf32>
    %c5_168 = arith.constant 5 : index
    %c16_169 = arith.constant 16 : index
    %270 = vector.load %arg25[%c5_168, %c16_169] : memref<8x32xf32, #tpu.memory_space<vmem>>, vector<1x8xf32>
    tpu.vector_store %arg25[%c5_168, %c16_169], %269 {strides = array<i32>} : memref<8x32xf32, #tpu.memory_space<vmem>>, vector<1x8xf32>,
    %271 = vector.extract_strided_slice %256 {offsets = [7, 0], sizes = [1, 8], strides = [1, 1]} : vector<8x8xf32> to vector<1x8xf32>
    %c5_170 = arith.constant 5 : index
    %c24_171 = arith.constant 24 : index
    %272 = vector.load %arg25[%c5_170, %c24_171] : memref<8x32xf32, #tpu.memory_space<vmem>>, vector<1x8xf32>
    tpu.vector_store %arg25[%c5_170, %c24_171], %271 {strides = array<i32>} : memref<8x32xf32, #tpu.memory_space<vmem>>, vector<1x8xf32>,
    %273 = vector.extract_strided_slice %179 {offsets = [0, 24], sizes = [8, 8], strides = [1, 1]} : vector<8x32xf32> to vector<8x8xf32>
    %274 = vector.extract_strided_slice %176 {offsets = [0, 24], sizes = [16, 8], strides = [1, 1]} : vector<16x32xf32> to vector<16x8xf32>
    %275 = vector.extract_strided_slice %177 {offsets = [0, 24], sizes = [16, 8], strides = [1, 1]} : vector<16x32xf32> to vector<16x8xf32>
    %cst_172 = arith.constant dense<0.000000e+00> : vector<8x16xf32>
    %276 = tpu.matmul %273, %274, %cst_172 {dimension_numbers = #tpu.dot_dimension_numbers<[1], [1], [0], [0], [0, 0, 1, 0], [], []>} : vector<8x8xf32>, vector<16x8xf32>, vector<8x16xf32> -> vector<8x16xf32>
    %cst_173 = arith.constant dense<0xFF800000> : vector<8xf32>
    %277 = vector.multi_reduction <maximumf>, %276, %cst_173 [1] : vector<8x16xf32> to vector<8xf32>
    %278 = vector.shape_cast %277 : vector<8xf32> to vector<8x1xf32>
    %279 = vector.broadcast %278 : vector<8x1xf32> to vector<8x16xf32>
    %280 = arith.subf %276, %279 : vector<8x16xf32>
    %281 = math.exp %280 : vector<8x16xf32>
    %cst_174 = arith.constant dense<0.000000e+00> : vector<8xf32>
    %282 = vector.multi_reduction <add>, %281, %cst_174 [1] : vector<8x16xf32> to vector<8xf32>
    %283 = vector.shape_cast %282 : vector<8xf32> to vector<8x1xf32>
    %284 = tpu.reciprocal %283 {approx = true} : vector<8x1xf32> -> vector<8x1xf32>
    %285 = vector.broadcast %284 : vector<8x1xf32> to vector<8x16xf32>
    %286 = arith.mulf %281, %285 : vector<8x16xf32>
    %cst_175 = arith.constant dense<0.000000e+00> : vector<8x8xf32>
    %287 = tpu.matmul %286, %275, %cst_175 {dimension_numbers = #tpu.dot_dimension_numbers<[1], [0], [0], [1], [0, 0, 1, 1], [], []>} : vector<8x16xf32>, vector<16x8xf32>, vector<8x8xf32> -> vector<8x8xf32>
    %288 = vector.extract_strided_slice %287 {offsets = [0, 0], sizes = [1, 8], strides = [1, 1]} : vector<8x8xf32> to vector<1x8xf32>
    %c6_176 = arith.constant 6 : index
    %c0_177 = arith.constant 0 : index
    %289 = vector.load %arg25[%c6_176, %c0_177] : memref<8x32xf32, #tpu.memory_space<vmem>>, vector<1x8xf32>
    tpu.vector_store %arg25[%c6_176, %c0_177], %288 {strides = array<i32>} : memref<8x32xf32, #tpu.memory_space<vmem>>, vector<1x8xf32>,
    %290 = vector.extract_strided_slice %287 {offsets = [1, 0], sizes = [1, 8], strides = [1, 1]} : vector<8x8xf32> to vector<1x8xf32>
    %c6_178 = arith.constant 6 : index
    %c8_179 = arith.constant 8 : index
    %291 = vector.load %arg25[%c6_178, %c8_179] : memref<8x32xf32, #tpu.memory_space<vmem>>, vector<1x8xf32>
    tpu.vector_store %arg25[%c6_178, %c8_179], %290 {strides = array<i32>} : memref<8x32xf32, #tpu.memory_space<vmem>>, vector<1x8xf32>,
    %292 = vector.extract_strided_slice %287 {offsets = [2, 0], sizes = [1, 8], strides = [1, 1]} : vector<8x8xf32> to vector<1x8xf32>
    %c6_180 = arith.constant 6 : index
    %c16_181 = arith.constant 16 : index
    %293 = vector.load %arg25[%c6_180, %c16_181] : memref<8x32xf32, #tpu.memory_space<vmem>>, vector<1x8xf32>
    tpu.vector_store %arg25[%c6_180, %c16_181], %292 {strides = array<i32>} : memref<8x32xf32, #tpu.memory_space<vmem>>, vector<1x8xf32>,
    %294 = vector.extract_strided_slice %287 {offsets = [3, 0], sizes = [1, 8], strides = [1, 1]} : vector<8x8xf32> to vector<1x8xf32>
    %c6_182 = arith.constant 6 : index
    %c24_183 = arith.constant 24 : index
    %295 = vector.load %arg25[%c6_182, %c24_183] : memref<8x32xf32, #tpu.memory_space<vmem>>, vector<1x8xf32>
    tpu.vector_store %arg25[%c6_182, %c24_183], %294 {strides = array<i32>} : memref<8x32xf32, #tpu.memory_space<vmem>>, vector<1x8xf32>,
    %296 = vector.extract_strided_slice %287 {offsets = [4, 0], sizes = [1, 8], strides = [1, 1]} : vector<8x8xf32> to vector<1x8xf32>
    %c7_184 = arith.constant 7 : index
    %c0_185 = arith.constant 0 : index
    %297 = vector.load %arg25[%c7_184, %c0_185] : memref<8x32xf32, #tpu.memory_space<vmem>>, vector<1x8xf32>
    tpu.vector_store %arg25[%c7_184, %c0_185], %296 {strides = array<i32>} : memref<8x32xf32, #tpu.memory_space<vmem>>, vector<1x8xf32>,
    %298 = vector.extract_strided_slice %287 {offsets = [5, 0], sizes = [1, 8], strides = [1, 1]} : vector<8x8xf32> to vector<1x8xf32>
    %c7_186 = arith.constant 7 : index
    %c8_187 = arith.constant 8 : index
    %299 = vector.load %arg25[%c7_186, %c8_187] : memref<8x32xf32, #tpu.memory_space<vmem>>, vector<1x8xf32>
    tpu.vector_store %arg25[%c7_186, %c8_187], %298 {strides = array<i32>} : memref<8x32xf32, #tpu.memory_space<vmem>>, vector<1x8xf32>,
    %300 = vector.extract_strided_slice %287 {offsets = [6, 0], sizes = [1, 8], strides = [1, 1]} : vector<8x8xf32> to vector<1x8xf32>
    %c7_188 = arith.constant 7 : index
    %c16_189 = arith.constant 16 : index
    %301 = vector.load %arg25[%c7_188, %c16_189] : memref<8x32xf32, #tpu.memory_space<vmem>>, vector<1x8xf32>
    tpu.vector_store %arg25[%c7_188, %c16_189], %300 {strides = array<i32>} : memref<8x32xf32, #tpu.memory_space<vmem>>, vector<1x8xf32>,
    %302 = vector.extract_strided_slice %287 {offsets = [7, 0], sizes = [1, 8], strides = [1, 1]} : vector<8x8xf32> to vector<1x8xf32>
    %c7_190 = arith.constant 7 : index
    %c24_191 = arith.constant 24 : index
    %303 = vector.load %arg25[%c7_190, %c24_191] : memref<8x32xf32, #tpu.memory_space<vmem>>, vector<1x8xf32>
    tpu.vector_store %arg25[%c7_190, %c24_191], %302 {strides = array<i32>} : memref<8x32xf32, #tpu.memory_space<vmem>>, vector<1x8xf32>,
    %c0_192 = arith.constant 0 : index
    %c0_193 = arith.constant 0 : index
    %304 = vector.load %arg25[%c0_192, %c0_193] : memref<8x32xf32, #tpu.memory_space<vmem>>, vector<8x32xf32>
    %c0_194 = arith.constant 0 : index
    %c0_195 = arith.constant 0 : index
    %305 = vector.load %arg14[%c0_194, %c0_195] : memref<32x32xf32, #tpu.memory_space<vmem>>, vector<32x32xf32>
    %cst_196 = arith.constant dense<0.000000e+00> : vector<8x32xf32>
    %306 = tpu.matmul %304, %305, %cst_196 {dimension_numbers = #tpu.dot_dimension_numbers<[1], [0], [0], [1], [0, 0, 1, 1], [], []>} : vector<8x32xf32>, vector<32x32xf32>, vector<8x32xf32> -> vector<8x32xf32>
    %c0_197 = arith.constant 0 : index
    %c0_198 = arith.constant 0 : index
    %307 = vector.load %arg15[%c0_197, %c0_198] : memref<1x32xf32, #tpu.memory_space<vmem>>, vector<1x32xf32>
    %308 = vector.broadcast %307 : vector<1x32xf32> to vector<8x32xf32>
    %309 = arith.addf %306, %308 : vector<8x32xf32>
    %310 = arith.addf %169, %309 : vector<8x32xf32>
    %c0_199 = arith.constant 0 : index
    %c0_200 = arith.constant 0 : index
    %311 = vector.load %arg16[%c0_199, %c0_200] : memref<1x32xf32, #tpu.memory_space<vmem>>, vector<1x32xf32>
    %c0_201 = arith.constant 0 : index
    %c0_202 = arith.constant 0 : index
    %312 = vector.load %arg17[%c0_201, %c0_202] : memref<1x32xf32, #tpu.memory_space<vmem>>, vector<1x32xf32>
    %cst_203 = arith.constant dense<0.000000e+00> : vector<8xf32>
    %313 = vector.multi_reduction <add>, %310, %cst_203 [1] : vector<8x32xf32> to vector<8xf32>
    %314 = vector.shape_cast %313 : vector<8xf32> to vector<8x1xf32>
    %cst_204 = arith.constant 3.200000e+01 : f32
    %315 = vector.broadcast %cst_204 : f32 to vector<8x1xf32>
    %316 = arith.divf %314, %315 : vector<8x1xf32>
    %317 = vector.broadcast %316 : vector<8x1xf32> to vector<8x32xf32>
    %318 = arith.subf %310, %317 : vector<8x32xf32>
    %319 = arith.mulf %318, %318 : vector<8x32xf32>
    %cst_205 = arith.constant dense<0.000000e+00> : vector<8xf32>
    %320 = vector.multi_reduction <add>, %319, %cst_205 [1] : vector<8x32xf32> to vector<8xf32>
    %321 = vector.shape_cast %320 : vector<8xf32> to vector<8x1xf32>
    %cst_206 = arith.constant 3.200000e+01 : f32
    %322 = vector.broadcast %cst_206 : f32 to vector<8x1xf32>
    %323 = arith.divf %321, %322 : vector<8x1xf32>
    %324 = vector.broadcast %316 : vector<8x1xf32> to vector<8x32xf32>
    %325 = arith.subf %310, %324 : vector<8x32xf32>
    %cst_207 = arith.constant 9.99999974E-6 : f32
    %326 = vector.broadcast %cst_207 : f32 to vector<8x1xf32>
    %327 = arith.addf %323, %326 : vector<8x1xf32>
    %328 = math.rsqrt %327 : vector<8x1xf32>
    %329 = vector.broadcast %328 : vector<8x1xf32> to vector<8x32xf32>
    %330 = arith.mulf %325, %329 : vector<8x32xf32>
    %331 = vector.broadcast %311 : vector<1x32xf32> to vector<8x32xf32>
    %332 = arith.mulf %330, %331 : vector<8x32xf32>
    %333 = vector.broadcast %312 : vector<1x32xf32> to vector<8x32xf32>
    %334 = arith.addf %332, %333 : vector<8x32xf32>
    %c0_208 = arith.constant 0 : index
    %c0_209 = arith.constant 0 : index
    %335 = vector.load %arg18[%c0_208, %c0_209] : memref<32x64xf32, #tpu.memory_space<vmem>>, vector<32x64xf32>
    %cst_210 = arith.constant dense<0.000000e+00> : vector<8x64xf32>
    %336 = tpu.matmul %334, %335, %cst_210 {dimension_numbers = #tpu.dot_dimension_numbers<[1], [0], [0], [1], [0, 0, 1, 1], [], []>} : vector<8x32xf32>, vector<32x64xf32>, vector<8x64xf32> -> vector<8x64xf32>
    %c0_211 = arith.constant 0 : index
    %c0_212 = arith.constant 0 : index
    %337 = vector.load %arg19[%c0_211, %c0_212] : memref<1x64xf32, #tpu.memory_space<vmem>>, vector<1x64xf32>
    %338 = vector.broadcast %337 : vector<1x64xf32> to vector<8x64xf32>
    %339 = arith.addf %336, %338 : vector<8x64xf32>
    %cst_213 = arith.constant 0.000000e+00 : f32
    %340 = vector.broadcast %cst_213 : f32 to vector<8x64xf32>
    %341 = arith.maximumf %339, %340 : vector<8x64xf32>
    %c0_214 = arith.constant 0 : index
    %c0_215 = arith.constant 0 : index
    %342 = vector.load %arg20[%c0_214, %c0_215] : memref<64x32xf32, #tpu.memory_space<vmem>>, vector<64x32xf32>
    %cst_216 = arith.constant dense<0.000000e+00> : vector<8x32xf32>
    %343 = tpu.matmul %341, %342, %cst_216 {dimension_numbers = #tpu.dot_dimension_numbers<[1], [0], [0], [1], [0, 0, 1, 1], [], []>} : vector<8x64xf32>, vector<64x32xf32>, vector<8x32xf32> -> vector<8x32xf32>
    %c0_217 = arith.constant 0 : index
    %c0_218 = arith.constant 0 : index
    %344 = vector.load %arg21[%c0_217, %c0_218] : memref<1x32xf32, #tpu.memory_space<vmem>>, vector<1x32xf32>
    %345 = vector.broadcast %344 : vector<1x32xf32> to vector<8x32xf32>
    %346 = arith.addf %343, %345 : vector<8x32xf32>
    %347 = arith.addf %334, %346 : vector<8x32xf32>
    %c0_219 = arith.constant 0 : index
    %c0_220 = arith.constant 0 : index
    %348 = vector.load %arg22[%c0_219, %c0_220] : memref<1x32xf32, #tpu.memory_space<vmem>>, vector<1x32xf32>
    %c0_221 = arith.constant 0 : index
    %c0_222 = arith.constant 0 : index
    %349 = vector.load %arg23[%c0_221, %c0_222] : memref<1x32xf32, #tpu.memory_space<vmem>>, vector<1x32xf32>
    %cst_223 = arith.constant dense<0.000000e+00> : vector<8xf32>
    %350 = vector.multi_reduction <add>, %347, %cst_223 [1] : vector<8x32xf32> to vector<8xf32>
    %351 = vector.shape_cast %350 : vector<8xf32> to vector<8x1xf32>
    %cst_224 = arith.constant 3.200000e+01 : f32
    %352 = vector.broadcast %cst_224 : f32 to vector<8x1xf32>
    %353 = arith.divf %351, %352 : vector<8x1xf32>
    %354 = vector.broadcast %353 : vector<8x1xf32> to vector<8x32xf32>
    %355 = arith.subf %347, %354 : vector<8x32xf32>
    %356 = arith.mulf %355, %355 : vector<8x32xf32>
    %cst_225 = arith.constant dense<0.000000e+00> : vector<8xf32>
    %357 = vector.multi_reduction <add>, %356, %cst_225 [1] : vector<8x32xf32> to vector<8xf32>
    %358 = vector.shape_cast %357 : vector<8xf32> to vector<8x1xf32>
    %cst_226 = arith.constant 3.200000e+01 : f32
    %359 = vector.broadcast %cst_226 : f32 to vector<8x1xf32>
    %360 = arith.divf %358, %359 : vector<8x1xf32>
    %361 = vector.broadcast %353 : vector<8x1xf32> to vector<8x32xf32>
    %362 = arith.subf %347, %361 : vector<8x32xf32>
    %cst_227 = arith.constant 9.99999974E-6 : f32
    %363 = vector.broadcast %cst_227 : f32 to vector<8x1xf32>
    %364 = arith.addf %360, %363 : vector<8x1xf32>
    %365 = math.rsqrt %364 : vector<8x1xf32>
    %366 = vector.broadcast %365 : vector<8x1xf32> to vector<8x32xf32>
    %367 = arith.mulf %362, %366 : vector<8x32xf32>
    %368 = vector.broadcast %348 : vector<1x32xf32> to vector<8x32xf32>
    %369 = arith.mulf %367, %368 : vector<8x32xf32>
    %370 = vector.broadcast %349 : vector<1x32xf32> to vector<8x32xf32>
    %371 = arith.addf %369, %370 : vector<8x32xf32>
    %c0_228 = arith.constant 0 : index
    %c0_229 = arith.constant 0 : index
    %c0_230 = arith.constant 0 : index
    %372 = vector.load %arg24[%c0_228, %c0_229, %c0_230] : memref<1x8x32xf32, #tpu.memory_space<vmem>>, vector<1x8x32xf32>
    %373 = vector.shape_cast %372 : vector<1x8x32xf32> to vector<8x32xf32>
    %374 = vector.shape_cast %371 : vector<8x32xf32> to vector<1x8x32xf32>
    tpu.vector_store %arg24[%c0_228, %c0_229, %c0_230], %374 {strides = array<i32>} : memref<1x8x32xf32, #tpu.memory_space<vmem>>, vector<1x8x32xf32>,
    return
  }
  func.func @transform_0(%arg0: i32) -> (i32, i32, i32) {
    %c0_i32 = arith.constant 0 : i32
    %c0_i32_0 = arith.constant 0 : i32
    %c0_i32_1 = arith.constant 0 : i32
    return %arg0, %c0_i32, %c0_i32_0 : i32, i32, i32
  }
  func.func @transform_1(%arg0: i32) -> (i32, i32, i32) {
    %c0_i32 = arith.constant 0 : i32
    %c0_i32_0 = arith.constant 0 : i32
    %c0_i32_1 = arith.constant 0 : i32
    return %arg0, %c0_i32, %c0_i32_0 : i32, i32, i32
  }
  func.func @transform_2(%arg0: i32) -> (i32, i32) {
    %c0_i32 = arith.constant 0 : i32
    %c0_i32_0 = arith.constant 0 : i32
    %c0_i32_1 = arith.constant 0 : i32
    return %c0_i32, %c0_i32_0 : i32, i32
  }
  func.func @transform_3(%arg0: i32) -> (i32, i32) {
    %c0_i32 = arith.constant 0 : i32
    %c0_i32_0 = arith.constant 0 : i32
    %c0_i32_1 = arith.constant 0 : i32
    return %c0_i32, %c0_i32_0 : i32, i32
  }
  func.func @transform_4(%arg0: i32) -> (i32, i32) {
    %c0_i32 = arith.constant 0 : i32
    %c0_i32_0 = arith.constant 0 : i32
    %c0_i32_1 = arith.constant 0 : i32
    return %c0_i32, %c0_i32_0 : i32, i32
  }
  func.func @transform_5(%arg0: i32) -> (i32, i32) {
    %c0_i32 = arith.constant 0 : i32
    %c0_i32_0 = arith.constant 0 : i32
    %c0_i32_1 = arith.constant 0 : i32
    return %c0_i32, %c0_i32_0 : i32, i32
  }
  func.func @transform_6(%arg0: i32) -> (i32, i32) {
    %c0_i32 = arith.constant 0 : i32
    %c0_i32_0 = arith.constant 0 : i32
    %c0_i32_1 = arith.constant 0 : i32
    return %c0_i32, %c0_i32_0 : i32, i32
  }
  func.func @transform_7(%arg0: i32) -> (i32, i32) {
    %c0_i32 = arith.constant 0 : i32
    %c0_i32_0 = arith.constant 0 : i32
    %c0_i32_1 = arith.constant 0 : i32
    return %c0_i32, %c0_i32_0 : i32, i32
  }
  func.func @transform_8(%arg0: i32) -> (i32, i32) {
    %c0_i32 = arith.constant 0 : i32
    %c0_i32_0 = arith.constant 0 : i32
    %c0_i32_1 = arith.constant 0 : i32
    return %c0_i32, %c0_i32_0 : i32, i32
  }
  func.func @transform_9(%arg0: i32) -> (i32, i32) {
    %c0_i32 = arith.constant 0 : i32
    %c0_i32_0 = arith.constant 0 : i32
    %c0_i32_1 = arith.constant 0 : i32
    return %c0_i32, %c0_i32_0 : i32, i32
  }
  func.func @transform_10(%arg0: i32) -> (i32, i32) {
    %c0_i32 = arith.constant 0 : i32
    %c0_i32_0 = arith.constant 0 : i32
    %c0_i32_1 = arith.constant 0 : i32
    return %c0_i32, %c0_i32_0 : i32, i32
  }
  func.func @transform_11(%arg0: i32) -> (i32, i32) {
    %c0_i32 = arith.constant 0 : i32
    %c0_i32_0 = arith.constant 0 : i32
    %c0_i32_1 = arith.constant 0 : i32
    return %c0_i32, %c0_i32_0 : i32, i32
  }
  func.func @transform_12(%arg0: i32) -> (i32, i32) {
    %c0_i32 = arith.constant 0 : i32
    %c0_i32_0 = arith.constant 0 : i32
    %c0_i32_1 = arith.constant 0 : i32
    return %c0_i32, %c0_i32_0 : i32, i32
  }
  func.func @transform_13(%arg0: i32) -> (i32, i32) {
    %c0_i32 = arith.constant 0 : i32
    %c0_i32_0 = arith.constant 0 : i32
    %c0_i32_1 = arith.constant 0 : i32
    return %c0_i32, %c0_i32_0 : i32, i32
  }
  func.func @transform_14(%arg0: i32) -> (i32, i32) {
    %c0_i32 = arith.constant 0 : i32
    %c0_i32_0 = arith.constant 0 : i32
    %c0_i32_1 = arith.constant 0 : i32
    return %c0_i32, %c0_i32_0 : i32, i32
  }
  func.func @transform_15(%arg0: i32) -> (i32, i32) {
    %c0_i32 = arith.constant 0 : i32
    %c0_i32_0 = arith.constant 0 : i32
    %c0_i32_1 = arith.constant 0 : i32
    return %c0_i32, %c0_i32_0 : i32, i32
  }
  func.func @transform_16(%arg0: i32) -> (i32, i32) {
    %c0_i32 = arith.constant 0 : i32
    %c0_i32_0 = arith.constant 0 : i32
    %c0_i32_1 = arith.constant 0 : i32
    return %c0_i32, %c0_i32_0 : i32, i32
  }
  func.func @transform_17(%arg0: i32) -> (i32, i32) {
    %c0_i32 = arith.constant 0 : i32
    %c0_i32_0 = arith.constant 0 : i32
    %c0_i32_1 = arith.constant 0 : i32
    return %c0_i32, %c0_i32_0 : i32, i32
  }
  func.func @transform_18(%arg0: i32) -> (i32, i32) {
    %c0_i32 = arith.constant 0 : i32
    %c0_i32_0 = arith.constant 0 : i32
    %c0_i32_1 = arith.constant 0 : i32
    return %c0_i32, %c0_i32_0 : i32, i32
  }
  func.func @transform_19(%arg0: i32) -> (i32, i32) {
    %c0_i32 = arith.constant 0 : i32
    %c0_i32_0 = arith.constant 0 : i32
    %c0_i32_1 = arith.constant 0 : i32
    return %c0_i32, %c0_i32_0 : i32, i32
  }
  func.func @transform_20(%arg0: i32) -> (i32, i32) {
    %c0_i32 = arith.constant 0 : i32
    %c0_i32_0 = arith.constant 0 : i32
    %c0_i32_1 = arith.constant 0 : i32
    return %c0_i32, %c0_i32_0 : i32, i32
  }
  func.func @transform_21(%arg0: i32) -> (i32, i32) {
    %c0_i32 = arith.constant 0 : i32
    %c0_i32_0 = arith.constant 0 : i32
    %c0_i32_1 = arith.constant 0 : i32
    return %c0_i32, %c0_i32_0 : i32, i32
  }
  func.func @transform_22(%arg0: i32) -> (i32, i32) {
    %c0_i32 = arith.constant 0 : i32
    %c0_i32_0 = arith.constant 0 : i32
    %c0_i32_1 = arith.constant 0 : i32
    return %c0_i32, %c0_i32_0 : i32, i32
  }
  func.func @transform_23(%arg0: i32) -> (i32, i32, i32) {
    %c0_i32 = arith.constant 0 : i32
    %c0_i32_0 = arith.constant 0 : i32
    %c0_i32_1 = arith.constant 0 : i32
    return %arg0, %c0_i32, %c0_i32_0 : i32, i32, i32
  }
}

</mosaic_0001>

<llo_original>
// kernel: decoder_layer.1
$region0: #{decoder_layer.1}
  #allocation0 [shape = 'u32[]', space=smem, size = 0x4, offset = 0x4, fixed_abs, tag = 'smem constant byte address 0x4 - core index']
  #allocation1 [shape = 'u32[144,128]{1,0:T(1,128)}', space=vmem, size = 0x12000, scoped, tag = 'internal scratch']
  #allocation2 [shape = 'f32[8,32]{1,0:T(8,128)}', space=vmem, size = 0x1000, scoped, tag = 'scratch operand']
  %s0 = inlined_call_operand.hbm [shape: f32[2,8,32], index: 0, kind: input, shape index: {}]
  %s1 = inlined_call_operand.hbm [shape: f32[2,16,32], index: 1, kind: input, shape index: {}]
  %s2 = inlined_call_operand.hbm [shape: f32[8,8], index: 2, kind: input, shape index: {}]
  %s3 = inlined_call_operand.hbm [shape: f32[32,32], index: 3, kind: input, shape index: {}]
  %s4 = inlined_call_operand.hbm [shape: f32[32,32], index: 4, kind: input, shape index: {}]
  %s5 = inlined_call_operand.hbm [shape: f32[32,32], index: 5, kind: input, shape index: {}]
  %s6 = inlined_call_operand.hbm [shape: f32[32,32], index: 6, kind: input, shape index: {}]
  %s7 = inlined_call_operand.hbm [shape: f32[1,32], index: 7, kind: input, shape index: {}]
  %s8 = inlined_call_operand.hbm [shape: f32[1,32], index: 8, kind: input, shape index: {}]
  %s9 = inlined_call_operand.hbm [shape: f32[1,32], index: 9, kind: input, shape index: {}]
  %s10 = inlined_call_operand.hbm [shape: f32[32,32], index: 10, kind: input, shape index: {}]
  %s11 = inlined_call_operand.hbm [shape: f32[32,32], index: 11, kind: input, shape index: {}]
  %s12 = inlined_call_operand.hbm [shape: f32[32,32], index: 12, kind: input, shape index: {}]
  %s13 = inlined_call_operand.hbm [shape: f32[32,32], index: 13, kind: input, shape index: {}]
  %s14 = inlined_call_operand.hbm [shape: f32[1,32], index: 14, kind: input, shape index: {}]
  %s15 = inlined_call_operand.hbm [shape: f32[1,32], index: 15, kind: input, shape index: {}]
  %s16 = inlined_call_operand.hbm [shape: f32[1,32], index: 16, kind: input, shape index: {}]
  %s17 = inlined_call_operand.hbm [shape: f32[32,64], index: 17, kind: input, shape index: {}]
  %s18 = inlined_call_operand.hbm [shape: f32[1,64], index: 18, kind: input, shape index: {}]
  %s19 = inlined_call_operand.hbm [shape: f32[64,32], index: 19, kind: input, shape index: {}]
  %s20 = inlined_call_operand.hbm [shape: f32[1,32], index: 20, kind: input, shape index: {}]
  %s21 = inlined_call_operand.hbm [shape: f32[1,32], index: 21, kind: input, shape index: {}]
  %s22 = inlined_call_operand.hbm [shape: f32[1,32], index: 22, kind: input, shape index: {}]
  %s23 = inlined_call_operand.hbm [shape: f32[2,8,32], index: 23, kind: output, shape index: {}]
  %s24 = sld [smem:[#allocation0]]
  $region217: #{decoder_layer.1} parent=0
    _
  %s26 = ssub.s32 1, %s24
  %s27 = scalar_select 0, %s26, %s24
  $region1: #{decoder_layer.1} parent=0
    #allocation3 [shape = 'u8[8192]{0}', space=vmem, size = 0x2000, scoped, tag = 'input window, operand 0']
    #allocation4 [shape = 's32[2]{0}', space=sflag, size = 0x8, scoped, tag = 'scoped memory for decoder_layer.1']
    #allocation5 [shape = 's32[2]{0}', space=sflag, size = 0x8, scoped, tag = 'scoped memory for decoder_layer.1']
    #allocation6 [shape = 'u8[16384]{0}', space=vmem, size = 0x4000, scoped, tag = 'input window, operand 1']
    #allocation7 [shape = 's32[2]{0}', space=sflag, size = 0x8, scoped, tag = 'scoped memory for decoder_layer.1']
    #allocation8 [shape = 'u8[4096]{0}', space=vmem, size = 0x1000, scoped, tag = 'input window, operand 2, single buffered']
    #allocation9 [shape = 'u8[16384]{0}', space=vmem, size = 0x4000, scoped, tag = 'input window, operand 3, single buffered']
    #allocation10 [shape = 's32[1]{0}', space=sflag, size = 0x4, scoped, tag = 'scoped memory for decoder_layer.1']
    #allocation11 [shape = 'u8[16384]{0}', space=vmem, size = 0x4000, scoped, tag = 'input window, operand 4, single buffered']
    #allocation12 [shape = 'u8[16384]{0}', space=vmem, size = 0x4000, scoped, tag = 'input window, operand 5, single buffered']
    #allocation13 [shape = 's32[1]{0}', space=sflag, size = 0x4, scoped, tag = 'scoped memory for decoder_layer.1']
    #allocation14 [shape = 'u8[16384]{0}', space=vmem, size = 0x4000, scoped, tag = 'input window, operand 6, single buffered']
    #allocation15 [shape = 'u8[512]{0}', space=vmem, size = 0x400, scoped, tag = 'input window, operand 7, single buffered']
    #allocation16 [shape = 's32[1]{0}', space=sflag, size = 0x4, scoped, tag = 'scoped memory for decoder_layer.1']
    #allocation17 [shape = 'u8[512]{0}', space=vmem, size = 0x400, scoped, tag = 'input window, operand 8, single buffered']
    #allocation18 [shape = 'u8[512]{0}', space=vmem, size = 0x400, scoped, tag = 'input window, operand 9, single buffered']
    #allocation19 [shape = 's32[1]{0}', space=sflag, size = 0x4, scoped, tag = 'scoped memory for decoder_layer.1']
    #allocation20 [shape = 'u8[16384]{0}', space=vmem, size = 0x4000, scoped, tag = 'input window, operand 10, single buffered']
    #allocation21 [shape = 'u8[16384]{0}', space=vmem, size = 0x4000, scoped, tag = 'input window, operand 11, single buffered']
    #allocation22 [shape = 's32[1]{0}', space=sflag, size = 0x4, scoped, tag = 'scoped memory for decoder_layer.1']
    #allocation23 [shape = 'u8[16384]{0}', space=vmem, size = 0x4000, scoped, tag = 'input window, operand 12, single buffered']
    #allocation24 [shape = 'u8[16384]{0}', space=vmem, size = 0x4000, scoped, tag = 'input window, operand 13, single buffered']
    #allocation25 [shape = 's32[1]{0}', space=sflag, size = 0x4, scoped, tag = 'scoped memory for decoder_layer.1']
    #allocation26 [shape = 'u8[512]{0}', space=vmem, size = 0x400, scoped, tag = 'input window, operand 14, single buffered']
    #allocation27 [shape = 'u8[512]{0}', space=vmem, size = 0x400, scoped, tag = 'input window, operand 15, single buffered']
    #allocation28 [shape = 's32[1]{0}', space=sflag, size = 0x4, scoped, tag = 'scoped memory for decoder_layer.1']
    #allocation29 [shape = 'u8[512]{0}', space=vmem, size = 0x400, scoped, tag = 'input window, operand 16, single buffered']
    #allocation30 [shape = 'u8[16384]{0}', space=vmem, size = 0x4000, scoped, tag = 'input window, operand 17, single buffered']
    #allocation31 [shape = 's32[1]{0}', space=sflag, size = 0x4, scoped, tag = 'scoped memory for decoder_layer.1']
    #allocation32 [shape = 'u8[512]{0}', space=vmem, size = 0x400, scoped, tag = 'input window, operand 18, single buffered']
    #allocation33 [shape = 'u8[32768]{0}', space=vmem, size = 0x8000, scoped, tag = 'input window, operand 19, single buffered']
    #allocation34 [shape = 's32[1]{0}', space=sflag, size = 0x4, scoped, tag = 'scoped memory for decoder_layer.1']
    #allocation35 [shape = 'u8[512]{0}', space=vmem, size = 0x400, scoped, tag = 'input window, operand 20, single buffered']
    #allocation36 [shape = 'u8[512]{0}', space=vmem, size = 0x400, scoped, tag = 'input window, operand 21, single buffered']
    #allocation37 [shape = 's32[1]{0}', space=sflag, size = 0x4, scoped, tag = 'scoped memory for decoder_layer.1']
    #allocation38 [shape = 'u8[512]{0}', space=vmem, size = 0x400, scoped, tag = 'input window, operand 22, single buffered']
    #allocation39 [shape = 'u8[8192]{0}', space=vmem, size = 0x2000, scoped, tag = 'output window, operand 0']
    %28 = vsyncpa [#allocation4], 0
    %s29 = scalar_lea.sflag [#allocation4], 1
    %30 = vsyncpa %s29, 0
    %31 = vsyncpa [#allocation7], 0
    %s32 = scalar_lea.sflag [#allocation7], 1
    %33 = vsyncpa %s32, 0
    %34 = vsyncpa [#allocation10], 0
    %35 = vsyncpa [#allocation13], 0
    %36 = vsyncpa [#allocation16], 0
    %37 = vsyncpa [#allocation19], 0
    %38 = vsyncpa [#allocation22], 0
    %39 = vsyncpa [#allocation25], 0
    %40 = vsyncpa [#allocation28], 0
    %41 = vsyncpa [#allocation31], 0
    %42 = vsyncpa [#allocation34], 0
    %43 = vsyncpa [#allocation37], 0
    %44 = vsyncpa [#allocation5], 0
    %s45 = scalar_lea.sflag [#allocation5], 1
    %46 = vsyncpa %s45, 0
    loop: start=0, step=1, limit=4
    $region2: #{decoder_layer.1} parent=1 // loop_pre_header
      _
    $region3: #{decoder_layer.1} parent=1 // loop_header
      %s48 = sphi 0, %s52
      %p49 = scmp.ge.s32.totalorder %s48, 4
      %s58 = sphi 0, %s60
      %s61 = sphi 0, %s58
      %s62 = sphi 0, %s61
      %s78 = sphi 0, %s62
      %s84 = sphi 0, %s86
      %s87 = sphi 0, %s84
      %s88 = sphi 0, %s87
      %s104 = sphi 0, %s88
      %s108 = sphi 0, %s108
      %s110 = sphi 0, %s108
      %s111 = sphi 0, %s110
      %s125 = sphi 0, %s111
      %s129 = sphi 0, %s129
      %s131 = sphi 0, %s129
      %s132 = sphi 0, %s131
      %s146 = sphi 0, %s132
      %s150 = sphi 0, %s150
      %s152 = sphi 0, %s150
      %s153 = sphi 0, %s152
      %s167 = sphi 0, %s153
      %s171 = sphi 0, %s171
      %s173 = sphi 0, %s171
      %s174 = sphi 0, %s173
      %s188 = sphi 0, %s174
      %s192 = sphi 0, %s192
      %s194 = sphi 0, %s192
      %s195 = sphi 0, %s194
      %s209 = sphi 0, %s195
      %s213 = sphi 0, %s213
      %s215 = sphi 0, %s213
      %s216 = sphi 0, %s215
      %s230 = sphi 0, %s216
      %s234 = sphi 0, %s234
      %s236 = sphi 0, %s234
      %s237 = sphi 0, %s236
      %s251 = sphi 0, %s237
      %s255 = sphi 0, %s255
      %s257 = sphi 0, %s255
      %s258 = sphi 0, %s257
      %s272 = sphi 0, %s258
      %s276 = sphi 0, %s276
      %s278 = sphi 0, %s276
      %s279 = sphi 0, %s278
      %s293 = sphi 0, %s279
      %s297 = sphi 0, %s297
      %s299 = sphi 0, %s297
      %s300 = sphi 0, %s299
      %s314 = sphi 0, %s300
      %s318 = sphi 0, %s318
      %s320 = sphi 0, %s318
      %s321 = sphi 0, %s320
      %s335 = sphi 0, %s321
      %s339 = sphi 0, %s339
      %s341 = sphi 0, %s339
      %s342 = sphi 0, %s341
      %s356 = sphi 0, %s342
      %s360 = sphi 0, %s360
      %s362 = sphi 0, %s360
      %s363 = sphi 0, %s362
      %s377 = sphi 0, %s363
      %s381 = sphi 0, %s381
      %s383 = sphi 0, %s381
      %s384 = sphi 0, %s383
      %s398 = sphi 0, %s384
      %s402 = sphi 0, %s402
      %s404 = sphi 0, %s402
      %s405 = sphi 0, %s404
      %s419 = sphi 0, %s405
      %s423 = sphi 0, %s423
      %s425 = sphi 0, %s423
      %s426 = sphi 0, %s425
      %s440 = sphi 0, %s426
      %s444 = sphi 0, %s444
      %s446 = sphi 0, %s444
      %s447 = sphi 0, %s446
      %s461 = sphi 0, %s447
      %s465 = sphi 0, %s465
      %s467 = sphi 0, %s465
      %s468 = sphi 0, %s467
      %s482 = sphi 0, %s468
      %s486 = sphi 0, %s486
      %s488 = sphi 0, %s486
      %s489 = sphi 0, %s488
      %s503 = sphi 0, %s489
      %s507 = sphi 0, %s507
      %s509 = sphi 0, %s507
      %s510 = sphi 0, %s509
      %s524 = sphi 0, %s510
      %s528 = sphi 0, %s528
      %s530 = sphi 0, %s528
      %s531 = sphi 0, %s530
      %s545 = sphi 0, %s531
      %s551 = sphi 0, %s553
      %s554 = sphi 0, %s551
      %s555 = sphi 0, %s554
      %s571 = sphi 0, %s555
    $region4: #{decoder_layer.1} parent=1 // loop_header_branch
      %51 = sbr.rel (%p49) target = $region8
    $region5: #{decoder_layer.1} parent=1 // loop_body
      %s53 = ssub.s32 %s48, 1
      %s54 = ssub.s32 %s48, 2
      %s55 = sadd.s32 %s48, 1
      %s56 = ssub.s32 %s48, %s55
      %p57 = scmp.eq.s32.totalorder %s56, 0
      %s59 = sadd.s32 %s58, 1
      %s60 = scalar_select %p57, %s58, %s59
      %p63 = pneg %p57
      %p64 = scmp.eq.s32.totalorder %s48, 1
      %p65 = por %p63, %p64
      %p66 = scmp.ne.s32.totalorder %s58, %s61
      %p67 = scmp.eq.s32.totalorder %s48, 0
      %p68 = por %p66, %p67
      %p69 = scmp.ne.s32.totalorder %s58, %s61
      %p70 = scmp.eq.s32.totalorder %s53, 1
      %p71 = por %p69, %p70
      %p72 = scmp.ne.s32.totalorder %s61, %s62
      %p73 = scmp.eq.s32.totalorder %s53, 0
      %p74 = por %p72, %p73
      %p75 = scmp.ne.s32.totalorder %s61, %s62
      %p76 = scmp.eq.s32.totalorder %s54, 1
      %p77 = por %p75, %p76
      %p79 = scmp.ne.s32.totalorder %s62, %s78
      %p80 = scmp.eq.s32.totalorder %s54, 0
      %p81 = por %p79, %p80
      %s82 = ssub.s32 %s48, %s55
      %p83 = scmp.eq.s32.totalorder %s82, 0
      %s85 = sadd.s32 %s84, 1
      %s86 = scalar_select %p83, %s84, %s85
      %p89 = pneg %p83
      %p90 = scmp.eq.s32.totalorder %s48, 1
      %p91 = por %p89, %p90
      %p92 = scmp.ne.s32.totalorder %s84, %s87
      %p93 = scmp.eq.s32.totalorder %s48, 0
      %p94 = por %p92, %p93
      %p95 = scmp.ne.s32.totalorder %s84, %s87
      %p96 = scmp.eq.s32.totalorder %s53, 1
      %p97 = por %p95, %p96
      %p98 = scmp.ne.s32.totalorder %s87, %s88
      %p99 = scmp.eq.s32.totalorder %s53, 0
      %p100 = por %p98, %p99
      %p101 = scmp.ne.s32.totalorder %s87, %s88
      %p102 = scmp.eq.s32.totalorder %s54, 1
      %p103 = por %p101, %p102
      %p105 = scmp.ne.s32.totalorder %s88, %s104
      %p106 = scmp.eq.s32.totalorder %s54, 0
      %p107 = por %p105, %p106
      %s109 = sadd.s32 %s108, 1
      %p112 = scmp.eq.s32.totalorder %s48, 1
      %p113 = scmp.ne.s32.totalorder %s108, %s110
      %p114 = scmp.eq.s32.totalorder %s48, 0
      %p115 = por %p113, %p114
      %p116 = scmp.ne.s32.totalorder %s108, %s110
      %p117 = scmp.eq.s32.totalorder %s53, 1
      %p118 = por %p116, %p117
      %p119 = scmp.ne.s32.totalorder %s110, %s111
      %p120 = scmp.eq.s32.totalorder %s53, 0
      %p121 = por %p119, %p120
      %p122 = scmp.ne.s32.totalorder %s110, %s111
      %p123 = scmp.eq.s32.totalorder %s54, 1
      %p124 = por %p122, %p123
      %p126 = scmp.ne.s32.totalorder %s111, %s125
      %p127 = scmp.eq.s32.totalorder %s54, 0
      %p128 = por %p126, %p127
      %s130 = sadd.s32 %s129, 1
      %p133 = scmp.eq.s32.totalorder %s48, 1
      %p134 = scmp.ne.s32.totalorder %s129, %s131
      %p135 = scmp.eq.s32.totalorder %s48, 0
      %p136 = por %p134, %p135
      %p137 = scmp.ne.s32.totalorder %s129, %s131
      %p138 = scmp.eq.s32.totalorder %s53, 1
      %p139 = por %p137, %p138
      %p140 = scmp.ne.s32.totalorder %s131, %s132
      %p141 = scmp.eq.s32.totalorder %s53, 0
      %p142 = por %p140, %p141
      %p143 = scmp.ne.s32.totalorder %s131, %s132
      %p144 = scmp.eq.s32.totalorder %s54, 1
      %p145 = por %p143, %p144
      %p147 = scmp.ne.s32.totalorder %s132, %s146
      %p148 = scmp.eq.s32.totalorder %s54, 0
      %p149 = por %p147, %p148
      %s151 = sadd.s32 %s150, 1
      %p154 = scmp.eq.s32.totalorder %s48, 1
      %p155 = scmp.ne.s32.totalorder %s150, %s152
      %p156 = scmp.eq.s32.totalorder %s48, 0
      %p157 = por %p155, %p156
      %p158 = scmp.ne.s32.totalorder %s150, %s152
      %p159 = scmp.eq.s32.totalorder %s53, 1
      %p160 = por %p158, %p159
      %p161 = scmp.ne.s32.totalorder %s152, %s153
      %p162 = scmp.eq.s32.totalorder %s53, 0
      %p163 = por %p161, %p162
      %p164 = scmp.ne.s32.totalorder %s152, %s153
      %p165 = scmp.eq.s32.totalorder %s54, 1
      %p166 = por %p164, %p165
      %p168 = scmp.ne.s32.totalorder %s153, %s167
      %p169 = scmp.eq.s32.totalorder %s54, 0
      %p170 = por %p168, %p169
      %s172 = sadd.s32 %s171, 1
      %p175 = scmp.eq.s32.totalorder %s48, 1
      %p176 = scmp.ne.s32.totalorder %s171, %s173
      %p177 = scmp.eq.s32.totalorder %s48, 0
      %p178 = por %p176, %p177
      %p179 = scmp.ne.s32.totalorder %s171, %s173
      %p180 = scmp.eq.s32.totalorder %s53, 1
      %p181 = por %p179, %p180
      %p182 = scmp.ne.s32.totalorder %s173, %s174
      %p183 = scmp.eq.s32.totalorder %s53, 0
      %p184 = por %p182, %p183
      %p185 = scmp.ne.s32.totalorder %s173, %s174
      %p186 = scmp.eq.s32.totalorder %s54, 1
      %p187 = por %p185, %p186
      %p189 = scmp.ne.s32.totalorder %s174, %s188
      %p190 = scmp.eq.s32.totalorder %s54, 0
      %p191 = por %p189, %p190
      %s193 = sadd.s32 %s192, 1
      %p196 = scmp.eq.s32.totalorder %s48, 1
      %p197 = scmp.ne.s32.totalorder %s192, %s194
      %p198 = scmp.eq.s32.totalorder %s48, 0
      %p199 = por %p197, %p198
      %p200 = scmp.ne.s32.totalorder %s192, %s194
      %p201 = scmp.eq.s32.totalorder %s53, 1
      %p202 = por %p200, %p201
      %p203 = scmp.ne.s32.totalorder %s194, %s195
      %p204 = scmp.eq.s32.totalorder %s53, 0
      %p205 = por %p203, %p204
      %p206 = scmp.ne.s32.totalorder %s194, %s195
      %p207 = scmp.eq.s32.totalorder %s54, 1
      %p208 = por %p206, %p207
      %p210 = scmp.ne.s32.totalorder %s195, %s209
      %p211 = scmp.eq.s32.totalorder %s54, 0
      %p212 = por %p210, %p211
      %s214 = sadd.s32 %s213, 1
      %p217 = scmp.eq.s32.totalorder %s48, 1
      %p218 = scmp.ne.s32.totalorder %s213, %s215
      %p219 = scmp.eq.s32.totalorder %s48, 0
      %p220 = por %p218, %p219
      %p221 = scmp.ne.s32.totalorder %s213, %s215
      %p222 = scmp.eq.s32.totalorder %s53, 1
      %p223 = por %p221, %p222
      %p224 = scmp.ne.s32.totalorder %s215, %s216
      %p225 = scmp.eq.s32.totalorder %s53, 0
      %p226 = por %p224, %p225
      %p227 = scmp.ne.s32.totalorder %s215, %s216
      %p228 = scmp.eq.s32.totalorder %s54, 1
      %p229 = por %p227, %p228
      %p231 = scmp.ne.s32.totalorder %s216, %s230
      %p232 = scmp.eq.s32.totalorder %s54, 0
      %p233 = por %p231, %p232
      %s235 = sadd.s32 %s234, 1
      %p238 = scmp.eq.s32.totalorder %s48, 1
      %p239 = scmp.ne.s32.totalorder %s234, %s236
      %p240 = scmp.eq.s32.totalorder %s48, 0
      %p241 = por %p239, %p240
      %p242 = scmp.ne.s32.totalorder %s234, %s236
      %p243 = scmp.eq.s32.totalorder %s53, 1
      %p244 = por %p242, %p243
      %p245 = scmp.ne.s32.totalorder %s236, %s237
      %p246 = scmp.eq.s32.totalorder %s53, 0
      %p247 = por %p245, %p246
      %p248 = scmp.ne.s32.totalorder %s236, %s237
      %p249 = scmp.eq.s32.totalorder %s54, 1
      %p250 = por %p248, %p249
      %p252 = scmp.ne.s32.totalorder %s237, %s251
      %p253 = scmp.eq.s32.totalorder %s54, 0
      %p254 = por %p252, %p253
      %s256 = sadd.s32 %s255, 1
      %p259 = scmp.eq.s32.totalorder %s48, 1
      %p260 = scmp.ne.s32.totalorder %s255, %s257
      %p261 = scmp.eq.s32.totalorder %s48, 0
      %p262 = por %p260, %p261
      %p263 = scmp.ne.s32.totalorder %s255, %s257
      %p264 = scmp.eq.s32.totalorder %s53, 1
      %p265 = por %p263, %p264
      %p266 = scmp.ne.s32.totalorder %s257, %s258
      %p267 = scmp.eq.s32.totalorder %s53, 0
      %p268 = por %p266, %p267
      %p269 = scmp.ne.s32.totalorder %s257, %s258
      %p270 = scmp.eq.s32.totalorder %s54, 1
      %p271 = por %p269, %p270
      %p273 = scmp.ne.s32.totalorder %s258, %s272
      %p274 = scmp.eq.s32.totalorder %s54, 0
      %p275 = por %p273, %p274
      %s277 = sadd.s32 %s276, 1
      %p280 = scmp.eq.s32.totalorder %s48, 1
      %p281 = scmp.ne.s32.totalorder %s276, %s278
      %p282 = scmp.eq.s32.totalorder %s48, 0
      %p283 = por %p281, %p282
      %p284 = scmp.ne.s32.totalorder %s276, %s278
      %p285 = scmp.eq.s32.totalorder %s53, 1
      %p286 = por %p284, %p285
      %p287 = scmp.ne.s32.totalorder %s278, %s279
      %p288 = scmp.eq.s32.totalorder %s53, 0
      %p289 = por %p287, %p288
      %p290 = scmp.ne.s32.totalorder %s278, %s279
      %p291 = scmp.eq.s32.totalorder %s54, 1
      %p292 = por %p290, %p291
      %p294 = scmp.ne.s32.totalorder %s279, %s293
      %p295 = scmp.eq.s32.totalorder %s54, 0
      %p296 = por %p294, %p295
      %s298 = sadd.s32 %s297, 1
      %p301 = scmp.eq.s32.totalorder %s48, 1
      %p302 = scmp.ne.s32.totalorder %s297, %s299
      %p303 = scmp.eq.s32.totalorder %s48, 0
      %p304 = por %p302, %p303
      %p305 = scmp.ne.s32.totalorder %s297, %s299
      %p306 = scmp.eq.s32.totalorder %s53, 1
      %p307 = por %p305, %p306
      %p308 = scmp.ne.s32.totalorder %s299, %s300
      %p309 = scmp.eq.s32.totalorder %s53, 0
      %p310 = por %p308, %p309
      %p311 = scmp.ne.s32.totalorder %s299, %s300
      %p312 = scmp.eq.s32.totalorder %s54, 1
      %p313 = por %p311, %p312
      %p315 = scmp.ne.s32.totalorder %s300, %s314
      %p316 = scmp.eq.s32.totalorder %s54, 0
      %p317 = por %p315, %p316
      %s319 = sadd.s32 %s318, 1
      %p322 = scmp.eq.s32.totalorder %s48, 1
      %p323 = scmp.ne.s32.totalorder %s318, %s320
      %p324 = scmp.eq.s32.totalorder %s48, 0
      %p325 = por %p323, %p324
      %p326 = scmp.ne.s32.totalorder %s318, %s320
      %p327 = scmp.eq.s32.totalorder %s53, 1
      %p328 = por %p326, %p327
      %p329 = scmp.ne.s32.totalorder %s320, %s321
      %p330 = scmp.eq.s32.totalorder %s53, 0
      %p331 = por %p329, %p330
      %p332 = scmp.ne.s32.totalorder %s320, %s321
      %p333 = scmp.eq.s32.totalorder %s54, 1
      %p334 = por %p332, %p333
      %p336 = scmp.ne.s32.totalorder %s321, %s335
      %p337 = scmp.eq.s32.totalorder %s54, 0
      %p338 = por %p336, %p337
      %s340 = sadd.s32 %s339, 1
      %p343 = scmp.eq.s32.totalorder %s48, 1
      %p344 = scmp.ne.s32.totalorder %s339, %s341
      %p345 = scmp.eq.s32.totalorder %s48, 0
      %p346 = por %p344, %p345
      %p347 = scmp.ne.s32.totalorder %s339, %s341
      %p348 = scmp.eq.s32.totalorder %s53, 1
      %p349 = por %p347, %p348
      %p350 = scmp.ne.s32.totalorder %s341, %s342
      %p351 = scmp.eq.s32.totalorder %s53, 0
      %p352 = por %p350, %p351
      %p353 = scmp.ne.s32.totalorder %s341, %s342
      %p354 = scmp.eq.s32.totalorder %s54, 1
      %p355 = por %p353, %p354
      %p357 = scmp.ne.s32.totalorder %s342, %s356
      %p358 = scmp.eq.s32.totalorder %s54, 0
      %p359 = por %p357, %p358
      %s361 = sadd.s32 %s360, 1
      %p364 = scmp.eq.s32.totalorder %s48, 1
      %p365 = scmp.ne.s32.totalorder %s360, %s362
      %p366 = scmp.eq.s32.totalorder %s48, 0
      %p367 = por %p365, %p366
      %p368 = scmp.ne.s32.totalorder %s360, %s362
      %p369 = scmp.eq.s32.totalorder %s53, 1
      %p370 = por %p368, %p369
      %p371 = scmp.ne.s32.totalorder %s362, %s363
      %p372 = scmp.eq.s32.totalorder %s53, 0
      %p373 = por %p371, %p372
      %p374 = scmp.ne.s32.totalorder %s362, %s363
      %p375 = scmp.eq.s32.totalorder %s54, 1
      %p376 = por %p374, %p375
      %p378 = scmp.ne.s32.totalorder %s363, %s377
      %p379 = scmp.eq.s32.totalorder %s54, 0
      %p380 = por %p378, %p379
      %s382 = sadd.s32 %s381, 1
      %p385 = scmp.eq.s32.totalorder %s48, 1
      %p386 = scmp.ne.s32.totalorder %s381, %s383
      %p387 = scmp.eq.s32.totalorder %s48, 0
      %p388 = por %p386, %p387
      %p389 = scmp.ne.s32.totalorder %s381, %s383
      %p390 = scmp.eq.s32.totalorder %s53, 1
      %p391 = por %p389, %p390
      %p392 = scmp.ne.s32.totalorder %s383, %s384
      %p393 = scmp.eq.s32.totalorder %s53, 0
      %p394 = por %p392, %p393
      %p395 = scmp.ne.s32.totalorder %s383, %s384
      %p396 = scmp.eq.s32.totalorder %s54, 1
      %p397 = por %p395, %p396
      %p399 = scmp.ne.s32.totalorder %s384, %s398
      %p400 = scmp.eq.s32.totalorder %s54, 0
      %p401 = por %p399, %p400
      %s403 = sadd.s32 %s402, 1
      %p406 = scmp.eq.s32.totalorder %s48, 1
      %p407 = scmp.ne.s32.totalorder %s402, %s404
      %p408 = scmp.eq.s32.totalorder %s48, 0
      %p409 = por %p407, %p408
      %p410 = scmp.ne.s32.totalorder %s402, %s404
      %p411 = scmp.eq.s32.totalorder %s53, 1
      %p412 = por %p410, %p411
      %p413 = scmp.ne.s32.totalorder %s404, %s405
      %p414 = scmp.eq.s32.totalorder %s53, 0
      %p415 = por %p413, %p414
      %p416 = scmp.ne.s32.totalorder %s404, %s405
      %p417 = scmp.eq.s32.totalorder %s54, 1
      %p418 = por %p416, %p417
      %p420 = scmp.ne.s32.totalorder %s405, %s419
      %p421 = scmp.eq.s32.totalorder %s54, 0
      %p422 = por %p420, %p421
      %s424 = sadd.s32 %s423, 1
      %p427 = scmp.eq.s32.totalorder %s48, 1
      %p428 = scmp.ne.s32.totalorder %s423, %s425
      %p429 = scmp.eq.s32.totalorder %s48, 0
      %p430 = por %p428, %p429
      %p431 = scmp.ne.s32.totalorder %s423, %s425
      %p432 = scmp.eq.s32.totalorder %s53, 1
      %p433 = por %p431, %p432
      %p434 = scmp.ne.s32.totalorder %s425, %s426
      %p435 = scmp.eq.s32.totalorder %s53, 0
      %p436 = por %p434, %p435
      %p437 = scmp.ne.s32.totalorder %s425, %s426
      %p438 = scmp.eq.s32.totalorder %s54, 1
      %p439 = por %p437, %p438
      %p441 = scmp.ne.s32.totalorder %s426, %s440
      %p442 = scmp.eq.s32.totalorder %s54, 0
      %p443 = por %p441, %p442
      %s445 = sadd.s32 %s444, 1
      %p448 = scmp.eq.s32.totalorder %s48, 1
      %p449 = scmp.ne.s32.totalorder %s444, %s446
      %p450 = scmp.eq.s32.totalorder %s48, 0
      %p451 = por %p449, %p450
      %p452 = scmp.ne.s32.totalorder %s444, %s446
      %p453 = scmp.eq.s32.totalorder %s53, 1
      %p454 = por %p452, %p453
      %p455 = scmp.ne.s32.totalorder %s446, %s447
      %p456 = scmp.eq.s32.totalorder %s53, 0
      %p457 = por %p455, %p456
      %p458 = scmp.ne.s32.totalorder %s446, %s447
      %p459 = scmp.eq.s32.totalorder %s54, 1
      %p460 = por %p458, %p459
      %p462 = scmp.ne.s32.totalorder %s447, %s461
      %p463 = scmp.eq.s32.totalorder %s54, 0
      %p464 = por %p462, %p463
      %s466 = sadd.s32 %s465, 1
      %p469 = scmp.eq.s32.totalorder %s48, 1
      %p470 = scmp.ne.s32.totalorder %s465, %s467
      %p471 = scmp.eq.s32.totalorder %s48, 0
      %p472 = por %p470, %p471
      %p473 = scmp.ne.s32.totalorder %s465, %s467
      %p474 = scmp.eq.s32.totalorder %s53, 1
      %p475 = por %p473, %p474
      %p476 = scmp.ne.s32.totalorder %s467, %s468
      %p477 = scmp.eq.s32.totalorder %s53, 0
      %p478 = por %p476, %p477
      %p479 = scmp.ne.s32.totalorder %s467, %s468
      %p480 = scmp.eq.s32.totalorder %s54, 1
      %p481 = por %p479, %p480
      %p483 = scmp.ne.s32.totalorder %s468, %s482
      %p484 = scmp.eq.s32.totalorder %s54, 0
      %p485 = por %p483, %p484
      %s487 = sadd.s32 %s486, 1
      %p490 = scmp.eq.s32.totalorder %s48, 1
      %p491 = scmp.ne.s32.totalorder %s486, %s488
      %p492 = scmp.eq.s32.totalorder %s48, 0
      %p493 = por %p491, %p492
      %p494 = scmp.ne.s32.totalorder %s486, %s488
      %p495 = scmp.eq.s32.totalorder %s53, 1
      %p496 = por %p494, %p495
      %p497 = scmp.ne.s32.totalorder %s488, %s489
      %p498 = scmp.eq.s32.totalorder %s53, 0
      %p499 = por %p497, %p498
      %p500 = scmp.ne.s32.totalorder %s488, %s489
      %p501 = scmp.eq.s32.totalorder %s54, 1
      %p502 = por %p500, %p501
      %p504 = scmp.ne.s32.totalorder %s489, %s503
      %p505 = scmp.eq.s32.totalorder %s54, 0
      %p506 = por %p504, %p505
      %s508 = sadd.s32 %s507, 1
      %p511 = scmp.eq.s32.totalorder %s48, 1
      %p512 = scmp.ne.s32.totalorder %s507, %s509
      %p513 = scmp.eq.s32.totalorder %s48, 0
      %p514 = por %p512, %p513
      %p515 = scmp.ne.s32.totalorder %s507, %s509
      %p516 = scmp.eq.s32.totalorder %s53, 1
      %p517 = por %p515, %p516
      %p518 = scmp.ne.s32.totalorder %s509, %s510
      %p519 = scmp.eq.s32.totalorder %s53, 0
      %p520 = por %p518, %p519
      %p521 = scmp.ne.s32.totalorder %s509, %s510
      %p522 = scmp.eq.s32.totalorder %s54, 1
      %p523 = por %p521, %p522
      %p525 = scmp.ne.s32.totalorder %s510, %s524
      %p526 = scmp.eq.s32.totalorder %s54, 0
      %p527 = por %p525, %p526
      %s529 = sadd.s32 %s528, 1
      %p532 = scmp.eq.s32.totalorder %s48, 1
      %p533 = scmp.ne.s32.totalorder %s528, %s530
      %p534 = scmp.eq.s32.totalorder %s48, 0
      %p535 = por %p533, %p534
      %p536 = scmp.ne.s32.totalorder %s528, %s530
      %p537 = scmp.eq.s32.totalorder %s53, 1
      %p538 = por %p536, %p537
      %p539 = scmp.ne.s32.totalorder %s530, %s531
      %p540 = scmp.eq.s32.totalorder %s53, 0
      %p541 = por %p539, %p540
      %p542 = scmp.ne.s32.totalorder %s530, %s531
      %p543 = scmp.eq.s32.totalorder %s54, 1
      %p544 = por %p542, %p543
      %p546 = scmp.ne.s32.totalorder %s531, %s545
      %p547 = scmp.eq.s32.totalorder %s54, 0
      %p548 = por %p546, %p547
      %s549 = ssub.s32 %s48, %s55
      %p550 = scmp.eq.s32.totalorder %s549, 0
      %s552 = sadd.s32 %s551, 1
      %s553 = scalar_select %p550, %s551, %s552
      %p556 = pneg %p550
      %p557 = scmp.eq.s32.totalorder %s48, 1
      %p558 = por %p556, %p557
      %p559 = scmp.ne.s32.totalorder %s551, %s554
      %p560 = scmp.eq.s32.totalorder %s48, 0
      %p561 = por %p559, %p560
      %p562 = scmp.ne.s32.totalorder %s551, %s554
      %p563 = scmp.eq.s32.totalorder %s53, 1
      %p564 = por %p562, %p563
      %p565 = scmp.ne.s32.totalorder %s554, %s555
      %p566 = scmp.eq.s32.totalorder %s53, 0
      %p567 = por %p565, %p566
      %p568 = scmp.ne.s32.totalorder %s554, %s555
      %p569 = scmp.eq.s32.totalorder %s54, 1
      %p570 = por %p568, %p569
      %p572 = scmp.ne.s32.totalorder %s555, %s571
      %p573 = scmp.eq.s32.totalorder %s54, 0
      %p574 = por %p572, %p573
      %p575 = scmp.le.s32.totalorder 1, %s48
      %p576 = scmp.lt.s32.totalorder %s48, 3
      %p577 = pnand %p575, %p576
      %p578 = pneg %p577
      // Predicated region
      $region9: #{decoder_layer.1} parent=5 // pred_check
        _
      $region10: #{decoder_layer.1} parent=5 // pred_check_branch
        %580 = sbr.rel (%p577) target = $region12
      $region11: #{decoder_layer.1} parent=5 // pred_region
        %s581 = ssub.s32 %s48, 1
        // Predicated region
        $region13: #{decoder_layer.1} parent=11 // pred_check
          %p582 = pneg %p121
        $region14: #{decoder_layer.1} parent=11 // pred_check_branch
          %584 = sbr.rel (%p582) target = $region16
        $region15: #{decoder_layer.1} parent=11 // pred_region
          %s586 = ssub.s32 128, 128
          %587 = vsyncadd [#allocation7], %s586
          %s589 = sshll.u32 [#allocation8], 4
          %s590 = int_to_ptr.vmem [resolvable:$true] %s589
          %592 = dma.hbm_to_vmem [thread:$0]  %s2, 128, %s590, [#allocation7]
        $region16: #{decoder_layer.1} parent=11 // pred_fallthru
          _
        // Predicated region
        $region17: #{decoder_layer.1} parent=11 // pred_check
          %p593 = pneg %p142
        $region18: #{decoder_layer.1} parent=11 // pred_check_branch
          %595 = sbr.rel (%p593) target = $region20
        $region19: #{decoder_layer.1} parent=11 // pred_region
          %s597 = ssub.s32 512, 512
          %598 = vsyncadd [#allocation10], %s597
          %s599 = sshll.u32 [#allocation9], 4
          %s600 = int_to_ptr.vmem [resolvable:$true] %s599
          %605 = dma.hbm_to_vmem [thread:$0]  %s3, 512, %s600, [#allocation10], 128, 128, 8
        $region20: #{decoder_layer.1} parent=11 // pred_fallthru
          _
        // Predicated region
        $region21: #{decoder_layer.1} parent=11 // pred_check
          %p606 = pneg %p163
        $region22: #{decoder_layer.1} parent=11 // pred_check_branch
          %608 = sbr.rel (%p606) target = $region24
        $region23: #{decoder_layer.1} parent=11 // pred_region
          %s610 = ssub.s32 512, 512
          %611 = vsyncadd [#allocation10], %s610
          %s612 = sshll.u32 [#allocation11], 4
          %s613 = int_to_ptr.vmem [resolvable:$true] %s612
          %618 = dma.hbm_to_vmem [thread:$0]  %s4, 512, %s613, [#allocation10], 128, 128, 8
        $region24: #{decoder_layer.1} parent=11 // pred_fallthru
          _
        // Predicated region
        $region25: #{decoder_layer.1} parent=11 // pred_check
          %p619 = pneg %p184
        $region26: #{decoder_layer.1} parent=11 // pred_check_branch
          %621 = sbr.rel (%p619) target = $region28
        $region27: #{decoder_layer.1} parent=11 // pred_region
          %s623 = ssub.s32 512, 512
          %624 = vsyncadd [#allocation13], %s623
          %s625 = sshll.u32 [#allocation12], 4
          %s626 = int_to_ptr.vmem [resolvable:$true] %s625
          %631 = dma.hbm_to_vmem [thread:$0]  %s5, 512, %s626, [#allocation13], 128, 128, 8
        $region28: #{decoder_layer.1} parent=11 // pred_fallthru
          _
        // Predicated region
        $region29: #{decoder_layer.1} parent=11 // pred_check
          %p632 = pneg %p205
        $region30: #{decoder_layer.1} parent=11 // pred_check_branch
          %634 = sbr.rel (%p632) target = $region32
        $region31: #{decoder_layer.1} parent=11 // pred_region
          %s636 = ssub.s32 512, 512
          %637 = vsyncadd [#allocation13], %s636
          %s638 = sshll.u32 [#allocation14], 4
          %s639 = int_to_ptr.vmem [resolvable:$true] %s638
          %644 = dma.hbm_to_vmem [thread:$0]  %s6, 512, %s639, [#allocation13], 128, 128, 8
        $region32: #{decoder_layer.1} parent=11 // pred_fallthru
          _
        // Predicated region
        $region33: #{decoder_layer.1} parent=11 // pred_check
          %p645 = pneg %p226
        $region34: #{decoder_layer.1} parent=11 // pred_check_branch
          %647 = sbr.rel (%p645) target = $region36
        $region35: #{decoder_layer.1} parent=11 // pred_region
          %s649 = ssub.s32 16, 16
          %650 = vsyncadd [#allocation16], %s649
          %s652 = sshll.u32 [#allocation15], 4
          %s653 = int_to_ptr.vmem [resolvable:$true] %s652
          %655 = dma.hbm_to_vmem [thread:$0]  %s7, 16, %s653, [#allocation16]
        $region36: #{decoder_layer.1} parent=11 // pred_fallthru
          _
        // Predicated region
        $region37: #{decoder_layer.1} parent=11 // pred_check
          %p656 = pneg %p247
        $region38: #{decoder_layer.1} parent=11 // pred_check_branch
          %658 = sbr.rel (%p656) target = $region40
        $region39: #{decoder_layer.1} parent=11 // pred_region
          %s660 = ssub.s32 16, 16
          %661 = vsyncadd [#allocation16], %s660
          %s663 = sshll.u32 [#allocation17], 4
          %s664 = int_to_ptr.vmem [resolvable:$true] %s663
          %666 = dma.hbm_to_vmem [thread:$0]  %s8, 16, %s664, [#allocation16]
        $region40: #{decoder_layer.1} parent=11 // pred_fallthru
          _
        // Predicated region
        $region41: #{decoder_layer.1} parent=11 // pred_check
          %p667 = pneg %p268
        $region42: #{decoder_layer.1} parent=11 // pred_check_branch
          %669 = sbr.rel (%p667) target = $region44
        $region43: #{decoder_layer.1} parent=11 // pred_region
          %s671 = ssub.s32 16, 16
          %672 = vsyncadd [#allocation19], %s671
          %s674 = sshll.u32 [#allocation18], 4
          %s675 = int_to_ptr.vmem [resolvable:$true] %s674
          %677 = dma.hbm_to_vmem [thread:$0]  %s9, 16, %s675, [#allocation19]
        $region44: #{decoder_layer.1} parent=11 // pred_fallthru
          _
        // Predicated region
        $region45: #{decoder_layer.1} parent=11 // pred_check
          %p678 = pneg %p289
        $region46: #{decoder_layer.1} parent=11 // pred_check_branch
          %680 = sbr.rel (%p678) target = $region48
        $region47: #{decoder_layer.1} parent=11 // pred_region
          %s682 = ssub.s32 512, 512
          %683 = vsyncadd [#allocation19], %s682
          %s684 = sshll.u32 [#allocation20], 4
          %s685 = int_to_ptr.vmem [resolvable:$true] %s684
          %690 = dma.hbm_to_vmem [thread:$0]  %s10, 512, %s685, [#allocation19], 128, 128, 8
        $region48: #{decoder_layer.1} parent=11 // pred_fallthru
          _
        // Predicated region
        $region49: #{decoder_layer.1} parent=11 // pred_check
          %p691 = pneg %p310
        $region50: #{decoder_layer.1} parent=11 // pred_check_branch
          %693 = sbr.rel (%p691) target = $region52
        $region51: #{decoder_layer.1} parent=11 // pred_region
          %s695 = ssub.s32 512, 512
          %696 = vsyncadd [#allocation22], %s695
          %s697 = sshll.u32 [#allocation21], 4
          %s698 = int_to_ptr.vmem [resolvable:$true] %s697
          %703 = dma.hbm_to_vmem [thread:$0]  %s11, 512, %s698, [#allocation22], 128, 128, 8
        $region52: #{decoder_layer.1} parent=11 // pred_fallthru
          _
        // Predicated region
        $region53: #{decoder_layer.1} parent=11 // pred_check
          %p704 = pneg %p331
        $region54: #{decoder_layer.1} parent=11 // pred_check_branch
          %706 = sbr.rel (%p704) target = $region56
        $region55: #{decoder_layer.1} parent=11 // pred_region
          %s708 = ssub.s32 512, 512
          %709 = vsyncadd [#allocation22], %s708
          %s710 = sshll.u32 [#allocation23], 4
          %s711 = int_to_ptr.vmem [resolvable:$true] %s710
          %716 = dma.hbm_to_vmem [thread:$0]  %s12, 512, %s711, [#allocation22], 128, 128, 8
        $region56: #{decoder_layer.1} parent=11 // pred_fallthru
          _
        // Predicated region
        $region57: #{decoder_layer.1} parent=11 // pred_check
          %p717 = pneg %p352
        $region58: #{decoder_layer.1} parent=11 // pred_check_branch
          %719 = sbr.rel (%p717) target = $region60
        $region59: #{decoder_layer.1} parent=11 // pred_region
          %s721 = ssub.s32 512, 512
          %722 = vsyncadd [#allocation25], %s721
          %s723 = sshll.u32 [#allocation24], 4
          %s724 = int_to_ptr.vmem [resolvable:$true] %s723
          %729 = dma.hbm_to_vmem [thread:$0]  %s13, 512, %s724, [#allocation25], 128, 128, 8
        $region60: #{decoder_layer.1} parent=11 // pred_fallthru
          _
        // Predicated region
        $region61: #{decoder_layer.1} parent=11 // pred_check
          %p730 = pneg %p373
        $region62: #{decoder_layer.1} parent=11 // pred_check_branch
          %732 = sbr.rel (%p730) target = $region64
        $region63: #{decoder_layer.1} parent=11 // pred_region
          %s734 = ssub.s32 16, 16
          %735 = vsyncadd [#allocation25], %s734
          %s737 = sshll.u32 [#allocation26], 4
          %s738 = int_to_ptr.vmem [resolvable:$true] %s737
          %740 = dma.hbm_to_vmem [thread:$0]  %s14, 16, %s738, [#allocation25]
        $region64: #{decoder_layer.1} parent=11 // pred_fallthru
          _
        // Predicated region
        $region65: #{decoder_layer.1} parent=11 // pred_check
          %p741 = pneg %p394
        $region66: #{decoder_layer.1} parent=11 // pred_check_branch
          %743 = sbr.rel (%p741) target = $region68
        $region67: #{decoder_layer.1} parent=11 // pred_region
          %s745 = ssub.s32 16, 16
          %746 = vsyncadd [#allocation28], %s745
          %s748 = sshll.u32 [#allocation27], 4
          %s749 = int_to_ptr.vmem [resolvable:$true] %s748
          %751 = dma.hbm_to_vmem [thread:$0]  %s15, 16, %s749, [#allocation28]
        $region68: #{decoder_layer.1} parent=11 // pred_fallthru
          _
        // Predicated region
        $region69: #{decoder_layer.1} parent=11 // pred_check
          %p752 = pneg %p415
        $region70: #{decoder_layer.1} parent=11 // pred_check_branch
          %754 = sbr.rel (%p752) target = $region72
        $region71: #{decoder_layer.1} parent=11 // pred_region
          %s756 = ssub.s32 16, 16
          %757 = vsyncadd [#allocation28], %s756
          %s759 = sshll.u32 [#allocation29], 4
          %s760 = int_to_ptr.vmem [resolvable:$true] %s759
          %762 = dma.hbm_to_vmem [thread:$0]  %s16, 16, %s760, [#allocation28]
        $region72: #{decoder_layer.1} parent=11 // pred_fallthru
          _
        // Predicated region
        $region73: #{decoder_layer.1} parent=11 // pred_check
          %p763 = pneg %p436
        $region74: #{decoder_layer.1} parent=11 // pred_check_branch
          %765 = sbr.rel (%p763) target = $region76
        $region75: #{decoder_layer.1} parent=11 // pred_region
          %s767 = ssub.s32 512, 512
          %768 = vsyncadd [#allocation31], %s767
          %s769 = sshll.u32 [#allocation30], 4
          %s770 = int_to_ptr.vmem [resolvable:$true] %s769
          %775 = dma.hbm_to_vmem [thread:$0]  %s17, 512, %s770, [#allocation31], 128, 128, 8
        $region76: #{decoder_layer.1} parent=11 // pred_fallthru
          _
        // Predicated region
        $region77: #{decoder_layer.1} parent=11 // pred_check
          %p776 = pneg %p457
        $region78: #{decoder_layer.1} parent=11 // pred_check_branch
          %778 = sbr.rel (%p776) target = $region80
        $region79: #{decoder_layer.1} parent=11 // pred_region
          %s780 = ssub.s32 16, 16
          %781 = vsyncadd [#allocation31], %s780
          %s783 = sshll.u32 [#allocation32], 4
          %s784 = int_to_ptr.vmem [resolvable:$true] %s783
          %786 = dma.hbm_to_vmem [thread:$0]  %s18, 16, %s784, [#allocation31]
        $region80: #{decoder_layer.1} parent=11 // pred_fallthru
          _
        // Predicated region
        $region81: #{decoder_layer.1} parent=11 // pred_check
          %p787 = pneg %p478
        $region82: #{decoder_layer.1} parent=11 // pred_check_branch
          %789 = sbr.rel (%p787) target = $region84
        $region83: #{decoder_layer.1} parent=11 // pred_region
          %s791 = ssub.s32 1024, 1024
          %792 = vsyncadd [#allocation34], %s791
          %s793 = sshll.u32 [#allocation33], 4
          %s794 = int_to_ptr.vmem [resolvable:$true] %s793
          %799 = dma.hbm_to_vmem [thread:$0]  %s19, 1024, %s794, [#allocation34], 128, 128, 8
        $region84: #{decoder_layer.1} parent=11 // pred_fallthru
          _
        // Predicated region
        $region85: #{decoder_layer.1} parent=11 // pred_check
          %p800 = pneg %p499
        $region86: #{decoder_layer.1} parent=11 // pred_check_branch
          %802 = sbr.rel (%p800) target = $region88
        $region87: #{decoder_layer.1} parent=11 // pred_region
          %s804 = ssub.s32 16, 16
          %805 = vsyncadd [#allocation34], %s804
          %s807 = sshll.u32 [#allocation35], 4
          %s808 = int_to_ptr.vmem [resolvable:$true] %s807
          %810 = dma.hbm_to_vmem [thread:$0]  %s20, 16, %s808, [#allocation34]
        $region88: #{decoder_layer.1} parent=11 // pred_fallthru
          _
        // Predicated region
        $region89: #{decoder_layer.1} parent=11 // pred_check
          %p811 = pneg %p520
        $region90: #{decoder_layer.1} parent=11 // pred_check_branch
          %813 = sbr.rel (%p811) target = $region92
        $region91: #{decoder_layer.1} parent=11 // pred_region
          %s815 = ssub.s32 16, 16
          %816 = vsyncadd [#allocation37], %s815
          %s818 = sshll.u32 [#allocation36], 4
          %s819 = int_to_ptr.vmem [resolvable:$true] %s818
          %821 = dma.hbm_to_vmem [thread:$0]  %s21, 16, %s819, [#allocation37]
        $region92: #{decoder_layer.1} parent=11 // pred_fallthru
          _
        // Predicated region
        $region93: #{decoder_layer.1} parent=11 // pred_check
          %p822 = pneg %p541
        $region94: #{decoder_layer.1} parent=11 // pred_check_branch
          %824 = sbr.rel (%p822) target = $region96
        $region95: #{decoder_layer.1} parent=11 // pred_region
          %s826 = ssub.s32 16, 16
          %827 = vsyncadd [#allocation37], %s826
          %s829 = sshll.u32 [#allocation38], 4
          %s830 = int_to_ptr.vmem [resolvable:$true] %s829
          %832 = dma.hbm_to_vmem [thread:$0]  %s22, 16, %s830, [#allocation37]
        $region96: #{decoder_layer.1} parent=11 // pred_fallthru
          _
      $region12: #{decoder_layer.1} parent=5 // pred_fallthru
        _
      %p833 = scmp.lt.s32.totalorder %s48, 2
      // Predicated region
      $region97: #{decoder_layer.1} parent=5 // pred_check
        %p834 = pneg %p833
      $region98: #{decoder_layer.1} parent=5 // pred_check_branch
        %836 = sbr.rel (%p834) target = $region100
      $region99: #{decoder_layer.1} parent=5 // pred_region
        // Predicated region
        $region101: #{decoder_layer.1} parent=99 // pred_check
          %p837 = pneg %p68
        $region102: #{decoder_layer.1} parent=99 // pred_check_branch
          %839 = sbr.rel (%p837) target = $region104
        $region103: #{decoder_layer.1} parent=99 // pred_region
          %s840 = sand.u32 %s58, 1
          %s841 = scalar_lea.sflag [#allocation4], %s840
          %s842 = sand.u32 %s58, 1
          %s843 = smul.addr %s842, 8
          %s844 = scalar_lea.vmem [#allocation3], %s843
          %s846 = ssub.s32 128, 128
          %847 = vsyncadd %s841, %s846
          %s848 = smul.addr %s48, 128
          %s849 = scalar_lea.hbm %s0, %s848
          %s851 = sshll.u32 %s844, 4
          %s852 = int_to_ptr.vmem [resolvable:$true] %s851
          %854 = dma.hbm_to_vmem [thread:$0]  %s849, 128, %s852, %s841
        $region104: #{decoder_layer.1} parent=99 // pred_fallthru
          _
        // Predicated region
        $region105: #{decoder_layer.1} parent=99 // pred_check
          %p855 = pneg %p94
        $region106: #{decoder_layer.1} parent=99 // pred_check_branch
          %857 = sbr.rel (%p855) target = $region108
        $region107: #{decoder_layer.1} parent=99 // pred_region
          %s858 = sand.u32 %s48, 1
          %s859 = scalar_lea.sflag [#allocation7], %s858
          %s860 = sand.u32 %s84, 1
          %s861 = smul.addr %s860, 16
          %s862 = scalar_lea.vmem [#allocation6], %s861
          %s864 = ssub.s32 256, 256
          %865 = vsyncadd %s859, %s864
          %s866 = smul.addr %s48, 2
          %s867 = smul.addr %s866, 128
          %s868 = scalar_lea.hbm %s1, %s867
          %s869 = sshll.u32 %s862, 4
          %s870 = int_to_ptr.vmem [resolvable:$true] %s869
          %875 = dma.hbm_to_vmem [thread:$0]  %s868, 256, %s870, %s859, 128, 128, 8
        $region108: #{decoder_layer.1} parent=99 // pred_fallthru
          _
      $region100: #{decoder_layer.1} parent=5 // pred_fallthru
        _
      %p876 = scmp.le.s32.totalorder 1, %s48
      %p877 = scmp.lt.s32.totalorder %s48, 3
      %p878 = pnand %p876, %p877
      %p879 = pneg %p878
      // Predicated region
      $region109: #{decoder_layer.1} parent=5 // pred_check
        _
      $region110: #{decoder_layer.1} parent=5 // pred_check_branch
        %881 = sbr.rel (%p878) target = $region112
      $region111: #{decoder_layer.1} parent=5 // pred_region
        %s882 = ssub.s32 %s48, 1
        %s883 = sand.u32 %s61, 1
        %s884 = scalar_lea.sflag [#allocation4], %s883
        %s885 = sand.u32 %s61, 1
        %s886 = smul.addr %s885, 8
        %s887 = scalar_lea.vmem [#allocation3], %s886
        // Predicated region
        $region113: #{decoder_layer.1} parent=111 // pred_check
          %p888 = pneg %p74
        $region114: #{decoder_layer.1} parent=111 // pred_check_branch
          %890 = sbr.rel (%p888) target = $region116
        $region115: #{decoder_layer.1} parent=111 // pred_region
          %891 = dma.done %s884, 128
        $region116: #{decoder_layer.1} parent=111 // pred_fallthru
          _
        %s892 = sand.u32 %s53, 1
        %s893 = scalar_lea.sflag [#allocation7], %s892
        %s894 = sand.u32 %s87, 1
        %s895 = smul.addr %s894, 16
        %s896 = scalar_lea.vmem [#allocation6], %s895
        // Predicated region
        $region117: #{decoder_layer.1} parent=111 // pred_check
          %p897 = pneg %p100
        $region118: #{decoder_layer.1} parent=111 // pred_check_branch
          %899 = sbr.rel (%p897) target = $region120
        $region119: #{decoder_layer.1} parent=111 // pred_region
          %900 = dma.done %s893, 256
        $region120: #{decoder_layer.1} parent=111 // pred_fallthru
          _
        // Predicated region
        $region121: #{decoder_layer.1} parent=111 // pred_check
          %p901 = pneg %p121
        $region122: #{decoder_layer.1} parent=111 // pred_check_branch
          %903 = sbr.rel (%p901) target = $region124
        $region123: #{decoder_layer.1} parent=111 // pred_region
          %904 = dma.done [#allocation7], 128
        $region124: #{decoder_layer.1} parent=111 // pred_fallthru
          _
        // Predicated region
        $region125: #{decoder_layer.1} parent=111 // pred_check
          %p905 = pneg %p142
        $region126: #{decoder_layer.1} parent=111 // pred_check_branch
          %907 = sbr.rel (%p905) target = $region128
        $region127: #{decoder_layer.1} parent=111 // pred_region
          %908 = dma.done [#allocation10], 512
        $region128: #{decoder_layer.1} parent=111 // pred_fallthru
          _
        // Predicated region
        $region129: #{decoder_layer.1} parent=111 // pred_check
          %p909 = pneg %p163
        $region130: #{decoder_layer.1} parent=111 // pred_check_branch
          %911 = sbr.rel (%p909) target = $region132
        $region131: #{decoder_layer.1} parent=111 // pred_region
          %912 = dma.done [#allocation10], 512
        $region132: #{decoder_layer.1} parent=111 // pred_fallthru
          _
        // Predicated region
        $region133: #{decoder_layer.1} parent=111 // pred_check
          %p913 = pneg %p184
        $region134: #{decoder_layer.1} parent=111 // pred_check_branch
          %915 = sbr.rel (%p913) target = $region136
        $region135: #{decoder_layer.1} parent=111 // pred_region
          %916 = dma.done [#allocation13], 512
        $region136: #{decoder_layer.1} parent=111 // pred_fallthru
          _
        // Predicated region
        $region137: #{decoder_layer.1} parent=111 // pred_check
          %p917 = pneg %p205
        $region138: #{decoder_layer.1} parent=111 // pred_check_branch
          %919 = sbr.rel (%p917) target = $region140
        $region139: #{decoder_layer.1} parent=111 // pred_region
          %920 = dma.done [#allocation13], 512
        $region140: #{decoder_layer.1} parent=111 // pred_fallthru
          _
        // Predicated region
        $region141: #{decoder_layer.1} parent=111 // pred_check
          %p921 = pneg %p226
        $region142: #{decoder_layer.1} parent=111 // pred_check_branch
          %923 = sbr.rel (%p921) target = $region144
        $region143: #{decoder_layer.1} parent=111 // pred_region
          %924 = dma.done [#allocation16], 16
        $region144: #{decoder_layer.1} parent=111 // pred_fallthru
          _
        // Predicated region
        $region145: #{decoder_layer.1} parent=111 // pred_check
          %p925 = pneg %p247
        $region146: #{decoder_layer.1} parent=111 // pred_check_branch
          %927 = sbr.rel (%p925) target = $region148
        $region147: #{decoder_layer.1} parent=111 // pred_region
          %928 = dma.done [#allocation16], 16
        $region148: #{decoder_layer.1} parent=111 // pred_fallthru
          _
        // Predicated region
        $region149: #{decoder_layer.1} parent=111 // pred_check
          %p929 = pneg %p268
        $region150: #{decoder_layer.1} parent=111 // pred_check_branch
          %931 = sbr.rel (%p929) target = $region152
        $region151: #{decoder_layer.1} parent=111 // pred_region
          %932 = dma.done [#allocation19], 16
        $region152: #{decoder_layer.1} parent=111 // pred_fallthru
          _
        // Predicated region
        $region153: #{decoder_layer.1} parent=111 // pred_check
          %p933 = pneg %p289
        $region154: #{decoder_layer.1} parent=111 // pred_check_branch
          %935 = sbr.rel (%p933) target = $region156
        $region155: #{decoder_layer.1} parent=111 // pred_region
          %936 = dma.done [#allocation19], 512
        $region156: #{decoder_layer.1} parent=111 // pred_fallthru
          _
        // Predicated region
        $region157: #{decoder_layer.1} parent=111 // pred_check
          %p937 = pneg %p310
        $region158: #{decoder_layer.1} parent=111 // pred_check_branch
          %939 = sbr.rel (%p937) target = $region160
        $region159: #{decoder_layer.1} parent=111 // pred_region
          %940 = dma.done [#allocation22], 512
        $region160: #{decoder_layer.1} parent=111 // pred_fallthru
          _
        // Predicated region
        $region161: #{decoder_layer.1} parent=111 // pred_check
          %p941 = pneg %p331
        $region162: #{decoder_layer.1} parent=111 // pred_check_branch
          %943 = sbr.rel (%p941) target = $region164
        $region163: #{decoder_layer.1} parent=111 // pred_region
          %944 = dma.done [#allocation22], 512
        $region164: #{decoder_layer.1} parent=111 // pred_fallthru
          _
        // Predicated region
        $region165: #{decoder_layer.1} parent=111 // pred_check
          %p945 = pneg %p352
        $region166: #{decoder_layer.1} parent=111 // pred_check_branch
          %947 = sbr.rel (%p945) target = $region168
        $region167: #{decoder_layer.1} parent=111 // pred_region
          %948 = dma.done [#allocation25], 512
        $region168: #{decoder_layer.1} parent=111 // pred_fallthru
          _
        // Predicated region
        $region169: #{decoder_layer.1} parent=111 // pred_check
          %p949 = pneg %p373
        $region170: #{decoder_layer.1} parent=111 // pred_check_branch
          %951 = sbr.rel (%p949) target = $region172
        $region171: #{decoder_layer.1} parent=111 // pred_region
          %952 = dma.done [#allocation25], 16
        $region172: #{decoder_layer.1} parent=111 // pred_fallthru
          _
        // Predicated region
        $region173: #{decoder_layer.1} parent=111 // pred_check
          %p953 = pneg %p394
        $region174: #{decoder_layer.1} parent=111 // pred_check_branch
          %955 = sbr.rel (%p953) target = $region176
        $region175: #{decoder_layer.1} parent=111 // pred_region
          %956 = dma.done [#allocation28], 16
        $region176: #{decoder_layer.1} parent=111 // pred_fallthru
          _
        // Predicated region
        $region177: #{decoder_layer.1} parent=111 // pred_check
          %p957 = pneg %p415
        $region178: #{decoder_layer.1} parent=111 // pred_check_branch
          %959 = sbr.rel (%p957) target = $region180
        $region179: #{decoder_layer.1} parent=111 // pred_region
          %960 = dma.done [#allocation28], 16
        $region180: #{decoder_layer.1} parent=111 // pred_fallthru
          _
        // Predicated region
        $region181: #{decoder_layer.1} parent=111 // pred_check
          %p961 = pneg %p436
        $region182: #{decoder_layer.1} parent=111 // pred_check_branch
          %963 = sbr.rel (%p961) target = $region184
        $region183: #{decoder_layer.1} parent=111 // pred_region
          %964 = dma.done [#allocation31], 512
        $region184: #{decoder_layer.1} parent=111 // pred_fallthru
          _
        // Predicated region
        $region185: #{decoder_layer.1} parent=111 // pred_check
          %p965 = pneg %p457
        $region186: #{decoder_layer.1} parent=111 // pred_check_branch
          %967 = sbr.rel (%p965) target = $region188
        $region187: #{decoder_layer.1} parent=111 // pred_region
          %968 = dma.done [#allocation31], 16
        $region188: #{decoder_layer.1} parent=111 // pred_fallthru
          _
        // Predicated region
        $region189: #{decoder_layer.1} parent=111 // pred_check
          %p969 = pneg %p478
        $region190: #{decoder_layer.1} parent=111 // pred_check_branch
          %971 = sbr.rel (%p969) target = $region192
        $region191: #{decoder_layer.1} parent=111 // pred_region
          %972 = dma.done [#allocation34], 1024
        $region192: #{decoder_layer.1} parent=111 // pred_fallthru
          _
        // Predicated region
        $region193: #{decoder_layer.1} parent=111 // pred_check
          %p973 = pneg %p499
        $region194: #{decoder_layer.1} parent=111 // pred_check_branch
          %975 = sbr.rel (%p973) target = $region196
        $region195: #{decoder_layer.1} parent=111 // pred_region
          %976 = dma.done [#allocation34], 16
        $region196: #{decoder_layer.1} parent=111 // pred_fallthru
          _
        // Predicated region
        $region197: #{decoder_layer.1} parent=111 // pred_check
          %p977 = pneg %p520
        $region198: #{decoder_layer.1} parent=111 // pred_check_branch
          %979 = sbr.rel (%p977) target = $region200
        $region199: #{decoder_layer.1} parent=111 // pred_region
          %980 = dma.done [#allocation37], 16
        $region200: #{decoder_layer.1} parent=111 // pred_fallthru
          _
        // Predicated region
        $region201: #{decoder_layer.1} parent=111 // pred_check
          %p981 = pneg %p541
        $region202: #{decoder_layer.1} parent=111 // pred_check_branch
          %983 = sbr.rel (%p981) target = $region204
        $region203: #{decoder_layer.1} parent=111 // pred_region
          %984 = dma.done [#allocation37], 16
        $region204: #{decoder_layer.1} parent=111 // pred_fallthru
          _
        %s985 = sand.u32 %s61, 1
        %s986 = scalar_lea.sflag [#allocation4], %s985
        %s987 = sand.u32 %s61, 1
        %s988 = smul.addr %s987, 8
        %s989 = scalar_lea.vmem [#allocation3], %s988
        %p990 = pneg %p74
        %p991 = pneg %p71
        %s992 = sand.u32 %s53, 1
        %s993 = scalar_lea.sflag [#allocation7], %s992
        %s994 = sand.u32 %s87, 1
        %s995 = smul.addr %s994, 16
        %s996 = scalar_lea.vmem [#allocation6], %s995
        %p997 = pneg %p100
        %p998 = pneg %p97
        %p999 = pneg %p121
        %p1000 = pneg %p118
        %p1001 = pneg %p142
        %p1002 = pneg %p139
        %p1003 = pneg %p163
        %p1004 = pneg %p160
        %p1005 = pneg %p184
        %p1006 = pneg %p181
        %p1007 = pneg %p205
        %p1008 = pneg %p202
        %p1009 = pneg %p226
        %p1010 = pneg %p223
        %p1011 = pneg %p247
        %p1012 = pneg %p244
        %p1013 = pneg %p268
        %p1014 = pneg %p265
        %p1015 = pneg %p289
        %p1016 = pneg %p286
        %p1017 = pneg %p310
        %p1018 = pneg %p307
        %p1019 = pneg %p331
        %p1020 = pneg %p328
        %p1021 = pneg %p352
        %p1022 = pneg %p349
        %p1023 = pneg %p373
        %p1024 = pneg %p370
        %p1025 = pneg %p394
        %p1026 = pneg %p391
        %p1027 = pneg %p415
        %p1028 = pneg %p412
        %p1029 = pneg %p436
        %p1030 = pneg %p433
        %p1031 = pneg %p457
        %p1032 = pneg %p454
        %p1033 = pneg %p478
        %p1034 = pneg %p475
        %p1035 = pneg %p499
        %p1036 = pneg %p496
        %p1037 = pneg %p520
        %p1038 = pneg %p517
        %p1039 = pneg %p541
        %p1040 = pneg %p538
        %p1041 = pneg %p567
        %p1042 = pneg %p564
        %s1043 = sand.u32 %s554, 1
        %s1044 = scalar_lea.sflag [#allocation5], %s1043
        %s1045 = sand.u32 %s554, 1
        %s1046 = smul.addr %s1045, 8
        %s1047 = scalar_lea.vmem [#allocation39], %s1046
        %v1048 = vld [vmem:[%s887] sm:$0xff]
        %v1049 = vld [vmem:[#allocation8] sm:$0xff]
        %v1050 = vld [vmem:[#allocation9] sm:$0xff]
        %v1051 = vld [vmem:[#allocation9 + $0x8] sm:$0xff]
        %v1052 = vld [vmem:[#allocation9 + $0x10] sm:$0xff]
        %v1053 = vld [vmem:[#allocation9 + $0x18] sm:$0xff]
        %v1054 = vld [vmem:[#allocation11] sm:$0xff]
        %v1055 = vld [vmem:[#allocation11 + $0x8] sm:$0xff]
        %v1056 = vld [vmem:[#allocation11 + $0x10] sm:$0xff]
        %v1057 = vld [vmem:[#allocation11 + $0x18] sm:$0xff]
        %v1058 = vld [vmem:[#allocation12] sm:$0xff]
        %v1059 = vld [vmem:[#allocation12 + $0x8] sm:$0xff]
        %v1060 = vld [vmem:[#allocation12 + $0x10] sm:$0xff]
        %v1061 = vld [vmem:[#allocation12 + $0x18] sm:$0xff]
        %vm1062 = vcmask 261120
        %v1064 = vsel %vm1062, %v1048, 0
        %1066 = vmatprep.subr.mxu0 0.0
        %1067 = vmatpush1.msra.mxu0 %v1050
        %1068 = vmatprep.subr.mxu0 0.0
        %1069 = vmatpush1.msra.mxu0 %v1051
        %1070 = vmatprep.subr.mxu0 0.0
        %1071 = vmatpush1.msra.mxu0 %v1052
        %1072 = vmatprep.subr.mxu0 0.0
        %1073 = vmatpush1.msra.mxu0 %v1053
        %1074 = vmatprep.subr.mxu0 0.0
        %1075 = vmatpush1.msra.mxu0 0.0
        %1076 = vmatprep.subr.mxu0 0.0
        %1077 = vmatpush1.msra.mxu0 0.0
        %1078 = vmatprep.subr.mxu0 0.0
        %1079 = vmatpush1.msra.mxu0 0.0
        %1080 = vmatprep.subr.mxu0 0.0
        %1081 = vmatpush1.msra.mxu0 0.0
        %1082 = vmatprep.subr.mxu0 0.0
        %1083 = vmatpush1.msra.mxu0 0.0
        %1084 = vmatprep.subr.mxu0 0.0
        %1085 = vmatpush1.msra.mxu0 0.0
        %1086 = vmatprep.subr.mxu0 0.0
        %1087 = vmatpush1.msra.mxu0 0.0
        %1088 = vmatprep.subr.mxu0 0.0
        %1089 = vmatpush1.msra.mxu0 0.0
        %1090 = vmatprep.subr.mxu0 0.0
        %1091 = vmatpush1.msra.mxu0 0.0
        %1092 = vmatprep.subr.mxu0 0.0
        %1093 = vmatpush1.msra.mxu0 0.0
        %1094 = vmatprep.subr.mxu0 0.0
        %1095 = vmatpush1.msra.mxu0 0.0
        %1096 = vmatprep.subr.mxu0 0.0
        %1097 = vmatpush1.msra.mxu0 0.0
        %1098 = vmatprep.subr.mxu0 0.0
        %1099 = vmatpush1.msra.mxu0 0.0
        %1100 = vmatprep.subr.mxu0 0.0
        %1101 = vmatpush1.msra.mxu0 0.0
        %1102 = vmatprep.subr.mxu0 0.0
        %1103 = vmatpush1.msra.mxu0 0.0
        %1104 = vmatprep.subr.mxu0 0.0
        %1105 = vmatpush1.msra.mxu0 0.0
        %1106 = vmatprep.subr.mxu0 0.0
        %1107 = vmatpush1.msra.mxu0 0.0
        %1108 = vmatprep.subr.mxu0 0.0
        %1109 = vmatpush1.msra.mxu0 0.0
        %1110 = vmatprep.subr.mxu0 0.0
        %1111 = vmatpush1.msra.mxu0 0.0
        %1112 = vmatprep.subr.mxu0 0.0
        %1113 = vmatpush1.msra.mxu0 0.0
        %1114 = vmatprep.subr.mxu0 0.0
        %1115 = vmatpush1.msra.mxu0 0.0
        %1116 = vmatprep.subr.mxu0 0.0
        %1117 = vmatpush1.msra.mxu0 0.0
        %1118 = vmatprep.subr.mxu0 0.0
        %1119 = vmatpush1.msra.mxu0 0.0
        %1120 = vmatprep.subr.mxu0 0.0
        %1121 = vmatpush1.msra.mxu0 0.0
        %1122 = vmatprep.subr.mxu0 0.0
        %1123 = vmatpush1.msra.mxu0 0.0
        %1124 = vmatprep.subr.mxu0 0.0
        %1125 = vmatpush1.msra.mxu0 0.0
        %1126 = vmatprep.subr.mxu0 0.0
        %1127 = vmatpush1.msra.mxu0 0.0
        %1128 = vmatprep.subr.mxu0 0.0
        %1129 = vmatpush1.msra.mxu0 0.0
        %1130 = vmatprep.mubr.f32.mxu0 0.0
        %1131 = vmatmul.mubr.f32.gmra.mrb[0].mxu0 %v1064
        %v1132 = vpop.f32.mrb[0].mxu0
        %v1133 = vadd.f32 0.0, %v1132
        %v1134 = vpop.f32.mrb[0].mxu0
        %1135 = vdwg.mxu0
        %1136 = vmatprep.subr.mxu0 0.0
        %1137 = vmatpush1.msra.mxu0 %v1054
        %1138 = vmatprep.subr.mxu0 0.0
        %1139 = vmatpush1.msra.mxu0 %v1055
        %1140 = vmatprep.subr.mxu0 0.0
        %1141 = vmatpush1.msra.mxu0 %v1056
        %1142 = vmatprep.subr.mxu0 0.0
        %1143 = vmatpush1.msra.mxu0 %v1057
        %1144 = vmatprep.subr.mxu0 0.0
        %1145 = vmatpush1.msra.mxu0 0.0
        %1146 = vmatprep.subr.mxu0 0.0
        %1147 = vmatpush1.msra.mxu0 0.0
        %1148 = vmatprep.subr.mxu0 0.0
        %1149 = vmatpush1.msra.mxu0 0.0
        %1150 = vmatprep.subr.mxu0 0.0
        %1151 = vmatpush1.msra.mxu0 0.0
        %1152 = vmatprep.subr.mxu0 0.0
        %1153 = vmatpush1.msra.mxu0 0.0
        %1154 = vmatprep.subr.mxu0 0.0
        %1155 = vmatpush1.msra.mxu0 0.0
        %1156 = vmatprep.subr.mxu0 0.0
        %1157 = vmatpush1.msra.mxu0 0.0
        %1158 = vmatprep.subr.mxu0 0.0
        %1159 = vmatpush1.msra.mxu0 0.0
        %1160 = vmatprep.subr.mxu0 0.0
        %1161 = vmatpush1.msra.mxu0 0.0
        %1162 = vmatprep.subr.mxu0 0.0
        %1163 = vmatpush1.msra.mxu0 0.0
        %1164 = vmatprep.subr.mxu0 0.0
        %1165 = vmatpush1.msra.mxu0 0.0
        %1166 = vmatprep.subr.mxu0 0.0
        %1167 = vmatpush1.msra.mxu0 0.0
        %1168 = vmatprep.subr.mxu0 0.0
        %1169 = vmatpush1.msra.mxu0 0.0
        %1170 = vmatprep.subr.mxu0 0.0
        %1171 = vmatpush1.msra.mxu0 0.0
        %1172 = vmatprep.subr.mxu0 0.0
        %1173 = vmatpush1.msra.mxu0 0.0
        %1174 = vmatprep.subr.mxu0 0.0
        %1175 = vmatpush1.msra.mxu0 0.0
        %1176 = vmatprep.subr.mxu0 0.0
        %1177 = vmatpush1.msra.mxu0 0.0
        %1178 = vmatprep.subr.mxu0 0.0
        %1179 = vmatpush1.msra.mxu0 0.0
        %1180 = vmatprep.subr.mxu0 0.0
        %1181 = vmatpush1.msra.mxu0 0.0
        %1182 = vmatprep.subr.mxu0 0.0
        %1183 = vmatpush1.msra.mxu0 0.0
        %1184 = vmatprep.subr.mxu0 0.0
        %1185 = vmatpush1.msra.mxu0 0.0
        %1186 = vmatprep.subr.mxu0 0.0
        %1187 = vmatpush1.msra.mxu0 0.0
        %1188 = vmatprep.subr.mxu0 0.0
        %1189 = vmatpush1.msra.mxu0 0.0
        %1190 = vmatprep.subr.mxu0 0.0
        %1191 = vmatpush1.msra.mxu0 0.0
        %1192 = vmatprep.subr.mxu0 0.0
        %1193 = vmatpush1.msra.mxu0 0.0
        %1194 = vmatprep.subr.mxu0 0.0
        %1195 = vmatpush1.msra.mxu0 0.0
        %1196 = vmatprep.subr.mxu0 0.0
        %1197 = vmatpush1.msra.mxu0 0.0
        %1198 = vmatprep.subr.mxu0 0.0
        %1199 = vmatpush1.msra.mxu0 0.0
        %1200 = vmatprep.mubr.f32.mxu0 0.0
        %1201 = vmatmul.mubr.f32.gmra.mrb[0].mxu0 %v1064
        %v1202 = vpop.f32.mrb[0].mxu0
        %v1203 = vadd.f32 0.0, %v1202
        %v1204 = vpop.f32.mrb[0].mxu0
        %1205 = vdwg.mxu0
        %1206 = vmatprep.subr.mxu0 0.0
        %1207 = vmatpush1.msra.mxu0 %v1058
        %1208 = vmatprep.subr.mxu0 0.0
        %1209 = vmatpush1.msra.mxu0 %v1059
        %1210 = vmatprep.subr.mxu0 0.0
        %1211 = vmatpush1.msra.mxu0 %v1060
        %1212 = vmatprep.subr.mxu0 0.0
        %1213 = vmatpush1.msra.mxu0 %v1061
        %1214 = vmatprep.subr.mxu0 0.0
        %1215 = vmatpush1.msra.mxu0 0.0
        %1216 = vmatprep.subr.mxu0 0.0
        %1217 = vmatpush1.msra.mxu0 0.0
        %1218 = vmatprep.subr.mxu0 0.0
        %1219 = vmatpush1.msra.mxu0 0.0
        %1220 = vmatprep.subr.mxu0 0.0
        %1221 = vmatpush1.msra.mxu0 0.0
        %1222 = vmatprep.subr.mxu0 0.0
        %1223 = vmatpush1.msra.mxu0 0.0
        %1224 = vmatprep.subr.mxu0 0.0
        %1225 = vmatpush1.msra.mxu0 0.0
        %1226 = vmatprep.subr.mxu0 0.0
        %1227 = vmatpush1.msra.mxu0 0.0
        %1228 = vmatprep.subr.mxu0 0.0
        %1229 = vmatpush1.msra.mxu0 0.0
        %1230 = vmatprep.subr.mxu0 0.0
        %1231 = vmatpush1.msra.mxu0 0.0
        %1232 = vmatprep.subr.mxu0 0.0
        %1233 = vmatpush1.msra.mxu0 0.0
        %1234 = vmatprep.subr.mxu0 0.0
        %1235 = vmatpush1.msra.mxu0 0.0
        %1236 = vmatprep.subr.mxu0 0.0
        %1237 = vmatpush1.msra.mxu0 0.0
        %1238 = vmatprep.subr.mxu0 0.0
        %1239 = vmatpush1.msra.mxu0 0.0
        %1240 = vmatprep.subr.mxu0 0.0
        %1241 = vmatpush1.msra.mxu0 0.0
        %1242 = vmatprep.subr.mxu0 0.0
        %1243 = vmatpush1.msra.mxu0 0.0
        %1244 = vmatprep.subr.mxu0 0.0
        %1245 = vmatpush1.msra.mxu0 0.0
        %1246 = vmatprep.subr.mxu0 0.0
        %1247 = vmatpush1.msra.mxu0 0.0
        %1248 = vmatprep.subr.mxu0 0.0
        %1249 = vmatpush1.msra.mxu0 0.0
        %1250 = vmatprep.subr.mxu0 0.0
        %1251 = vmatpush1.msra.mxu0 0.0
        %1252 = vmatprep.subr.mxu0 0.0
        %1253 = vmatpush1.msra.mxu0 0.0
        %1254 = vmatprep.subr.mxu0 0.0
        %1255 = vmatpush1.msra.mxu0 0.0
        %1256 = vmatprep.subr.mxu0 0.0
        %1257 = vmatpush1.msra.mxu0 0.0
        %1258 = vmatprep.subr.mxu0 0.0
        %1259 = vmatpush1.msra.mxu0 0.0
        %1260 = vmatprep.subr.mxu0 0.0
        %1261 = vmatpush1.msra.mxu0 0.0
        %1262 = vmatprep.subr.mxu0 0.0
        %1263 = vmatpush1.msra.mxu0 0.0
        %1264 = vmatprep.subr.mxu0 0.0
        %1265 = vmatpush1.msra.mxu0 0.0
        %1266 = vmatprep.subr.mxu0 0.0
        %1267 = vmatpush1.msra.mxu0 0.0
        %1268 = vmatprep.subr.mxu0 0.0
        %1269 = vmatpush1.msra.mxu0 0.0
        %1270 = vmatprep.mubr.f32.mxu0 0.0
        %1271 = vmatmul.mubr.f32.gmra.mrb[0].mxu0 %v1064
        %v1272 = vpop.f32.mrb[0].mxu0
        %v1273 = vadd.f32 0.0, %v1272
        %v1274 = vpop.f32.mrb[0].mxu0
        %1275 = vdwg.mxu0
        %v1276 = vmul.f32 %v1133, 0.35355338
        %vm1277 = vcmask 64512
        %v1279 = vsel %vm1277, %v1276, 0
        %v1282 = vsel %vm1277, %v1203, 0
        %1284 = vmatprep.subr.mxu0 0.0
        %1285 = vmatpush1.xpose.msra.mxu0 %v1282
        %1286 = vmatprep.subr.mxu0 0.0
        %1287 = vmatpush1.xpose.msra.mxu0 0.0
        %1288 = vmatprep.subr.mxu0 0.0
        %1289 = vmatpush1.xpose.msra.mxu0 0.0
        %1290 = vmatprep.subr.mxu0 0.0
        %1291 = vmatpush1.xpose.msra.mxu0 0.0
        %1292 = vmatprep.subr.mxu0 0.0
        %1293 = vmatpush1.xpose.msra.mxu0 0.0
        %1294 = vmatprep.subr.mxu0 0.0
        %1295 = vmatpush1.xpose.msra.mxu0 0.0
        %1296 = vmatprep.subr.mxu0 0.0
        %1297 = vmatpush1.xpose.msra.mxu0 0.0
        %1298 = vmatprep.subr.mxu0 0.0
        %1299 = vmatpush1.xpose.msra.mxu0 0.0
        %1300 = vmatprep.subr.mxu0 0.0
        %1301 = vmatpush1.xpose.msra.mxu0 0.0
        %1302 = vmatprep.subr.mxu0 0.0
        %1303 = vmatpush1.xpose.msra.mxu0 0.0
        %1304 = vmatprep.subr.mxu0 0.0
        %1305 = vmatpush1.xpose.msra.mxu0 0.0
        %1306 = vmatprep.subr.mxu0 0.0
        %1307 = vmatpush1.xpose.msra.mxu0 0.0
        %1308 = vmatprep.subr.mxu0 0.0
        %1309 = vmatpush1.xpose.msra.mxu0 0.0
        %1310 = vmatprep.subr.mxu0 0.0
        %1311 = vmatpush1.xpose.msra.mxu0 0.0
        %1312 = vmatprep.subr.mxu0 0.0
        %1313 = vmatpush1.xpose.msra.mxu0 0.0
        %1314 = vmatprep.subr.mxu0 0.0
        %1315 = vmatpush1.xpose.msra.mxu0 0.0
        %1316 = vmatprep.subr.mxu0 0.0
        %1317 = vmatpush1.xpose.msra.mxu0 0.0
        %1318 = vmatprep.subr.mxu0 0.0
        %1319 = vmatpush1.xpose.msra.mxu0 0.0
        %1320 = vmatprep.subr.mxu0 0.0
        %1321 = vmatpush1.xpose.msra.mxu0 0.0
        %1322 = vmatprep.subr.mxu0 0.0
        %1323 = vmatpush1.xpose.msra.mxu0 0.0
        %1324 = vmatprep.subr.mxu0 0.0
        %1325 = vmatpush1.xpose.msra.mxu0 0.0
        %1326 = vmatprep.subr.mxu0 0.0
        %1327 = vmatpush1.xpose.msra.mxu0 0.0
        %1328 = vmatprep.subr.mxu0 0.0
        %1329 = vmatpush1.xpose.msra.mxu0 0.0
        %1330 = vmatprep.subr.mxu0 0.0
        %1331 = vmatpush1.xpose.msra.mxu0 0.0
        %1332 = vmatprep.subr.mxu0 0.0
        %1333 = vmatpush1.xpose.msra.mxu0 0.0
        %1334 = vmatprep.subr.mxu0 0.0
        %1335 = vmatpush1.xpose.msra.mxu0 0.0
        %1336 = vmatprep.subr.mxu0 0.0
        %1337 = vmatpush1.xpose.msra.mxu0 0.0
        %1338 = vmatprep.subr.mxu0 0.0
        %1339 = vmatpush1.xpose.msra.mxu0 0.0
        %1340 = vmatprep.subr.mxu0 0.0
        %1341 = vmatpush1.xpose.msra.mxu0 0.0
        %1342 = vmatprep.subr.mxu0 0.0
        %1343 = vmatpush1.xpose.msra.mxu0 0.0
        %1344 = vmatprep.subr.mxu0 0.0
        %1345 = vmatpush1.xpose.msra.mxu0 0.0
        %1346 = vmatprep.subr.mxu0 0.0
        %1347 = vmatpush1.xpose.msra.mxu0 0.0
        %1348 = vmatprep.mubr.f32.mxu0 0.0
        %1349 = vmatmul.mubr.f32.gmra.mrb[0].mxu0 %v1279
        %v1350 = vpop.f32.mrb[0].mxu0
        %v1351 = vadd.f32 %v1049, %v1350
        %v1352 = vpop.f32.mrb[0].mxu0
        %1353 = vdwg.mxu0
        %v1354 = vsel %vm1277, %v1351, -inf
        %1355 = vmax.xlane.f32.xlu0 %v1354
        %v1356 = vpop.xlane.xlu0 %1355
        %v1357 = vsub.f32 %v1351, %v1356
        %v1358 = vmul.f32 %v1357, 1.442695
        %v1359 = vpow.pop %v1358
        %v1360 = vsel %vm1277, %v1359, 0.0
        %1361 = vadd.xlane.f32.xlu0 %v1360
        %v1362 = vpop.xlane.xlu0 %1361
        %v1363 = vrcp.pop %v1362
        %v1364 = vmul.f32 %v1359, %v1363
        %v1366 = vsel %vm1277, %v1364, 0
        %1368 = vmatprep.subr.mxu0 0.0
        %1369 = vmatpush1.msra.mxu0 %v1273
        %1370 = vmatprep.subr.mxu0 0.0
        %1371 = vmatpush1.msra.mxu0 0.0
        %1372 = vmatprep.subr.mxu0 0.0
        %1373 = vmatpush1.msra.mxu0 0.0
        %1374 = vmatprep.subr.mxu0 0.0
        %1375 = vmatpush1.msra.mxu0 0.0
        %1376 = vmatprep.subr.mxu0 0.0
        %1377 = vmatpush1.msra.mxu0 0.0
        %1378 = vmatprep.subr.mxu0 0.0
        %1379 = vmatpush1.msra.mxu0 0.0
        %1380 = vmatprep.subr.mxu0 0.0
        %1381 = vmatpush1.msra.mxu0 0.0
        %1382 = vmatprep.subr.mxu0 0.0
        %1383 = vmatpush1.msra.mxu0 0.0
        %1384 = vmatprep.subr.mxu0 0.0
        %1385 = vmatpush1.msra.mxu0 0.0
        %1386 = vmatprep.subr.mxu0 0.0
        %1387 = vmatpush1.msra.mxu0 0.0
        %1388 = vmatprep.subr.mxu0 0.0
        %1389 = vmatpush1.msra.mxu0 0.0
        %1390 = vmatprep.subr.mxu0 0.0
        %1391 = vmatpush1.msra.mxu0 0.0
        %1392 = vmatprep.subr.mxu0 0.0
        %1393 = vmatpush1.msra.mxu0 0.0
        %1394 = vmatprep.subr.mxu0 0.0
        %1395 = vmatpush1.msra.mxu0 0.0
        %1396 = vmatprep.subr.mxu0 0.0
        %1397 = vmatpush1.msra.mxu0 0.0
        %1398 = vmatprep.subr.mxu0 0.0
        %1399 = vmatpush1.msra.mxu0 0.0
        %1400 = vmatprep.subr.mxu0 0.0
        %1401 = vmatpush1.msra.mxu0 0.0
        %1402 = vmatprep.subr.mxu0 0.0
        %1403 = vmatpush1.msra.mxu0 0.0
        %1404 = vmatprep.subr.mxu0 0.0
        %1405 = vmatpush1.msra.mxu0 0.0
        %1406 = vmatprep.subr.mxu0 0.0
        %1407 = vmatpush1.msra.mxu0 0.0
        %1408 = vmatprep.subr.mxu0 0.0
        %1409 = vmatpush1.msra.mxu0 0.0
        %1410 = vmatprep.subr.mxu0 0.0
        %1411 = vmatpush1.msra.mxu0 0.0
        %1412 = vmatprep.subr.mxu0 0.0
        %1413 = vmatpush1.msra.mxu0 0.0
        %1414 = vmatprep.subr.mxu0 0.0
        %1415 = vmatpush1.msra.mxu0 0.0
        %1416 = vmatprep.subr.mxu0 0.0
        %1417 = vmatpush1.msra.mxu0 0.0
        %1418 = vmatprep.subr.mxu0 0.0
        %1419 = vmatpush1.msra.mxu0 0.0
        %1420 = vmatprep.subr.mxu0 0.0
        %1421 = vmatpush1.msra.mxu0 0.0
        %1422 = vmatprep.subr.mxu0 0.0
        %1423 = vmatpush1.msra.mxu0 0.0
        %1424 = vmatprep.subr.mxu0 0.0
        %1425 = vmatpush1.msra.mxu0 0.0
        %1426 = vmatprep.subr.mxu0 0.0
        %1427 = vmatpush1.msra.mxu0 0.0
        %1428 = vmatprep.subr.mxu0 0.0
        %1429 = vmatpush1.msra.mxu0 0.0
        %1430 = vmatprep.subr.mxu0 0.0
        %1431 = vmatpush1.msra.mxu0 0.0
        %1432 = vmatprep.mubr.f32.mxu0 0.0
        %1433 = vmatmul.mubr.f32.gmra.mrb[0].mxu0 %v1366
        %v1434 = vpop.f32.mrb[0].mxu0
        %v1435 = vadd.f32 0.0, %v1434
        %v1436 = vpop.f32.mrb[0].mxu0
        %1437 = vdwg.mxu0
        %vm1438 = vcmask 57344
        %1439 = vst.msk [vmem:[#allocation2] sm:$0x1] %vm1438, %v1435
        %1441 = vrot.lane.b32.xlu0 %v1435, 8
        %v1442 = vpop.permute.xlu0 %1441
        %vm1444 = vcmask 123969
        %1445 = vst.msk [vmem:[#allocation2 - $0x1] sm:$0x2] %vm1444, %v1442
        %1446 = vrot.lane.b32.xlu0 %v1435, 16
        %v1447 = vpop.permute.xlu0 %1446
        %vm1449 = vcmask 190594
        %1450 = vst.msk [vmem:[#allocation2 - $0x2] sm:$0x4] %vm1449, %v1447
        %1451 = vrot.lane.b32.xlu0 %v1435, 24
        %v1452 = vpop.permute.xlu0 %1451
        %vm1454 = vcmask 257219
        %1455 = vst.msk [vmem:[#allocation2 - $0x3] sm:$0x8] %vm1454, %v1452
        %vm1456 = vcmask 61444
        %1457 = vst.msk [vmem:[#allocation2 - $0x3] sm:$0x10] %vm1456, %v1435
        %vm1458 = vcmask 128069
        %1459 = vst.msk [vmem:[#allocation2 - $0x4] sm:$0x20] %vm1458, %v1442
        %vm1460 = vcmask 194694
        %1461 = vst.msk [vmem:[#allocation2 - $0x5] sm:$0x40] %vm1460, %v1447
        %vm1462 = vcmask 261319
        %1463 = vst.msk [vmem:[#allocation2 - $0x6] sm:$0x80] %vm1462, %v1452
        %1464 = vrot.lane.b32.xlu0 %v1276, 120
        %v1465 = vpop.permute.xlu0 %1464
        %1466 = vrot.lane.b32.xlu0 %v1203, 120
        %v1467 = vpop.permute.xlu0 %1466
        %v1468 = vsel %vm1277, %v1465, 0
        %v1470 = vsel %vm1277, %v1467, 0
        %1472 = vmatprep.subr.mxu0 0.0
        %1473 = vmatpush1.xpose.msra.mxu0 %v1470
        %1474 = vmatprep.subr.mxu0 0.0
        %1475 = vmatpush1.xpose.msra.mxu0 0.0
        %1476 = vmatprep.subr.mxu0 0.0
        %1477 = vmatpush1.xpose.msra.mxu0 0.0
        %1478 = vmatprep.subr.mxu0 0.0
        %1479 = vmatpush1.xpose.msra.mxu0 0.0
        %1480 = vmatprep.subr.mxu0 0.0
        %1481 = vmatpush1.xpose.msra.mxu0 0.0
        %1482 = vmatprep.subr.mxu0 0.0
        %1483 = vmatpush1.xpose.msra.mxu0 0.0
        %1484 = vmatprep.subr.mxu0 0.0
        %1485 = vmatpush1.xpose.msra.mxu0 0.0
        %1486 = vmatprep.subr.mxu0 0.0
        %1487 = vmatpush1.xpose.msra.mxu0 0.0
        %1488 = vmatprep.subr.mxu0 0.0
        %1489 = vmatpush1.xpose.msra.mxu0 0.0
        %1490 = vmatprep.subr.mxu0 0.0
        %1491 = vmatpush1.xpose.msra.mxu0 0.0
        %1492 = vmatprep.subr.mxu0 0.0
        %1493 = vmatpush1.xpose.msra.mxu0 0.0
        %1494 = vmatprep.subr.mxu0 0.0
        %1495 = vmatpush1.xpose.msra.mxu0 0.0
        %1496 = vmatprep.subr.mxu0 0.0
        %1497 = vmatpush1.xpose.msra.mxu0 0.0
        %1498 = vmatprep.subr.mxu0 0.0
        %1499 = vmatpush1.xpose.msra.mxu0 0.0
        %1500 = vmatprep.subr.mxu0 0.0
        %1501 = vmatpush1.xpose.msra.mxu0 0.0
        %1502 = vmatprep.subr.mxu0 0.0
        %1503 = vmatpush1.xpose.msra.mxu0 0.0
        %1504 = vmatprep.subr.mxu0 0.0
        %1505 = vmatpush1.xpose.msra.mxu0 0.0
        %1506 = vmatprep.subr.mxu0 0.0
        %1507 = vmatpush1.xpose.msra.mxu0 0.0
        %1508 = vmatprep.subr.mxu0 0.0
        %1509 = vmatpush1.xpose.msra.mxu0 0.0
        %1510 = vmatprep.subr.mxu0 0.0
        %1511 = vmatpush1.xpose.msra.mxu0 0.0
        %1512 = vmatprep.subr.mxu0 0.0
        %1513 = vmatpush1.xpose.msra.mxu0 0.0
        %1514 = vmatprep.subr.mxu0 0.0
        %1515 = vmatpush1.xpose.msra.mxu0 0.0
        %1516 = vmatprep.subr.mxu0 0.0
        %1517 = vmatpush1.xpose.msra.mxu0 0.0
        %1518 = vmatprep.subr.mxu0 0.0
        %1519 = vmatpush1.xpose.msra.mxu0 0.0
        %1520 = vmatprep.subr.mxu0 0.0
        %1521 = vmatpush1.xpose.msra.mxu0 0.0
        %1522 = vmatprep.subr.mxu0 0.0
        %1523 = vmatpush1.xpose.msra.mxu0 0.0
        %1524 = vmatprep.subr.mxu0 0.0
        %1525 = vmatpush1.xpose.msra.mxu0 0.0
        %1526 = vmatprep.subr.mxu0 0.0
        %1527 = vmatpush1.xpose.msra.mxu0 0.0
        %1528 = vmatprep.subr.mxu0 0.0
        %1529 = vmatpush1.xpose.msra.mxu0 0.0
        %1530 = vmatprep.subr.mxu0 0.0
        %1531 = vmatpush1.xpose.msra.mxu0 0.0
        %1532 = vmatprep.subr.mxu0 0.0
        %1533 = vmatpush1.xpose.msra.mxu0 0.0
        %1534 = vmatprep.subr.mxu0 0.0
        %1535 = vmatpush1.xpose.msra.mxu0 0.0
        %1536 = vmatprep.mubr.f32.mxu0 0.0
        %1537 = vmatmul.mubr.f32.gmra.mrb[0].mxu0 %v1468
        %v1538 = vpop.f32.mrb[0].mxu0
        %v1539 = vadd.f32 %v1049, %v1538
        %v1540 = vpop.f32.mrb[0].mxu0
        %1541 = vdwg.mxu0
        %v1542 = vsel %vm1277, %v1539, -inf
        %1543 = vmax.xlane.f32.xlu0 %v1542
        %v1544 = vpop.xlane.xlu0 %1543
        %v1545 = vsub.f32 %v1539, %v1544
        %v1546 = vmul.f32 %v1545, 1.442695
        %v1547 = vpow.pop %v1546
        %v1548 = vsel %vm1277, %v1547, 0.0
        %1549 = vadd.xlane.f32.xlu0 %v1548
        %v1550 = vpop.xlane.xlu0 %1549
        %v1551 = vrcp.pop %v1550
        %v1552 = vmul.f32 %v1547, %v1551
        %1554 = vrot.lane.b32.xlu0 %v1273, 120
        %v1555 = vpop.permute.xlu0 %1554
        %v1558 = vsel %vm1277, %v1552, 0
        %1560 = vmatprep.subr.mxu0 0.0
        %1561 = vmatpush1.msra.mxu0 %v1555
        %1562 = vmatprep.subr.mxu0 0.0
        %1563 = vmatpush1.msra.mxu0 0.0
        %1564 = vmatprep.subr.mxu0 0.0
        %1565 = vmatpush1.msra.mxu0 0.0
        %1566 = vmatprep.subr.mxu0 0.0
        %1567 = vmatpush1.msra.mxu0 0.0
        %1568 = vmatprep.subr.mxu0 0.0
        %1569 = vmatpush1.msra.mxu0 0.0
        %1570 = vmatprep.subr.mxu0 0.0
        %1571 = vmatpush1.msra.mxu0 0.0
        %1572 = vmatprep.subr.mxu0 0.0
        %1573 = vmatpush1.msra.mxu0 0.0
        %1574 = vmatprep.subr.mxu0 0.0
        %1575 = vmatpush1.msra.mxu0 0.0
        %1576 = vmatprep.subr.mxu0 0.0
        %1577 = vmatpush1.msra.mxu0 0.0
        %1578 = vmatprep.subr.mxu0 0.0
        %1579 = vmatpush1.msra.mxu0 0.0
        %1580 = vmatprep.subr.mxu0 0.0
        %1581 = vmatpush1.msra.mxu0 0.0
        %1582 = vmatprep.subr.mxu0 0.0
        %1583 = vmatpush1.msra.mxu0 0.0
        %1584 = vmatprep.subr.mxu0 0.0
        %1585 = vmatpush1.msra.mxu0 0.0
        %1586 = vmatprep.subr.mxu0 0.0
        %1587 = vmatpush1.msra.mxu0 0.0
        %1588 = vmatprep.subr.mxu0 0.0
        %1589 = vmatpush1.msra.mxu0 0.0
        %1590 = vmatprep.subr.mxu0 0.0
        %1591 = vmatpush1.msra.mxu0 0.0
        %1592 = vmatprep.subr.mxu0 0.0
        %1593 = vmatpush1.msra.mxu0 0.0
        %1594 = vmatprep.subr.mxu0 0.0
        %1595 = vmatpush1.msra.mxu0 0.0
        %1596 = vmatprep.subr.mxu0 0.0
        %1597 = vmatpush1.msra.mxu0 0.0
        %1598 = vmatprep.subr.mxu0 0.0
        %1599 = vmatpush1.msra.mxu0 0.0
        %1600 = vmatprep.subr.mxu0 0.0
        %1601 = vmatpush1.msra.mxu0 0.0
        %1602 = vmatprep.subr.mxu0 0.0
        %1603 = vmatpush1.msra.mxu0 0.0
        %1604 = vmatprep.subr.mxu0 0.0
        %1605 = vmatpush1.msra.mxu0 0.0
        %1606 = vmatprep.subr.mxu0 0.0
        %1607 = vmatpush1.msra.mxu0 0.0
        %1608 = vmatprep.subr.mxu0 0.0
        %1609 = vmatpush1.msra.mxu0 0.0
        %1610 = vmatprep.subr.mxu0 0.0
        %1611 = vmatpush1.msra.mxu0 0.0
        %1612 = vmatprep.subr.mxu0 0.0
        %1613 = vmatpush1.msra.mxu0 0.0
        %1614 = vmatprep.subr.mxu0 0.0
        %1615 = vmatpush1.msra.mxu0 0.0
        %1616 = vmatprep.subr.mxu0 0.0
        %1617 = vmatpush1.msra.mxu0 0.0
        %1618 = vmatprep.subr.mxu0 0.0
        %1619 = vmatpush1.msra.mxu0 0.0
        %1620 = vmatprep.subr.mxu0 0.0
        %1621 = vmatpush1.msra.mxu0 0.0
        %1622 = vmatprep.subr.mxu0 0.0
        %1623 = vmatpush1.msra.mxu0 0.0
        %1624 = vmatprep.mubr.f32.mxu0 0.0
        %1625 = vmatmul.mubr.f32.gmra.mrb[0].mxu0 %v1558
        %v1626 = vpop.f32.mrb[0].mxu0
        %v1627 = vadd.f32 0.0, %v1626
        %v1628 = vpop.f32.mrb[0].mxu0
        %1629 = vdwg.mxu0
        %1630 = vst.msk [vmem:[#allocation2 + $0x2] sm:$0x1] %vm1438, %v1627
        %1632 = vrot.lane.b32.xlu0 %v1627, 8
        %v1633 = vpop.permute.xlu0 %1632
        %1635 = vst.msk [vmem:[#allocation2 + $0x1] sm:$0x2] %vm1444, %v1633
        %1636 = vrot.lane.b32.xlu0 %v1627, 16
        %v1637 = vpop.permute.xlu0 %1636
        %1639 = vst.msk [vmem:[#allocation2] sm:$0x4] %vm1449, %v1637
        %1640 = vrot.lane.b32.xlu0 %v1627, 24
        %v1641 = vpop.permute.xlu0 %1640
        %1643 = vst.msk [vmem:[#allocation2 - $0x1] sm:$0x8] %vm1454, %v1641
        %1644 = vst.msk [vmem:[#allocation2 - $0x1] sm:$0x10] %vm1456, %v1627
        %1645 = vst.msk [vmem:[#allocation2 - $0x2] sm:$0x20] %vm1458, %v1633
        %1646 = vst.msk [vmem:[#allocation2 - $0x3] sm:$0x40] %vm1460, %v1637
        %1647 = vst.msk [vmem:[#allocation2 - $0x4] sm:$0x80] %vm1462, %v1641
        %1648 = vrot.lane.b32.xlu0 %v1276, 112
        %v1649 = vpop.permute.xlu0 %1648
        %1650 = vrot.lane.b32.xlu0 %v1203, 112
        %v1651 = vpop.permute.xlu0 %1650
        %v1652 = vsel %vm1277, %v1649, 0
        %v1654 = vsel %vm1277, %v1651, 0
        %1656 = vmatprep.subr.mxu0 0.0
        %1657 = vmatpush1.xpose.msra.mxu0 %v1654
        %1658 = vmatprep.subr.mxu0 0.0
        %1659 = vmatpush1.xpose.msra.mxu0 0.0
        %1660 = vmatprep.subr.mxu0 0.0
        %1661 = vmatpush1.xpose.msra.mxu0 0.0
        %1662 = vmatprep.subr.mxu0 0.0
        %1663 = vmatpush1.xpose.msra.mxu0 0.0
        %1664 = vmatprep.subr.mxu0 0.0
        %1665 = vmatpush1.xpose.msra.mxu0 0.0
        %1666 = vmatprep.subr.mxu0 0.0
        %1667 = vmatpush1.xpose.msra.mxu0 0.0
        %1668 = vmatprep.subr.mxu0 0.0
        %1669 = vmatpush1.xpose.msra.mxu0 0.0
        %1670 = vmatprep.subr.mxu0 0.0
        %1671 = vmatpush1.xpose.msra.mxu0 0.0
        %1672 = vmatprep.subr.mxu0 0.0
        %1673 = vmatpush1.xpose.msra.mxu0 0.0
        %1674 = vmatprep.subr.mxu0 0.0
        %1675 = vmatpush1.xpose.msra.mxu0 0.0
        %1676 = vmatprep.subr.mxu0 0.0
        %1677 = vmatpush1.xpose.msra.mxu0 0.0
        %1678 = vmatprep.subr.mxu0 0.0
        %1679 = vmatpush1.xpose.msra.mxu0 0.0
        %1680 = vmatprep.subr.mxu0 0.0
        %1681 = vmatpush1.xpose.msra.mxu0 0.0
        %1682 = vmatprep.subr.mxu0 0.0
        %1683 = vmatpush1.xpose.msra.mxu0 0.0
        %1684 = vmatprep.subr.mxu0 0.0
        %1685 = vmatpush1.xpose.msra.mxu0 0.0
        %1686 = vmatprep.subr.mxu0 0.0
        %1687 = vmatpush1.xpose.msra.mxu0 0.0
        %1688 = vmatprep.subr.mxu0 0.0
        %1689 = vmatpush1.xpose.msra.mxu0 0.0
        %1690 = vmatprep.subr.mxu0 0.0
        %1691 = vmatpush1.xpose.msra.mxu0 0.0
        %1692 = vmatprep.subr.mxu0 0.0
        %1693 = vmatpush1.xpose.msra.mxu0 0.0
        %1694 = vmatprep.subr.mxu0 0.0
        %1695 = vmatpush1.xpose.msra.mxu0 0.0
        %1696 = vmatprep.subr.mxu0 0.0
        %1697 = vmatpush1.xpose.msra.mxu0 0.0
        %1698 = vmatprep.subr.mxu0 0.0
        %1699 = vmatpush1.xpose.msra.mxu0 0.0
        %1700 = vmatprep.subr.mxu0 0.0
        %1701 = vmatpush1.xpose.msra.mxu0 0.0
        %1702 = vmatprep.subr.mxu0 0.0
        %1703 = vmatpush1.xpose.msra.mxu0 0.0
        %1704 = vmatprep.subr.mxu0 0.0
        %1705 = vmatpush1.xpose.msra.mxu0 0.0
        %1706 = vmatprep.subr.mxu0 0.0
        %1707 = vmatpush1.xpose.msra.mxu0 0.0
        %1708 = vmatprep.subr.mxu0 0.0
        %1709 = vmatpush1.xpose.msra.mxu0 0.0
        %1710 = vmatprep.subr.mxu0 0.0
        %1711 = vmatpush1.xpose.msra.mxu0 0.0
        %1712 = vmatprep.subr.mxu0 0.0
        %1713 = vmatpush1.xpose.msra.mxu0 0.0
        %1714 = vmatprep.subr.mxu0 0.0
        %1715 = vmatpush1.xpose.msra.mxu0 0.0
        %1716 = vmatprep.subr.mxu0 0.0
        %1717 = vmatpush1.xpose.msra.mxu0 0.0
        %1718 = vmatprep.subr.mxu0 0.0
        %1719 = vmatpush1.xpose.msra.mxu0 0.0
        %1720 = vmatprep.mubr.f32.mxu0 0.0
        %1721 = vmatmul.mubr.f32.gmra.mrb[0].mxu0 %v1652
        %v1722 = vpop.f32.mrb[0].mxu0
        %v1723 = vadd.f32 %v1049, %v1722
        %v1724 = vpop.f32.mrb[0].mxu0
        %1725 = vdwg.mxu0
        %v1726 = vsel %vm1277, %v1723, -inf
        %1727 = vmax.xlane.f32.xlu0 %v1726
        %v1728 = vpop.xlane.xlu0 %1727
        %v1729 = vsub.f32 %v1723, %v1728
        %v1730 = vmul.f32 %v1729, 1.442695
        %v1731 = vpow.pop %v1730
        %v1732 = vsel %vm1277, %v1731, 0.0
        %1733 = vadd.xlane.f32.xlu0 %v1732
        %v1734 = vpop.xlane.xlu0 %1733
        %v1735 = vrcp.pop %v1734
        %v1736 = vmul.f32 %v1731, %v1735
        %1737 = vrot.lane.b32.xlu0 %v1273, 112
        %v1738 = vpop.permute.xlu0 %1737
        %v1741 = vsel %vm1277, %v1736, 0
        %1743 = vmatprep.subr.mxu0 0.0
        %1744 = vmatpush1.msra.mxu0 %v1738
        %1745 = vmatprep.subr.mxu0 0.0
        %1746 = vmatpush1.msra.mxu0 0.0
        %1747 = vmatprep.subr.mxu0 0.0
        %1748 = vmatpush1.msra.mxu0 0.0
        %1749 = vmatprep.subr.mxu0 0.0
        %1750 = vmatpush1.msra.mxu0 0.0
        %1751 = vmatprep.subr.mxu0 0.0
        %1752 = vmatpush1.msra.mxu0 0.0
        %1753 = vmatprep.subr.mxu0 0.0
        %1754 = vmatpush1.msra.mxu0 0.0
        %1755 = vmatprep.subr.mxu0 0.0
        %1756 = vmatpush1.msra.mxu0 0.0
        %1757 = vmatprep.subr.mxu0 0.0
        %1758 = vmatpush1.msra.mxu0 0.0
        %1759 = vmatprep.subr.mxu0 0.0
        %1760 = vmatpush1.msra.mxu0 0.0
        %1761 = vmatprep.subr.mxu0 0.0
        %1762 = vmatpush1.msra.mxu0 0.0
        %1763 = vmatprep.subr.mxu0 0.0
        %1764 = vmatpush1.msra.mxu0 0.0
        %1765 = vmatprep.subr.mxu0 0.0
        %1766 = vmatpush1.msra.mxu0 0.0
        %1767 = vmatprep.subr.mxu0 0.0
        %1768 = vmatpush1.msra.mxu0 0.0
        %1769 = vmatprep.subr.mxu0 0.0
        %1770 = vmatpush1.msra.mxu0 0.0
        %1771 = vmatprep.subr.mxu0 0.0
        %1772 = vmatpush1.msra.mxu0 0.0
        %1773 = vmatprep.subr.mxu0 0.0
        %1774 = vmatpush1.msra.mxu0 0.0
        %1775 = vmatprep.subr.mxu0 0.0
        %1776 = vmatpush1.msra.mxu0 0.0
        %1777 = vmatprep.subr.mxu0 0.0
        %1778 = vmatpush1.msra.mxu0 0.0
        %1779 = vmatprep.subr.mxu0 0.0
        %1780 = vmatpush1.msra.mxu0 0.0
        %1781 = vmatprep.subr.mxu0 0.0
        %1782 = vmatpush1.msra.mxu0 0.0
        %1783 = vmatprep.subr.mxu0 0.0
        %1784 = vmatpush1.msra.mxu0 0.0
        %1785 = vmatprep.subr.mxu0 0.0
        %1786 = vmatpush1.msra.mxu0 0.0
        %1787 = vmatprep.subr.mxu0 0.0
        %1788 = vmatpush1.msra.mxu0 0.0
        %1789 = vmatprep.subr.mxu0 0.0
        %1790 = vmatpush1.msra.mxu0 0.0
        %1791 = vmatprep.subr.mxu0 0.0
        %1792 = vmatpush1.msra.mxu0 0.0
        %1793 = vmatprep.subr.mxu0 0.0
        %1794 = vmatpush1.msra.mxu0 0.0
        %1795 = vmatprep.subr.mxu0 0.0
        %1796 = vmatpush1.msra.mxu0 0.0
        %1797 = vmatprep.subr.mxu0 0.0
        %1798 = vmatpush1.msra.mxu0 0.0
        %1799 = vmatprep.subr.mxu0 0.0
        %1800 = vmatpush1.msra.mxu0 0.0
        %1801 = vmatprep.subr.mxu0 0.0
        %1802 = vmatpush1.msra.mxu0 0.0
        %1803 = vmatprep.subr.mxu0 0.0
        %1804 = vmatpush1.msra.mxu0 0.0
        %1805 = vmatprep.subr.mxu0 0.0
        %1806 = vmatpush1.msra.mxu0 0.0
        %1807 = vmatprep.mubr.f32.mxu0 0.0
        %1808 = vmatmul.mubr.f32.gmra.mrb[0].mxu0 %v1741
        %v1809 = vpop.f32.mrb[0].mxu0
        %v1810 = vadd.f32 0.0, %v1809
        %v1811 = vpop.f32.mrb[0].mxu0
        %1812 = vdwg.mxu0
        %1813 = vst.msk [vmem:[#allocation2 + $0x4] sm:$0x1] %vm1438, %v1810
        %1815 = vrot.lane.b32.xlu0 %v1810, 8
        %v1816 = vpop.permute.xlu0 %1815
        %1818 = vst.msk [vmem:[#allocation2 + $0x3] sm:$0x2] %vm1444, %v1816
        %1819 = vrot.lane.b32.xlu0 %v1810, 16
        %v1820 = vpop.permute.xlu0 %1819
        %1822 = vst.msk [vmem:[#allocation2 + $0x2] sm:$0x4] %vm1449, %v1820
        %1823 = vrot.lane.b32.xlu0 %v1810, 24
        %v1824 = vpop.permute.xlu0 %1823
        %1826 = vst.msk [vmem:[#allocation2 + $0x1] sm:$0x8] %vm1454, %v1824
        %1827 = vst.msk [vmem:[#allocation2 + $0x1] sm:$0x10] %vm1456, %v1810
        %1828 = vst.msk [vmem:[#allocation2] sm:$0x20] %vm1458, %v1816
        %1829 = vst.msk [vmem:[#allocation2 - $0x1] sm:$0x40] %vm1460, %v1820
        %1830 = vst.msk [vmem:[#allocation2 - $0x2] sm:$0x80] %vm1462, %v1824
        %1831 = vrot.lane.b32.xlu0 %v1276, 104
        %v1832 = vpop.permute.xlu0 %1831
        %1833 = vrot.lane.b32.xlu0 %v1203, 104
        %v1834 = vpop.permute.xlu0 %1833
        %v1835 = vsel %vm1277, %v1832, 0
        %v1837 = vsel %vm1277, %v1834, 0
        %1839 = vmatprep.subr.mxu0 0.0
        %1840 = vmatpush1.xpose.msra.mxu0 %v1837
        %1841 = vmatprep.subr.mxu0 0.0
        %1842 = vmatpush1.xpose.msra.mxu0 0.0
        %1843 = vmatprep.subr.mxu0 0.0
        %1844 = vmatpush1.xpose.msra.mxu0 0.0
        %1845 = vmatprep.subr.mxu0 0.0
        %1846 = vmatpush1.xpose.msra.mxu0 0.0
        %1847 = vmatprep.subr.mxu0 0.0
        %1848 = vmatpush1.xpose.msra.mxu0 0.0
        %1849 = vmatprep.subr.mxu0 0.0
        %1850 = vmatpush1.xpose.msra.mxu0 0.0
        %1851 = vmatprep.subr.mxu0 0.0
        %1852 = vmatpush1.xpose.msra.mxu0 0.0
        %1853 = vmatprep.subr.mxu0 0.0
        %1854 = vmatpush1.xpose.msra.mxu0 0.0
        %1855 = vmatprep.subr.mxu0 0.0
        %1856 = vmatpush1.xpose.msra.mxu0 0.0
        %1857 = vmatprep.subr.mxu0 0.0
        %1858 = vmatpush1.xpose.msra.mxu0 0.0
        %1859 = vmatprep.subr.mxu0 0.0
        %1860 = vmatpush1.xpose.msra.mxu0 0.0
        %1861 = vmatprep.subr.mxu0 0.0
        %1862 = vmatpush1.xpose.msra.mxu0 0.0
        %1863 = vmatprep.subr.mxu0 0.0
        %1864 = vmatpush1.xpose.msra.mxu0 0.0
        %1865 = vmatprep.subr.mxu0 0.0
        %1866 = vmatpush1.xpose.msra.mxu0 0.0
        %1867 = vmatprep.subr.mxu0 0.0
        %1868 = vmatpush1.xpose.msra.mxu0 0.0
        %1869 = vmatprep.subr.mxu0 0.0
        %1870 = vmatpush1.xpose.msra.mxu0 0.0
        %1871 = vmatprep.subr.mxu0 0.0
        %1872 = vmatpush1.xpose.msra.mxu0 0.0
        %1873 = vmatprep.subr.mxu0 0.0
        %1874 = vmatpush1.xpose.msra.mxu0 0.0
        %1875 = vmatprep.subr.mxu0 0.0
        %1876 = vmatpush1.xpose.msra.mxu0 0.0
        %1877 = vmatprep.subr.mxu0 0.0
        %1878 = vmatpush1.xpose.msra.mxu0 0.0
        %1879 = vmatprep.subr.mxu0 0.0
        %1880 = vmatpush1.xpose.msra.mxu0 0.0
        %1881 = vmatprep.subr.mxu0 0.0
        %1882 = vmatpush1.xpose.msra.mxu0 0.0
        %1883 = vmatprep.subr.mxu0 0.0
        %1884 = vmatpush1.xpose.msra.mxu0 0.0
        %1885 = vmatprep.subr.mxu0 0.0
        %1886 = vmatpush1.xpose.msra.mxu0 0.0
        %1887 = vmatprep.subr.mxu0 0.0
        %1888 = vmatpush1.xpose.msra.mxu0 0.0
        %1889 = vmatprep.subr.mxu0 0.0
        %1890 = vmatpush1.xpose.msra.mxu0 0.0
        %1891 = vmatprep.subr.mxu0 0.0
        %1892 = vmatpush1.xpose.msra.mxu0 0.0
        %1893 = vmatprep.subr.mxu0 0.0
        %1894 = vmatpush1.xpose.msra.mxu0 0.0
        %1895 = vmatprep.subr.mxu0 0.0
        %1896 = vmatpush1.xpose.msra.mxu0 0.0
        %1897 = vmatprep.subr.mxu0 0.0
        %1898 = vmatpush1.xpose.msra.mxu0 0.0
        %1899 = vmatprep.subr.mxu0 0.0
        %1900 = vmatpush1.xpose.msra.mxu0 0.0
        %1901 = vmatprep.subr.mxu0 0.0
        %1902 = vmatpush1.xpose.msra.mxu0 0.0
        %1903 = vmatprep.mubr.f32.mxu0 0.0
        %1904 = vmatmul.mubr.f32.gmra.mrb[0].mxu0 %v1835
        %v1905 = vpop.f32.mrb[0].mxu0
        %v1906 = vadd.f32 %v1049, %v1905
        %v1907 = vpop.f32.mrb[0].mxu0
        %1908 = vdwg.mxu0
        %v1909 = vsel %vm1277, %v1906, -inf
        %1910 = vmax.xlane.f32.xlu0 %v1909
        %v1911 = vpop.xlane.xlu0 %1910
        %v1912 = vsub.f32 %v1906, %v1911
        %v1913 = vmul.f32 %v1912, 1.442695
        %v1914 = vpow.pop %v1913
        %v1915 = vsel %vm1277, %v1914, 0.0
        %1916 = vadd.xlane.f32.xlu0 %v1915
        %v1917 = vpop.xlane.xlu0 %1916
        %v1918 = vrcp.pop %v1917
        %v1919 = vmul.f32 %v1914, %v1918
        %1920 = vrot.lane.b32.xlu0 %v1273, 104
        %v1921 = vpop.permute.xlu0 %1920
        %v1924 = vsel %vm1277, %v1919, 0
        %1926 = vmatprep.subr.mxu0 0.0
        %1927 = vmatpush1.msra.mxu0 %v1921
        %1928 = vmatprep.subr.mxu0 0.0
        %1929 = vmatpush1.msra.mxu0 0.0
        %1930 = vmatprep.subr.mxu0 0.0
        %1931 = vmatpush1.msra.mxu0 0.0
        %1932 = vmatprep.subr.mxu0 0.0
        %1933 = vmatpush1.msra.mxu0 0.0
        %1934 = vmatprep.subr.mxu0 0.0
        %1935 = vmatpush1.msra.mxu0 0.0
        %1936 = vmatprep.subr.mxu0 0.0
        %1937 = vmatpush1.msra.mxu0 0.0
        %1938 = vmatprep.subr.mxu0 0.0
        %1939 = vmatpush1.msra.mxu0 0.0
        %1940 = vmatprep.subr.mxu0 0.0
        %1941 = vmatpush1.msra.mxu0 0.0
        %1942 = vmatprep.subr.mxu0 0.0
        %1943 = vmatpush1.msra.mxu0 0.0
        %1944 = vmatprep.subr.mxu0 0.0
        %1945 = vmatpush1.msra.mxu0 0.0
        %1946 = vmatprep.subr.mxu0 0.0
        %1947 = vmatpush1.msra.mxu0 0.0
        %1948 = vmatprep.subr.mxu0 0.0
        %1949 = vmatpush1.msra.mxu0 0.0
        %1950 = vmatprep.subr.mxu0 0.0
        %1951 = vmatpush1.msra.mxu0 0.0
        %1952 = vmatprep.subr.mxu0 0.0
        %1953 = vmatpush1.msra.mxu0 0.0
        %1954 = vmatprep.subr.mxu0 0.0
        %1955 = vmatpush1.msra.mxu0 0.0
        %1956 = vmatprep.subr.mxu0 0.0
        %1957 = vmatpush1.msra.mxu0 0.0
        %1958 = vmatprep.subr.mxu0 0.0
        %1959 = vmatpush1.msra.mxu0 0.0
        %1960 = vmatprep.subr.mxu0 0.0
        %1961 = vmatpush1.msra.mxu0 0.0
        %1962 = vmatprep.subr.mxu0 0.0
        %1963 = vmatpush1.msra.mxu0 0.0
        %1964 = vmatprep.subr.mxu0 0.0
        %1965 = vmatpush1.msra.mxu0 0.0
        %1966 = vmatprep.subr.mxu0 0.0
        %1967 = vmatpush1.msra.mxu0 0.0
        %1968 = vmatprep.subr.mxu0 0.0
        %1969 = vmatpush1.msra.mxu0 0.0
        %1970 = vmatprep.subr.mxu0 0.0
        %1971 = vmatpush1.msra.mxu0 0.0
        %1972 = vmatprep.subr.mxu0 0.0
        %1973 = vmatpush1.msra.mxu0 0.0
        %1974 = vmatprep.subr.mxu0 0.0
        %1975 = vmatpush1.msra.mxu0 0.0
        %1976 = vmatprep.subr.mxu0 0.0
        %1977 = vmatpush1.msra.mxu0 0.0
        %1978 = vmatprep.subr.mxu0 0.0
        %1979 = vmatpush1.msra.mxu0 0.0
        %1980 = vmatprep.subr.mxu0 0.0
        %1981 = vmatpush1.msra.mxu0 0.0
        %1982 = vmatprep.subr.mxu0 0.0
        %1983 = vmatpush1.msra.mxu0 0.0
        %1984 = vmatprep.subr.mxu0 0.0
        %1985 = vmatpush1.msra.mxu0 0.0
        %1986 = vmatprep.subr.mxu0 0.0
        %1987 = vmatpush1.msra.mxu0 0.0
        %1988 = vmatprep.subr.mxu0 0.0
        %1989 = vmatpush1.msra.mxu0 0.0
        %1990 = vmatprep.mubr.f32.mxu0 0.0
        %1991 = vmatmul.mubr.f32.gmra.mrb[0].mxu0 %v1924
        %v1992 = vpop.f32.mrb[0].mxu0
        %v1993 = vadd.f32 0.0, %v1992
        %v1994 = vpop.f32.mrb[0].mxu0
        %1995 = vdwg.mxu0
        %1996 = vst.msk [vmem:[#allocation2 + $0x6] sm:$0x1] %vm1438, %v1993
        %1998 = vrot.lane.b32.xlu0 %v1993, 8
        %v1999 = vpop.permute.xlu0 %1998
        %2001 = vst.msk [vmem:[#allocation2 + $0x5] sm:$0x2] %vm1444, %v1999
        %2002 = vrot.lane.b32.xlu0 %v1993, 16
        %v2003 = vpop.permute.xlu0 %2002
        %2005 = vst.msk [vmem:[#allocation2 + $0x4] sm:$0x4] %vm1449, %v2003
        %2006 = vrot.lane.b32.xlu0 %v1993, 24
        %v2007 = vpop.permute.xlu0 %2006
        %2009 = vst.msk [vmem:[#allocation2 + $0x3] sm:$0x8] %vm1454, %v2007
        %2010 = vst.msk [vmem:[#allocation2 + $0x3] sm:$0x10] %vm1456, %v1993
        %2011 = vst.msk [vmem:[#allocation2 + $0x2] sm:$0x20] %vm1458, %v1999
        %2012 = vst.msk [vmem:[#allocation2 + $0x1] sm:$0x40] %vm1460, %v2003
        %2013 = vst.msk [vmem:[#allocation2] sm:$0x80] %vm1462, %v2007
        %v2014 = vld [vmem:[#allocation2] sm:$0xff]
        %v2015 = vld [vmem:[#allocation14] sm:$0xff]
        %v2016 = vld [vmem:[#allocation14 + $0x8] sm:$0xff]
        %v2017 = vld [vmem:[#allocation14 + $0x10] sm:$0xff]
        %v2018 = vld [vmem:[#allocation14 + $0x18] sm:$0xff]
        %v2019 = vld [vmem:[#allocation15] sm:$0x1]
        %v2021 = vlaneseq
        %v2022 = vshrl.u32 %v2021, 7
        %v2023 = vsub.s32 0, %v2022
        %v2024 = vrot.slane %v2019, %v2023
        %v2027 = vsel %vm1062, %v2014, 0
        %2029 = vmatprep.subr.mxu0 0.0
        %2030 = vmatpush1.msra.mxu0 %v2015
        %2031 = vmatprep.subr.mxu0 0.0
        %2032 = vmatpush1.msra.mxu0 %v2016
        %2033 = vmatprep.subr.mxu0 0.0
        %2034 = vmatpush1.msra.mxu0 %v2017
        %2035 = vmatprep.subr.mxu0 0.0
        %2036 = vmatpush1.msra.mxu0 %v2018
        %2037 = vmatprep.subr.mxu0 0.0
        %2038 = vmatpush1.msra.mxu0 0.0
        %2039 = vmatprep.subr.mxu0 0.0
        %2040 = vmatpush1.msra.mxu0 0.0
        %2041 = vmatprep.subr.mxu0 0.0
        %2042 = vmatpush1.msra.mxu0 0.0
        %2043 = vmatprep.subr.mxu0 0.0
        %2044 = vmatpush1.msra.mxu0 0.0
        %2045 = vmatprep.subr.mxu0 0.0
        %2046 = vmatpush1.msra.mxu0 0.0
        %2047 = vmatprep.subr.mxu0 0.0
        %2048 = vmatpush1.msra.mxu0 0.0
        %2049 = vmatprep.subr.mxu0 0.0
        %2050 = vmatpush1.msra.mxu0 0.0
        %2051 = vmatprep.subr.mxu0 0.0
        %2052 = vmatpush1.msra.mxu0 0.0
        %2053 = vmatprep.subr.mxu0 0.0
        %2054 = vmatpush1.msra.mxu0 0.0
        %2055 = vmatprep.subr.mxu0 0.0
        %2056 = vmatpush1.msra.mxu0 0.0
        %2057 = vmatprep.subr.mxu0 0.0
        %2058 = vmatpush1.msra.mxu0 0.0
        %2059 = vmatprep.subr.mxu0 0.0
        %2060 = vmatpush1.msra.mxu0 0.0
        %2061 = vmatprep.subr.mxu0 0.0
        %2062 = vmatpush1.msra.mxu0 0.0
        %2063 = vmatprep.subr.mxu0 0.0
        %2064 = vmatpush1.msra.mxu0 0.0
        %2065 = vmatprep.subr.mxu0 0.0
        %2066 = vmatpush1.msra.mxu0 0.0
        %2067 = vmatprep.subr.mxu0 0.0
        %2068 = vmatpush1.msra.mxu0 0.0
        %2069 = vmatprep.subr.mxu0 0.0
        %2070 = vmatpush1.msra.mxu0 0.0
        %2071 = vmatprep.subr.mxu0 0.0
        %2072 = vmatpush1.msra.mxu0 0.0
        %2073 = vmatprep.subr.mxu0 0.0
        %2074 = vmatpush1.msra.mxu0 0.0
        %2075 = vmatprep.subr.mxu0 0.0
        %2076 = vmatpush1.msra.mxu0 0.0
        %2077 = vmatprep.subr.mxu0 0.0
        %2078 = vmatpush1.msra.mxu0 0.0
        %2079 = vmatprep.subr.mxu0 0.0
        %2080 = vmatpush1.msra.mxu0 0.0
        %2081 = vmatprep.subr.mxu0 0.0
        %2082 = vmatpush1.msra.mxu0 0.0
        %2083 = vmatprep.subr.mxu0 0.0
        %2084 = vmatpush1.msra.mxu0 0.0
        %2085 = vmatprep.subr.mxu0 0.0
        %2086 = vmatpush1.msra.mxu0 0.0
        %2087 = vmatprep.subr.mxu0 0.0
        %2088 = vmatpush1.msra.mxu0 0.0
        %2089 = vmatprep.subr.mxu0 0.0
        %2090 = vmatpush1.msra.mxu0 0.0
        %2091 = vmatprep.subr.mxu0 0.0
        %2092 = vmatpush1.msra.mxu0 0.0
        %2093 = vmatprep.mubr.f32.mxu0 0.0
        %2094 = vmatmul.mubr.f32.gmra.mrb[0].mxu0 %v2027
        %v2095 = vpop.f32.mrb[0].mxu0
        %v2096 = vadd.f32 %v2024, %v2095
        %v2097 = vpop.f32.mrb[0].mxu0
        %2098 = vdwg.mxu0
        %v2099 = vadd.f32 %v1048, %v2096
        %v2100 = vld [vmem:[#allocation17] sm:$0x1]
        %v2101 = vld [vmem:[#allocation18] sm:$0x1]
        %v2102 = vsel %vm1062, %v2099, 0.0
        %2103 = vadd.xlane.f32.xlu0 %v2102
        %v2104 = vpop.xlane.xlu0 %2103
        %v2105 = vrcp.pop 32.0
        %v2106 = vmul.f32 %v2104, %v2105
        %v2107 = vsub.f32 %v2099, %v2106
        %v2108 = vmul.f32 %v2107, %v2107
        %v2109 = vsel %vm1062, %v2108, 0.0
        %2110 = vadd.xlane.f32.xlu0 %v2109
        %v2111 = vpop.xlane.xlu0 %2110
        %v2112 = vmul.f32 %v2111, %v2105
        %v2113 = vadd.f32 %v2112, 1e-05
        %v2114 = vrsqrt.pop %v2113
        %v2115 = vmul.f32 %v2107, %v2114
        %v2117 = vlaneseq
        %v2118 = vshrl.u32 %v2117, 7
        %v2119 = vsub.s32 0, %v2118
        %v2120 = vrot.slane %v2100, %v2119
        %v2122 = vmul.f32 %v2115, %v2120
        %v2124 = vlaneseq
        %v2125 = vshrl.u32 %v2124, 7
        %v2126 = vsub.s32 0, %v2125
        %v2127 = vrot.slane %v2101, %v2126
        %v2129 = vadd.f32 %v2122, %v2127
        %v2130 = vld [vmem:[%s896] sm:$0xff]
        %v2131 = vld [vmem:[%s896 + $0x8] sm:$0xff]
        %v2132 = vld [vmem:[#allocation20] sm:$0xff]
        %v2133 = vld [vmem:[#allocation20 + $0x8] sm:$0xff]
        %v2134 = vld [vmem:[#allocation20 + $0x10] sm:$0xff]
        %v2135 = vld [vmem:[#allocation20 + $0x18] sm:$0xff]
        %v2136 = vld [vmem:[#allocation21] sm:$0xff]
        %v2137 = vld [vmem:[#allocation21 + $0x8] sm:$0xff]
        %v2138 = vld [vmem:[#allocation21 + $0x10] sm:$0xff]
        %v2139 = vld [vmem:[#allocation21 + $0x18] sm:$0xff]
        %v2140 = vld [vmem:[#allocation23] sm:$0xff]
        %v2141 = vld [vmem:[#allocation23 + $0x8] sm:$0xff]
        %v2142 = vld [vmem:[#allocation23 + $0x10] sm:$0xff]
        %v2143 = vld [vmem:[#allocation23 + $0x18] sm:$0xff]
        %v2145 = vsel %vm1062, %v2129, 0
        %2147 = vmatprep.subr.mxu0 0.0
        %2148 = vmatpush1.msra.mxu0 %v2132
        %2149 = vmatprep.subr.mxu0 0.0
        %2150 = vmatpush1.msra.mxu0 %v2133
        %2151 = vmatprep.subr.mxu0 0.0
        %2152 = vmatpush1.msra.mxu0 %v2134
        %2153 = vmatprep.subr.mxu0 0.0
        %2154 = vmatpush1.msra.mxu0 %v2135
        %2155 = vmatprep.subr.mxu0 0.0
        %2156 = vmatpush1.msra.mxu0 0.0
        %2157 = vmatprep.subr.mxu0 0.0
        %2158 = vmatpush1.msra.mxu0 0.0
        %2159 = vmatprep.subr.mxu0 0.0
        %2160 = vmatpush1.msra.mxu0 0.0
        %2161 = vmatprep.subr.mxu0 0.0
        %2162 = vmatpush1.msra.mxu0 0.0
        %2163 = vmatprep.subr.mxu0 0.0
        %2164 = vmatpush1.msra.mxu0 0.0
        %2165 = vmatprep.subr.mxu0 0.0
        %2166 = vmatpush1.msra.mxu0 0.0
        %2167 = vmatprep.subr.mxu0 0.0
        %2168 = vmatpush1.msra.mxu0 0.0
        %2169 = vmatprep.subr.mxu0 0.0
        %2170 = vmatpush1.msra.mxu0 0.0
        %2171 = vmatprep.subr.mxu0 0.0
        %2172 = vmatpush1.msra.mxu0 0.0
        %2173 = vmatprep.subr.mxu0 0.0
        %2174 = vmatpush1.msra.mxu0 0.0
        %2175 = vmatprep.subr.mxu0 0.0
        %2176 = vmatpush1.msra.mxu0 0.0
        %2177 = vmatprep.subr.mxu0 0.0
        %2178 = vmatpush1.msra.mxu0 0.0
        %2179 = vmatprep.subr.mxu0 0.0
        %2180 = vmatpush1.msra.mxu0 0.0
        %2181 = vmatprep.subr.mxu0 0.0
        %2182 = vmatpush1.msra.mxu0 0.0
        %2183 = vmatprep.subr.mxu0 0.0
        %2184 = vmatpush1.msra.mxu0 0.0
        %2185 = vmatprep.subr.mxu0 0.0
        %2186 = vmatpush1.msra.mxu0 0.0
        %2187 = vmatprep.subr.mxu0 0.0
        %2188 = vmatpush1.msra.mxu0 0.0
        %2189 = vmatprep.subr.mxu0 0.0
        %2190 = vmatpush1.msra.mxu0 0.0
        %2191 = vmatprep.subr.mxu0 0.0
        %2192 = vmatpush1.msra.mxu0 0.0
        %2193 = vmatprep.subr.mxu0 0.0
        %2194 = vmatpush1.msra.mxu0 0.0
        %2195 = vmatprep.subr.mxu0 0.0
        %2196 = vmatpush1.msra.mxu0 0.0
        %2197 = vmatprep.subr.mxu0 0.0
        %2198 = vmatpush1.msra.mxu0 0.0
        %2199 = vmatprep.subr.mxu0 0.0
        %2200 = vmatpush1.msra.mxu0 0.0
        %2201 = vmatprep.subr.mxu0 0.0
        %2202 = vmatpush1.msra.mxu0 0.0
        %2203 = vmatprep.subr.mxu0 0.0
        %2204 = vmatpush1.msra.mxu0 0.0
        %2205 = vmatprep.subr.mxu0 0.0
        %2206 = vmatpush1.msra.mxu0 0.0
        %2207 = vmatprep.subr.mxu0 0.0
        %2208 = vmatpush1.msra.mxu0 0.0
        %2209 = vmatprep.subr.mxu0 0.0
        %2210 = vmatpush1.msra.mxu0 0.0
        %2211 = vmatprep.mubr.f32.mxu0 0.0
        %2212 = vmatmul.mubr.f32.gmra.mrb[0].mxu0 %v2145
        %v2213 = vpop.f32.mrb[0].mxu0
        %v2214 = vadd.f32 0.0, %v2213
        %v2215 = vpop.f32.mrb[0].mxu0
        %2216 = vdwg.mxu0
        %v2218 = vsel %vm1062, %v2130, 0
        %v2221 = vsel %vm1062, %v2131, 0
        %2223 = vmatprep.subr.mxu0 0.0
        %2224 = vmatpush1.msra.mxu0 %v2136
        %2225 = vmatprep.subr.mxu0 0.0
        %2226 = vmatpush1.msra.mxu0 %v2137
        %2227 = vmatprep.subr.mxu0 0.0
        %2228 = vmatpush1.msra.mxu0 %v2138
        %2229 = vmatprep.subr.mxu0 0.0
        %2230 = vmatpush1.msra.mxu0 %v2139
        %2231 = vmatprep.subr.mxu0 0.0
        %2232 = vmatpush1.msra.mxu0 0.0
        %2233 = vmatprep.subr.mxu0 0.0
        %2234 = vmatpush1.msra.mxu0 0.0
        %2235 = vmatprep.subr.mxu0 0.0
        %2236 = vmatpush1.msra.mxu0 0.0
        %2237 = vmatprep.subr.mxu0 0.0
        %2238 = vmatpush1.msra.mxu0 0.0
        %2239 = vmatprep.subr.mxu0 0.0
        %2240 = vmatpush1.msra.mxu0 0.0
        %2241 = vmatprep.subr.mxu0 0.0
        %2242 = vmatpush1.msra.mxu0 0.0
        %2243 = vmatprep.subr.mxu0 0.0
        %2244 = vmatpush1.msra.mxu0 0.0
        %2245 = vmatprep.subr.mxu0 0.0
        %2246 = vmatpush1.msra.mxu0 0.0
        %2247 = vmatprep.subr.mxu0 0.0
        %2248 = vmatpush1.msra.mxu0 0.0
        %2249 = vmatprep.subr.mxu0 0.0
        %2250 = vmatpush1.msra.mxu0 0.0
        %2251 = vmatprep.subr.mxu0 0.0
        %2252 = vmatpush1.msra.mxu0 0.0
        %2253 = vmatprep.subr.mxu0 0.0
        %2254 = vmatpush1.msra.mxu0 0.0
        %2255 = vmatprep.subr.mxu0 0.0
        %2256 = vmatpush1.msra.mxu0 0.0
        %2257 = vmatprep.subr.mxu0 0.0
        %2258 = vmatpush1.msra.mxu0 0.0
        %2259 = vmatprep.subr.mxu0 0.0
        %2260 = vmatpush1.msra.mxu0 0.0
        %2261 = vmatprep.subr.mxu0 0.0
        %2262 = vmatpush1.msra.mxu0 0.0
        %2263 = vmatprep.subr.mxu0 0.0
        %2264 = vmatpush1.msra.mxu0 0.0
        %2265 = vmatprep.subr.mxu0 0.0
        %2266 = vmatpush1.msra.mxu0 0.0
        %2267 = vmatprep.subr.mxu0 0.0
        %2268 = vmatpush1.msra.mxu0 0.0
        %2269 = vmatprep.subr.mxu0 0.0
        %2270 = vmatpush1.msra.mxu0 0.0
        %2271 = vmatprep.subr.mxu0 0.0
        %2272 = vmatpush1.msra.mxu0 0.0
        %2273 = vmatprep.subr.mxu0 0.0
        %2274 = vmatpush1.msra.mxu0 0.0
        %2275 = vmatprep.subr.mxu0 0.0
        %2276 = vmatpush1.msra.mxu0 0.0
        %2277 = vmatprep.subr.mxu0 0.0
        %2278 = vmatpush1.msra.mxu0 0.0
        %2279 = vmatprep.subr.mxu0 0.0
        %2280 = vmatpush1.msra.mxu0 0.0
        %2281 = vmatprep.subr.mxu0 0.0
        %2282 = vmatpush1.msra.mxu0 0.0
        %2283 = vmatprep.subr.mxu0 0.0
        %2284 = vmatpush1.msra.mxu0 0.0
        %2285 = vmatprep.subr.mxu0 0.0
        %2286 = vmatpush1.msra.mxu0 0.0
        %2287 = vmatprep.mubr.f32.mxu0 0.0
        %2288 = vmatmul.mubr.f32.gmra.mrb[0].mxu0 %v2218
        %v2289 = vpop.f32.mrb[0].mxu0
        %v2290 = vadd.f32 0.0, %v2289
        %v2291 = vpop.f32.mrb[0].mxu0
        %2292 = vmatprep.mubr.f32.mxu0 0.0
        %2293 = vmatmul.mubr.f32.gmra.mrb[0].mxu0 %v2221
        %v2294 = vpop.f32.mrb[0].mxu0
        %v2295 = vadd.f32 0.0, %v2294
        %v2296 = vpop.f32.mrb[0].mxu0
        %2297 = vdwg.mxu0
        %2298 = vmatprep.subr.mxu0 0.0
        %2299 = vmatpush1.msra.mxu0 %v2140
        %2300 = vmatprep.subr.mxu0 0.0
        %2301 = vmatpush1.msra.mxu0 %v2141
        %2302 = vmatprep.subr.mxu0 0.0
        %2303 = vmatpush1.msra.mxu0 %v2142
        %2304 = vmatprep.subr.mxu0 0.0
        %2305 = vmatpush1.msra.mxu0 %v2143
        %2306 = vmatprep.subr.mxu0 0.0
        %2307 = vmatpush1.msra.mxu0 0.0
        %2308 = vmatprep.subr.mxu0 0.0
        %2309 = vmatpush1.msra.mxu0 0.0
        %2310 = vmatprep.subr.mxu0 0.0
        %2311 = vmatpush1.msra.mxu0 0.0
        %2312 = vmatprep.subr.mxu0 0.0
        %2313 = vmatpush1.msra.mxu0 0.0
        %2314 = vmatprep.subr.mxu0 0.0
        %2315 = vmatpush1.msra.mxu0 0.0
        %2316 = vmatprep.subr.mxu0 0.0
        %2317 = vmatpush1.msra.mxu0 0.0
        %2318 = vmatprep.subr.mxu0 0.0
        %2319 = vmatpush1.msra.mxu0 0.0
        %2320 = vmatprep.subr.mxu0 0.0
        %2321 = vmatpush1.msra.mxu0 0.0
        %2322 = vmatprep.subr.mxu0 0.0
        %2323 = vmatpush1.msra.mxu0 0.0
        %2324 = vmatprep.subr.mxu0 0.0
        %2325 = vmatpush1.msra.mxu0 0.0
        %2326 = vmatprep.subr.mxu0 0.0
        %2327 = vmatpush1.msra.mxu0 0.0
        %2328 = vmatprep.subr.mxu0 0.0
        %2329 = vmatpush1.msra.mxu0 0.0
        %2330 = vmatprep.subr.mxu0 0.0
        %2331 = vmatpush1.msra.mxu0 0.0
        %2332 = vmatprep.subr.mxu0 0.0
        %2333 = vmatpush1.msra.mxu0 0.0
        %2334 = vmatprep.subr.mxu0 0.0
        %2335 = vmatpush1.msra.mxu0 0.0
        %2336 = vmatprep.subr.mxu0 0.0
        %2337 = vmatpush1.msra.mxu0 0.0
        %2338 = vmatprep.subr.mxu0 0.0
        %2339 = vmatpush1.msra.mxu0 0.0
        %2340 = vmatprep.subr.mxu0 0.0
        %2341 = vmatpush1.msra.mxu0 0.0
        %2342 = vmatprep.subr.mxu0 0.0
        %2343 = vmatpush1.msra.mxu0 0.0
        %2344 = vmatprep.subr.mxu0 0.0
        %2345 = vmatpush1.msra.mxu0 0.0
        %2346 = vmatprep.subr.mxu0 0.0
        %2347 = vmatpush1.msra.mxu0 0.0
        %2348 = vmatprep.subr.mxu0 0.0
        %2349 = vmatpush1.msra.mxu0 0.0
        %2350 = vmatprep.subr.mxu0 0.0
        %2351 = vmatpush1.msra.mxu0 0.0
        %2352 = vmatprep.subr.mxu0 0.0
        %2353 = vmatpush1.msra.mxu0 0.0
        %2354 = vmatprep.subr.mxu0 0.0
        %2355 = vmatpush1.msra.mxu0 0.0
        %2356 = vmatprep.subr.mxu0 0.0
        %2357 = vmatpush1.msra.mxu0 0.0
        %2358 = vmatprep.subr.mxu0 0.0
        %2359 = vmatpush1.msra.mxu0 0.0
        %2360 = vmatprep.subr.mxu0 0.0
        %2361 = vmatpush1.msra.mxu0 0.0
        %2362 = vmatprep.mubr.f32.mxu0 0.0
        %2363 = vmatmul.mubr.f32.gmra.mrb[0].mxu0 %v2218
        %v2364 = vpop.f32.mrb[0].mxu0
        %v2365 = vadd.f32 0.0, %v2364
        %v2366 = vpop.f32.mrb[0].mxu0
        %2367 = vmatprep.mubr.f32.mxu0 0.0
        %2368 = vmatmul.mubr.f32.gmra.mrb[0].mxu0 %v2221
        %v2369 = vpop.f32.mrb[0].mxu0
        %v2370 = vadd.f32 0.0, %v2369
        %v2371 = vpop.f32.mrb[0].mxu0
        %2372 = vdwg.mxu0
        %v2373 = vmul.f32 %v2214, 0.35355338
        %v2375 = vsel %vm1277, %v2373, 0
        %v2378 = vsel %vm1277, %v2290, 0
        %v2381 = vsel %vm1277, %v2295, 0
        %2383 = vmatprep.subr.mxu0 0.0
        %2384 = vmatpush1.xpose.msra.mxu0 %v2378
        %2385 = vmatprep.subr.mxu0 0.0
        %2386 = vmatpush1.xpose.msra.mxu0 %v2381
        %2387 = vmatprep.subr.mxu0 0.0
        %2388 = vmatpush1.xpose.msra.mxu0 0.0
        %2389 = vmatprep.subr.mxu0 0.0
        %2390 = vmatpush1.xpose.msra.mxu0 0.0
        %2391 = vmatprep.subr.mxu0 0.0
        %2392 = vmatpush1.xpose.msra.mxu0 0.0
        %2393 = vmatprep.subr.mxu0 0.0
        %2394 = vmatpush1.xpose.msra.mxu0 0.0
        %2395 = vmatprep.subr.mxu0 0.0
        %2396 = vmatpush1.xpose.msra.mxu0 0.0
        %2397 = vmatprep.subr.mxu0 0.0
        %2398 = vmatpush1.xpose.msra.mxu0 0.0
        %2399 = vmatprep.subr.mxu0 0.0
        %2400 = vmatpush1.xpose.msra.mxu0 0.0
        %2401 = vmatprep.subr.mxu0 0.0
        %2402 = vmatpush1.xpose.msra.mxu0 0.0
        %2403 = vmatprep.subr.mxu0 0.0
        %2404 = vmatpush1.xpose.msra.mxu0 0.0
        %2405 = vmatprep.subr.mxu0 0.0
        %2406 = vmatpush1.xpose.msra.mxu0 0.0
        %2407 = vmatprep.subr.mxu0 0.0
        %2408 = vmatpush1.xpose.msra.mxu0 0.0
        %2409 = vmatprep.subr.mxu0 0.0
        %2410 = vmatpush1.xpose.msra.mxu0 0.0
        %2411 = vmatprep.subr.mxu0 0.0
        %2412 = vmatpush1.xpose.msra.mxu0 0.0
        %2413 = vmatprep.subr.mxu0 0.0
        %2414 = vmatpush1.xpose.msra.mxu0 0.0
        %2415 = vmatprep.subr.mxu0 0.0
        %2416 = vmatpush1.xpose.msra.mxu0 0.0
        %2417 = vmatprep.subr.mxu0 0.0
        %2418 = vmatpush1.xpose.msra.mxu0 0.0
        %2419 = vmatprep.subr.mxu0 0.0
        %2420 = vmatpush1.xpose.msra.mxu0 0.0
        %2421 = vmatprep.subr.mxu0 0.0
        %2422 = vmatpush1.xpose.msra.mxu0 0.0
        %2423 = vmatprep.subr.mxu0 0.0
        %2424 = vmatpush1.xpose.msra.mxu0 0.0
        %2425 = vmatprep.subr.mxu0 0.0
        %2426 = vmatpush1.xpose.msra.mxu0 0.0
        %2427 = vmatprep.subr.mxu0 0.0
        %2428 = vmatpush1.xpose.msra.mxu0 0.0
        %2429 = vmatprep.subr.mxu0 0.0
        %2430 = vmatpush1.xpose.msra.mxu0 0.0
        %2431 = vmatprep.subr.mxu0 0.0
        %2432 = vmatpush1.xpose.msra.mxu0 0.0
        %2433 = vmatprep.subr.mxu0 0.0
        %2434 = vmatpush1.xpose.msra.mxu0 0.0
        %2435 = vmatprep.subr.mxu0 0.0
        %2436 = vmatpush1.xpose.msra.mxu0 0.0
        %2437 = vmatprep.subr.mxu0 0.0
        %2438 = vmatpush1.xpose.msra.mxu0 0.0
        %2439 = vmatprep.subr.mxu0 0.0
        %2440 = vmatpush1.xpose.msra.mxu0 0.0
        %2441 = vmatprep.subr.mxu0 0.0
        %2442 = vmatpush1.xpose.msra.mxu0 0.0
        %2443 = vmatprep.subr.mxu0 0.0
        %2444 = vmatpush1.xpose.msra.mxu0 0.0
        %2445 = vmatprep.subr.mxu0 0.0
        %2446 = vmatpush1.xpose.msra.mxu0 0.0
        %2447 = vmatprep.mubr.f32.mxu0 0.0
        %2448 = vmatmul.mubr.f32.gmra.mrb[0].mxu0 %v2375
        %v2449 = vpop.f32.mrb[0].mxu0
        %v2450 = vadd.f32 0.0, %v2449
        %v2451 = vpop.f32.mrb[0].mxu0
        %2452 = vdwg.mxu0
        %vm2453 = vcmask 130048
        %v2454 = vsel %vm2453, %v2450, -inf
        %2455 = vmax.xlane.f32.xlu0 %v2454
        %v2456 = vpop.xlane.xlu0 %2455
        %v2457 = vsub.f32 %v2450, %v2456
        %v2458 = vmul.f32 %v2457, 1.442695
        %v2459 = vpow.pop %v2458
        %v2460 = vsel %vm2453, %v2459, 0.0
        %2461 = vadd.xlane.f32.xlu0 %v2460
        %v2462 = vpop.xlane.xlu0 %2461
        %v2463 = vrcp.pop %v2462
        %v2464 = vmul.f32 %v2459, %v2463
        %v2466 = vsel %vm2453, %v2464, 0
        %2468 = vmatprep.subr.mxu0 0.0
        %2469 = vmatpush1.msra.mxu0 %v2365
        %2470 = vmatprep.subr.mxu0 0.0
        %2471 = vmatpush1.msra.mxu0 %v2370
        %2472 = vmatprep.subr.mxu0 0.0
        %2473 = vmatpush1.msra.mxu0 0.0
        %2474 = vmatprep.subr.mxu0 0.0
        %2475 = vmatpush1.msra.mxu0 0.0
        %2476 = vmatprep.subr.mxu0 0.0
        %2477 = vmatpush1.msra.mxu0 0.0
        %2478 = vmatprep.subr.mxu0 0.0
        %2479 = vmatpush1.msra.mxu0 0.0
        %2480 = vmatprep.subr.mxu0 0.0
        %2481 = vmatpush1.msra.mxu0 0.0
        %2482 = vmatprep.subr.mxu0 0.0
        %2483 = vmatpush1.msra.mxu0 0.0
        %2484 = vmatprep.subr.mxu0 0.0
        %2485 = vmatpush1.msra.mxu0 0.0
        %2486 = vmatprep.subr.mxu0 0.0
        %2487 = vmatpush1.msra.mxu0 0.0
        %2488 = vmatprep.subr.mxu0 0.0
        %2489 = vmatpush1.msra.mxu0 0.0
        %2490 = vmatprep.subr.mxu0 0.0
        %2491 = vmatpush1.msra.mxu0 0.0
        %2492 = vmatprep.subr.mxu0 0.0
        %2493 = vmatpush1.msra.mxu0 0.0
        %2494 = vmatprep.subr.mxu0 0.0
        %2495 = vmatpush1.msra.mxu0 0.0
        %2496 = vmatprep.subr.mxu0 0.0
        %2497 = vmatpush1.msra.mxu0 0.0
        %2498 = vmatprep.subr.mxu0 0.0
        %2499 = vmatpush1.msra.mxu0 0.0
        %2500 = vmatprep.subr.mxu0 0.0
        %2501 = vmatpush1.msra.mxu0 0.0
        %2502 = vmatprep.subr.mxu0 0.0
        %2503 = vmatpush1.msra.mxu0 0.0
        %2504 = vmatprep.subr.mxu0 0.0
        %2505 = vmatpush1.msra.mxu0 0.0
        %2506 = vmatprep.subr.mxu0 0.0
        %2507 = vmatpush1.msra.mxu0 0.0
        %2508 = vmatprep.subr.mxu0 0.0
        %2509 = vmatpush1.msra.mxu0 0.0
        %2510 = vmatprep.subr.mxu0 0.0
        %2511 = vmatpush1.msra.mxu0 0.0
        %2512 = vmatprep.subr.mxu0 0.0
        %2513 = vmatpush1.msra.mxu0 0.0
        %2514 = vmatprep.subr.mxu0 0.0
        %2515 = vmatpush1.msra.mxu0 0.0
        %2516 = vmatprep.subr.mxu0 0.0
        %2517 = vmatpush1.msra.mxu0 0.0
        %2518 = vmatprep.subr.mxu0 0.0
        %2519 = vmatpush1.msra.mxu0 0.0
        %2520 = vmatprep.subr.mxu0 0.0
        %2521 = vmatpush1.msra.mxu0 0.0
        %2522 = vmatprep.subr.mxu0 0.0
        %2523 = vmatpush1.msra.mxu0 0.0
        %2524 = vmatprep.subr.mxu0 0.0
        %2525 = vmatpush1.msra.mxu0 0.0
        %2526 = vmatprep.subr.mxu0 0.0
        %2527 = vmatpush1.msra.mxu0 0.0
        %2528 = vmatprep.subr.mxu0 0.0
        %2529 = vmatpush1.msra.mxu0 0.0
        %2530 = vmatprep.subr.mxu0 0.0
        %2531 = vmatpush1.msra.mxu0 0.0
        %2532 = vmatprep.mubr.f32.mxu0 0.0
        %2533 = vmatmul.mubr.f32.gmra.mrb[0].mxu0 %v2466
        %v2534 = vpop.f32.mrb[0].mxu0
        %v2535 = vadd.f32 0.0, %v2534
        %v2536 = vpop.f32.mrb[0].mxu0
        %2537 = vdwg.mxu0
        %2538 = vst.msk [vmem:[#allocation2] sm:$0x1] %vm1438, %v2535
        %2540 = vrot.lane.b32.xlu0 %v2535, 8
        %v2541 = vpop.permute.xlu0 %2540
        %2543 = vst.msk [vmem:[#allocation2 - $0x1] sm:$0x2] %vm1444, %v2541
        %2544 = vrot.lane.b32.xlu0 %v2535, 16
        %v2545 = vpop.permute.xlu0 %2544
        %2547 = vst.msk [vmem:[#allocation2 - $0x2] sm:$0x4] %vm1449, %v2545
        %2548 = vrot.lane.b32.xlu0 %v2535, 24
        %v2549 = vpop.permute.xlu0 %2548
        %2551 = vst.msk [vmem:[#allocation2 - $0x3] sm:$0x8] %vm1454, %v2549
        %2552 = vst.msk [vmem:[#allocation2 - $0x3] sm:$0x10] %vm1456, %v2535
        %2553 = vst.msk [vmem:[#allocation2 - $0x4] sm:$0x20] %vm1458, %v2541
        %2554 = vst.msk [vmem:[#allocation2 - $0x5] sm:$0x40] %vm1460, %v2545
        %2555 = vst.msk [vmem:[#allocation2 - $0x6] sm:$0x80] %vm1462, %v2549
        %2556 = vrot.lane.b32.xlu0 %v2373, 120
        %v2557 = vpop.permute.xlu0 %2556
        %2558 = vrot.lane.b32.xlu0 %v2290, 120
        %v2559 = vpop.permute.xlu0 %2558
        %2560 = vrot.lane.b32.xlu0 %v2295, 120
        %v2561 = vpop.permute.xlu0 %2560
        %v2562 = vsel %vm1277, %v2557, 0
        %v2564 = vsel %vm1277, %v2559, 0
        %v2566 = vsel %vm1277, %v2561, 0
        %2568 = vmatprep.subr.mxu0 0.0
        %2569 = vmatpush1.xpose.msra.mxu0 %v2564
        %2570 = vmatprep.subr.mxu0 0.0
        %2571 = vmatpush1.xpose.msra.mxu0 %v2566
        %2572 = vmatprep.subr.mxu0 0.0
        %2573 = vmatpush1.xpose.msra.mxu0 0.0
        %2574 = vmatprep.subr.mxu0 0.0
        %2575 = vmatpush1.xpose.msra.mxu0 0.0
        %2576 = vmatprep.subr.mxu0 0.0
        %2577 = vmatpush1.xpose.msra.mxu0 0.0
        %2578 = vmatprep.subr.mxu0 0.0
        %2579 = vmatpush1.xpose.msra.mxu0 0.0
        %2580 = vmatprep.subr.mxu0 0.0
        %2581 = vmatpush1.xpose.msra.mxu0 0.0
        %2582 = vmatprep.subr.mxu0 0.0
        %2583 = vmatpush1.xpose.msra.mxu0 0.0
        %2584 = vmatprep.subr.mxu0 0.0
        %2585 = vmatpush1.xpose.msra.mxu0 0.0
        %2586 = vmatprep.subr.mxu0 0.0
        %2587 = vmatpush1.xpose.msra.mxu0 0.0
        %2588 = vmatprep.subr.mxu0 0.0
        %2589 = vmatpush1.xpose.msra.mxu0 0.0
        %2590 = vmatprep.subr.mxu0 0.0
        %2591 = vmatpush1.xpose.msra.mxu0 0.0
        %2592 = vmatprep.subr.mxu0 0.0
        %2593 = vmatpush1.xpose.msra.mxu0 0.0
        %2594 = vmatprep.subr.mxu0 0.0
        %2595 = vmatpush1.xpose.msra.mxu0 0.0
        %2596 = vmatprep.subr.mxu0 0.0
        %2597 = vmatpush1.xpose.msra.mxu0 0.0
        %2598 = vmatprep.subr.mxu0 0.0
        %2599 = vmatpush1.xpose.msra.mxu0 0.0
        %2600 = vmatprep.subr.mxu0 0.0
        %2601 = vmatpush1.xpose.msra.mxu0 0.0
        %2602 = vmatprep.subr.mxu0 0.0
        %2603 = vmatpush1.xpose.msra.mxu0 0.0
        %2604 = vmatprep.subr.mxu0 0.0
        %2605 = vmatpush1.xpose.msra.mxu0 0.0
        %2606 = vmatprep.subr.mxu0 0.0
        %2607 = vmatpush1.xpose.msra.mxu0 0.0
        %2608 = vmatprep.subr.mxu0 0.0
        %2609 = vmatpush1.xpose.msra.mxu0 0.0
        %2610 = vmatprep.subr.mxu0 0.0
        %2611 = vmatpush1.xpose.msra.mxu0 0.0
        %2612 = vmatprep.subr.mxu0 0.0
        %2613 = vmatpush1.xpose.msra.mxu0 0.0
        %2614 = vmatprep.subr.mxu0 0.0
        %2615 = vmatpush1.xpose.msra.mxu0 0.0
        %2616 = vmatprep.subr.mxu0 0.0
        %2617 = vmatpush1.xpose.msra.mxu0 0.0
        %2618 = vmatprep.subr.mxu0 0.0
        %2619 = vmatpush1.xpose.msra.mxu0 0.0
        %2620 = vmatprep.subr.mxu0 0.0
        %2621 = vmatpush1.xpose.msra.mxu0 0.0
        %2622 = vmatprep.subr.mxu0 0.0
        %2623 = vmatpush1.xpose.msra.mxu0 0.0
        %2624 = vmatprep.subr.mxu0 0.0
        %2625 = vmatpush1.xpose.msra.mxu0 0.0
        %2626 = vmatprep.subr.mxu0 0.0
        %2627 = vmatpush1.xpose.msra.mxu0 0.0
        %2628 = vmatprep.subr.mxu0 0.0
        %2629 = vmatpush1.xpose.msra.mxu0 0.0
        %2630 = vmatprep.subr.mxu0 0.0
        %2631 = vmatpush1.xpose.msra.mxu0 0.0
        %2632 = vmatprep.mubr.f32.mxu0 0.0
        %2633 = vmatmul.mubr.f32.gmra.mrb[0].mxu0 %v2562
        %v2634 = vpop.f32.mrb[0].mxu0
        %v2635 = vadd.f32 0.0, %v2634
        %v2636 = vpop.f32.mrb[0].mxu0
        %2637 = vdwg.mxu0
        %v2638 = vsel %vm2453, %v2635, -inf
        %2639 = vmax.xlane.f32.xlu0 %v2638
        %v2640 = vpop.xlane.xlu0 %2639
        %v2641 = vsub.f32 %v2635, %v2640
        %v2642 = vmul.f32 %v2641, 1.442695
        %v2643 = vpow.pop %v2642
        %v2644 = vsel %vm2453, %v2643, 0.0
        %2645 = vadd.xlane.f32.xlu0 %v2644
        %v2646 = vpop.xlane.xlu0 %2645
        %v2647 = vrcp.pop %v2646
        %v2648 = vmul.f32 %v2643, %v2647
        %2651 = vrot.lane.b32.xlu0 %v2365, 120
        %v2652 = vpop.permute.xlu0 %2651
        %2653 = vrot.lane.b32.xlu0 %v2370, 120
        %v2654 = vpop.permute.xlu0 %2653
        %v2658 = vsel %vm2453, %v2648, 0
        %2660 = vmatprep.subr.mxu0 0.0
        %2661 = vmatpush1.msra.mxu0 %v2652
        %2662 = vmatprep.subr.mxu0 0.0
        %2663 = vmatpush1.msra.mxu0 %v2654
        %2664 = vmatprep.subr.mxu0 0.0
        %2665 = vmatpush1.msra.mxu0 0.0
        %2666 = vmatprep.subr.mxu0 0.0
        %2667 = vmatpush1.msra.mxu0 0.0
        %2668 = vmatprep.subr.mxu0 0.0
        %2669 = vmatpush1.msra.mxu0 0.0
        %2670 = vmatprep.subr.mxu0 0.0
        %2671 = vmatpush1.msra.mxu0 0.0
        %2672 = vmatprep.subr.mxu0 0.0
        %2673 = vmatpush1.msra.mxu0 0.0
        %2674 = vmatprep.subr.mxu0 0.0
        %2675 = vmatpush1.msra.mxu0 0.0
        %2676 = vmatprep.subr.mxu0 0.0
        %2677 = vmatpush1.msra.mxu0 0.0
        %2678 = vmatprep.subr.mxu0 0.0
        %2679 = vmatpush1.msra.mxu0 0.0
        %2680 = vmatprep.subr.mxu0 0.0
        %2681 = vmatpush1.msra.mxu0 0.0
        %2682 = vmatprep.subr.mxu0 0.0
        %2683 = vmatpush1.msra.mxu0 0.0
        %2684 = vmatprep.subr.mxu0 0.0
        %2685 = vmatpush1.msra.mxu0 0.0
        %2686 = vmatprep.subr.mxu0 0.0
        %2687 = vmatpush1.msra.mxu0 0.0
        %2688 = vmatprep.subr.mxu0 0.0
        %2689 = vmatpush1.msra.mxu0 0.0
        %2690 = vmatprep.subr.mxu0 0.0
        %2691 = vmatpush1.msra.mxu0 0.0
        %2692 = vmatprep.subr.mxu0 0.0
        %2693 = vmatpush1.msra.mxu0 0.0
        %2694 = vmatprep.subr.mxu0 0.0
        %2695 = vmatpush1.msra.mxu0 0.0
        %2696 = vmatprep.subr.mxu0 0.0
        %2697 = vmatpush1.msra.mxu0 0.0
        %2698 = vmatprep.subr.mxu0 0.0
        %2699 = vmatpush1.msra.mxu0 0.0
        %2700 = vmatprep.subr.mxu0 0.0
        %2701 = vmatpush1.msra.mxu0 0.0
        %2702 = vmatprep.subr.mxu0 0.0
        %2703 = vmatpush1.msra.mxu0 0.0
        %2704 = vmatprep.subr.mxu0 0.0
        %2705 = vmatpush1.msra.mxu0 0.0
        %2706 = vmatprep.subr.mxu0 0.0
        %2707 = vmatpush1.msra.mxu0 0.0
        %2708 = vmatprep.subr.mxu0 0.0
        %2709 = vmatpush1.msra.mxu0 0.0
        %2710 = vmatprep.subr.mxu0 0.0
        %2711 = vmatpush1.msra.mxu0 0.0
        %2712 = vmatprep.subr.mxu0 0.0
        %2713 = vmatpush1.msra.mxu0 0.0
        %2714 = vmatprep.subr.mxu0 0.0
        %2715 = vmatpush1.msra.mxu0 0.0
        %2716 = vmatprep.subr.mxu0 0.0
        %2717 = vmatpush1.msra.mxu0 0.0
        %2718 = vmatprep.subr.mxu0 0.0
        %2719 = vmatpush1.msra.mxu0 0.0
        %2720 = vmatprep.subr.mxu0 0.0
        %2721 = vmatpush1.msra.mxu0 0.0
        %2722 = vmatprep.subr.mxu0 0.0
        %2723 = vmatpush1.msra.mxu0 0.0
        %2724 = vmatprep.mubr.f32.mxu0 0.0
        %2725 = vmatmul.mubr.f32.gmra.mrb[0].mxu0 %v2658
        %v2726 = vpop.f32.mrb[0].mxu0
        %v2727 = vadd.f32 0.0, %v2726
        %v2728 = vpop.f32.mrb[0].mxu0
        %2729 = vdwg.mxu0
        %2730 = vst.msk [vmem:[#allocation2 + $0x2] sm:$0x1] %vm1438, %v2727
        %2732 = vrot.lane.b32.xlu0 %v2727, 8
        %v2733 = vpop.permute.xlu0 %2732
        %2735 = vst.msk [vmem:[#allocation2 + $0x1] sm:$0x2] %vm1444, %v2733
        %2736 = vrot.lane.b32.xlu0 %v2727, 16
        %v2737 = vpop.permute.xlu0 %2736
        %2739 = vst.msk [vmem:[#allocation2] sm:$0x4] %vm1449, %v2737
        %2740 = vrot.lane.b32.xlu0 %v2727, 24
        %v2741 = vpop.permute.xlu0 %2740
        %2743 = vst.msk [vmem:[#allocation2 - $0x1] sm:$0x8] %vm1454, %v2741
        %2744 = vst.msk [vmem:[#allocation2 - $0x1] sm:$0x10] %vm1456, %v2727
        %2745 = vst.msk [vmem:[#allocation2 - $0x2] sm:$0x20] %vm1458, %v2733
        %2746 = vst.msk [vmem:[#allocation2 - $0x3] sm:$0x40] %vm1460, %v2737
        %2747 = vst.msk [vmem:[#allocation2 - $0x4] sm:$0x80] %vm1462, %v2741
        %2748 = vrot.lane.b32.xlu0 %v2373, 112
        %v2749 = vpop.permute.xlu0 %2748
        %2750 = vrot.lane.b32.xlu0 %v2290, 112
        %v2751 = vpop.permute.xlu0 %2750
        %2752 = vrot.lane.b32.xlu0 %v2295, 112
        %v2753 = vpop.permute.xlu0 %2752
        %v2754 = vsel %vm1277, %v2749, 0
        %v2756 = vsel %vm1277, %v2751, 0
        %v2758 = vsel %vm1277, %v2753, 0
        %2760 = vmatprep.subr.mxu0 0.0
        %2761 = vmatpush1.xpose.msra.mxu0 %v2756
        %2762 = vmatprep.subr.mxu0 0.0
        %2763 = vmatpush1.xpose.msra.mxu0 %v2758
        %2764 = vmatprep.subr.mxu0 0.0
        %2765 = vmatpush1.xpose.msra.mxu0 0.0
        %2766 = vmatprep.subr.mxu0 0.0
        %2767 = vmatpush1.xpose.msra.mxu0 0.0
        %2768 = vmatprep.subr.mxu0 0.0
        %2769 = vmatpush1.xpose.msra.mxu0 0.0
        %2770 = vmatprep.subr.mxu0 0.0
        %2771 = vmatpush1.xpose.msra.mxu0 0.0
        %2772 = vmatprep.subr.mxu0 0.0
        %2773 = vmatpush1.xpose.msra.mxu0 0.0
        %2774 = vmatprep.subr.mxu0 0.0
        %2775 = vmatpush1.xpose.msra.mxu0 0.0
        %2776 = vmatprep.subr.mxu0 0.0
        %2777 = vmatpush1.xpose.msra.mxu0 0.0
        %2778 = vmatprep.subr.mxu0 0.0
        %2779 = vmatpush1.xpose.msra.mxu0 0.0
        %2780 = vmatprep.subr.mxu0 0.0
        %2781 = vmatpush1.xpose.msra.mxu0 0.0
        %2782 = vmatprep.subr.mxu0 0.0
        %2783 = vmatpush1.xpose.msra.mxu0 0.0
        %2784 = vmatprep.subr.mxu0 0.0
        %2785 = vmatpush1.xpose.msra.mxu0 0.0
        %2786 = vmatprep.subr.mxu0 0.0
        %2787 = vmatpush1.xpose.msra.mxu0 0.0
        %2788 = vmatprep.subr.mxu0 0.0
        %2789 = vmatpush1.xpose.msra.mxu0 0.0
        %2790 = vmatprep.subr.mxu0 0.0
        %2791 = vmatpush1.xpose.msra.mxu0 0.0
        %2792 = vmatprep.subr.mxu0 0.0
        %2793 = vmatpush1.xpose.msra.mxu0 0.0
        %2794 = vmatprep.subr.mxu0 0.0
        %2795 = vmatpush1.xpose.msra.mxu0 0.0
        %2796 = vmatprep.subr.mxu0 0.0
        %2797 = vmatpush1.xpose.msra.mxu0 0.0
        %2798 = vmatprep.subr.mxu0 0.0
        %2799 = vmatpush1.xpose.msra.mxu0 0.0
        %2800 = vmatprep.subr.mxu0 0.0
        %2801 = vmatpush1.xpose.msra.mxu0 0.0
        %2802 = vmatprep.subr.mxu0 0.0
        %2803 = vmatpush1.xpose.msra.mxu0 0.0
        %2804 = vmatprep.subr.mxu0 0.0
        %2805 = vmatpush1.xpose.msra.mxu0 0.0
        %2806 = vmatprep.subr.mxu0 0.0
        %2807 = vmatpush1.xpose.msra.mxu0 0.0
        %2808 = vmatprep.subr.mxu0 0.0
        %2809 = vmatpush1.xpose.msra.mxu0 0.0
        %2810 = vmatprep.subr.mxu0 0.0
        %2811 = vmatpush1.xpose.msra.mxu0 0.0
        %2812 = vmatprep.subr.mxu0 0.0
        %2813 = vmatpush1.xpose.msra.mxu0 0.0
        %2814 = vmatprep.subr.mxu0 0.0
        %2815 = vmatpush1.xpose.msra.mxu0 0.0
        %2816 = vmatprep.subr.mxu0 0.0
        %2817 = vmatpush1.xpose.msra.mxu0 0.0
        %2818 = vmatprep.subr.mxu0 0.0
        %2819 = vmatpush1.xpose.msra.mxu0 0.0
        %2820 = vmatprep.subr.mxu0 0.0
        %2821 = vmatpush1.xpose.msra.mxu0 0.0
        %2822 = vmatprep.subr.mxu0 0.0
        %2823 = vmatpush1.xpose.msra.mxu0 0.0
        %2824 = vmatprep.mubr.f32.mxu0 0.0
        %2825 = vmatmul.mubr.f32.gmra.mrb[0].mxu0 %v2754
        %v2826 = vpop.f32.mrb[0].mxu0
        %v2827 = vadd.f32 0.0, %v2826
        %v2828 = vpop.f32.mrb[0].mxu0
        %2829 = vdwg.mxu0
        %v2830 = vsel %vm2453, %v2827, -inf
        %2831 = vmax.xlane.f32.xlu0 %v2830
        %v2832 = vpop.xlane.xlu0 %2831
        %v2833 = vsub.f32 %v2827, %v2832
        %v2834 = vmul.f32 %v2833, 1.442695
        %v2835 = vpow.pop %v2834
        %v2836 = vsel %vm2453, %v2835, 0.0
        %2837 = vadd.xlane.f32.xlu0 %v2836
        %v2838 = vpop.xlane.xlu0 %2837
        %v2839 = vrcp.pop %v2838
        %v2840 = vmul.f32 %v2835, %v2839
        %2841 = vrot.lane.b32.xlu0 %v2365, 112
        %v2842 = vpop.permute.xlu0 %2841
        %2843 = vrot.lane.b32.xlu0 %v2370, 112
        %v2844 = vpop.permute.xlu0 %2843
        %v2848 = vsel %vm2453, %v2840, 0
        %2850 = vmatprep.subr.mxu0 0.0
        %2851 = vmatpush1.msra.mxu0 %v2842
        %2852 = vmatprep.subr.mxu0 0.0
        %2853 = vmatpush1.msra.mxu0 %v2844
        %2854 = vmatprep.subr.mxu0 0.0
        %2855 = vmatpush1.msra.mxu0 0.0
        %2856 = vmatprep.subr.mxu0 0.0
        %2857 = vmatpush1.msra.mxu0 0.0
        %2858 = vmatprep.subr.mxu0 0.0
        %2859 = vmatpush1.msra.mxu0 0.0
        %2860 = vmatprep.subr.mxu0 0.0
        %2861 = vmatpush1.msra.mxu0 0.0
        %2862 = vmatprep.subr.mxu0 0.0
        %2863 = vmatpush1.msra.mxu0 0.0
        %2864 = vmatprep.subr.mxu0 0.0
        %2865 = vmatpush1.msra.mxu0 0.0
        %2866 = vmatprep.subr.mxu0 0.0
        %2867 = vmatpush1.msra.mxu0 0.0
        %2868 = vmatprep.subr.mxu0 0.0
        %2869 = vmatpush1.msra.mxu0 0.0
        %2870 = vmatprep.subr.mxu0 0.0
        %2871 = vmatpush1.msra.mxu0 0.0
        %2872 = vmatprep.subr.mxu0 0.0
        %2873 = vmatpush1.msra.mxu0 0.0
        %2874 = vmatprep.subr.mxu0 0.0
        %2875 = vmatpush1.msra.mxu0 0.0
        %2876 = vmatprep.subr.mxu0 0.0
        %2877 = vmatpush1.msra.mxu0 0.0
        %2878 = vmatprep.subr.mxu0 0.0
        %2879 = vmatpush1.msra.mxu0 0.0
        %2880 = vmatprep.subr.mxu0 0.0
        %2881 = vmatpush1.msra.mxu0 0.0
        %2882 = vmatprep.subr.mxu0 0.0
        %2883 = vmatpush1.msra.mxu0 0.0
        %2884 = vmatprep.subr.mxu0 0.0
        %2885 = vmatpush1.msra.mxu0 0.0
        %2886 = vmatprep.subr.mxu0 0.0
        %2887 = vmatpush1.msra.mxu0 0.0
        %2888 = vmatprep.subr.mxu0 0.0
        %2889 = vmatpush1.msra.mxu0 0.0
        %2890 = vmatprep.subr.mxu0 0.0
        %2891 = vmatpush1.msra.mxu0 0.0
        %2892 = vmatprep.subr.mxu0 0.0
        %2893 = vmatpush1.msra.mxu0 0.0
        %2894 = vmatprep.subr.mxu0 0.0
        %2895 = vmatpush1.msra.mxu0 0.0
        %2896 = vmatprep.subr.mxu0 0.0
        %2897 = vmatpush1.msra.mxu0 0.0
        %2898 = vmatprep.subr.mxu0 0.0
        %2899 = vmatpush1.msra.mxu0 0.0
        %2900 = vmatprep.subr.mxu0 0.0
        %2901 = vmatpush1.msra.mxu0 0.0
        %2902 = vmatprep.subr.mxu0 0.0
        %2903 = vmatpush1.msra.mxu0 0.0
        %2904 = vmatprep.subr.mxu0 0.0
        %2905 = vmatpush1.msra.mxu0 0.0
        %2906 = vmatprep.subr.mxu0 0.0
        %2907 = vmatpush1.msra.mxu0 0.0
        %2908 = vmatprep.subr.mxu0 0.0
        %2909 = vmatpush1.msra.mxu0 0.0
        %2910 = vmatprep.subr.mxu0 0.0
        %2911 = vmatpush1.msra.mxu0 0.0
        %2912 = vmatprep.subr.mxu0 0.0
        %2913 = vmatpush1.msra.mxu0 0.0
        %2914 = vmatprep.mubr.f32.mxu0 0.0
        %2915 = vmatmul.mubr.f32.gmra.mrb[0].mxu0 %v2848
        %v2916 = vpop.f32.mrb[0].mxu0
        %v2917 = vadd.f32 0.0, %v2916
        %v2918 = vpop.f32.mrb[0].mxu0
        %2919 = vdwg.mxu0
        %2920 = vst.msk [vmem:[#allocation2 + $0x4] sm:$0x1] %vm1438, %v2917
        %2922 = vrot.lane.b32.xlu0 %v2917, 8
        %v2923 = vpop.permute.xlu0 %2922
        %2925 = vst.msk [vmem:[#allocation2 + $0x3] sm:$0x2] %vm1444, %v2923
        %2926 = vrot.lane.b32.xlu0 %v2917, 16
        %v2927 = vpop.permute.xlu0 %2926
        %2929 = vst.msk [vmem:[#allocation2 + $0x2] sm:$0x4] %vm1449, %v2927
        %2930 = vrot.lane.b32.xlu0 %v2917, 24
        %v2931 = vpop.permute.xlu0 %2930
        %2933 = vst.msk [vmem:[#allocation2 + $0x1] sm:$0x8] %vm1454, %v2931
        %2934 = vst.msk [vmem:[#allocation2 + $0x1] sm:$0x10] %vm1456, %v2917
        %2935 = vst.msk [vmem:[#allocation2] sm:$0x20] %vm1458, %v2923
        %2936 = vst.msk [vmem:[#allocation2 - $0x1] sm:$0x40] %vm1460, %v2927
        %2937 = vst.msk [vmem:[#allocation2 - $0x2] sm:$0x80] %vm1462, %v2931
        %2938 = vrot.lane.b32.xlu0 %v2373, 104
        %v2939 = vpop.permute.xlu0 %2938
        %2940 = vrot.lane.b32.xlu0 %v2290, 104
        %v2941 = vpop.permute.xlu0 %2940
        %2942 = vrot.lane.b32.xlu0 %v2295, 104
        %v2943 = vpop.permute.xlu0 %2942
        %v2944 = vsel %vm1277, %v2939, 0
        %v2946 = vsel %vm1277, %v2941, 0
        %v2948 = vsel %vm1277, %v2943, 0
        %2950 = vmatprep.subr.mxu0 0.0
        %2951 = vmatpush1.xpose.msra.mxu0 %v2946
        %2952 = vmatprep.subr.mxu0 0.0
        %2953 = vmatpush1.xpose.msra.mxu0 %v2948
        %2954 = vmatprep.subr.mxu0 0.0
        %2955 = vmatpush1.xpose.msra.mxu0 0.0
        %2956 = vmatprep.subr.mxu0 0.0
        %2957 = vmatpush1.xpose.msra.mxu0 0.0
        %2958 = vmatprep.subr.mxu0 0.0
        %2959 = vmatpush1.xpose.msra.mxu0 0.0
        %2960 = vmatprep.subr.mxu0 0.0
        %2961 = vmatpush1.xpose.msra.mxu0 0.0
        %2962 = vmatprep.subr.mxu0 0.0
        %2963 = vmatpush1.xpose.msra.mxu0 0.0
        %2964 = vmatprep.subr.mxu0 0.0
        %2965 = vmatpush1.xpose.msra.mxu0 0.0
        %2966 = vmatprep.subr.mxu0 0.0
        %2967 = vmatpush1.xpose.msra.mxu0 0.0
        %2968 = vmatprep.subr.mxu0 0.0
        %2969 = vmatpush1.xpose.msra.mxu0 0.0
        %2970 = vmatprep.subr.mxu0 0.0
        %2971 = vmatpush1.xpose.msra.mxu0 0.0
        %2972 = vmatprep.subr.mxu0 0.0
        %2973 = vmatpush1.xpose.msra.mxu0 0.0
        %2974 = vmatprep.subr.mxu0 0.0
        %2975 = vmatpush1.xpose.msra.mxu0 0.0
        %2976 = vmatprep.subr.mxu0 0.0
        %2977 = vmatpush1.xpose.msra.mxu0 0.0
        %2978 = vmatprep.subr.mxu0 0.0
        %2979 = vmatpush1.xpose.msra.mxu0 0.0
        %2980 = vmatprep.subr.mxu0 0.0
        %2981 = vmatpush1.xpose.msra.mxu0 0.0
        %2982 = vmatprep.subr.mxu0 0.0
        %2983 = vmatpush1.xpose.msra.mxu0 0.0
        %2984 = vmatprep.subr.mxu0 0.0
        %2985 = vmatpush1.xpose.msra.mxu0 0.0
        %2986 = vmatprep.subr.mxu0 0.0
        %2987 = vmatpush1.xpose.msra.mxu0 0.0
        %2988 = vmatprep.subr.mxu0 0.0
        %2989 = vmatpush1.xpose.msra.mxu0 0.0
        %2990 = vmatprep.subr.mxu0 0.0
        %2991 = vmatpush1.xpose.msra.mxu0 0.0
        %2992 = vmatprep.subr.mxu0 0.0
        %2993 = vmatpush1.xpose.msra.mxu0 0.0
        %2994 = vmatprep.subr.mxu0 0.0
        %2995 = vmatpush1.xpose.msra.mxu0 0.0
        %2996 = vmatprep.subr.mxu0 0.0
        %2997 = vmatpush1.xpose.msra.mxu0 0.0
        %2998 = vmatprep.subr.mxu0 0.0
        %2999 = vmatpush1.xpose.msra.mxu0 0.0
        %3000 = vmatprep.subr.mxu0 0.0
        %3001 = vmatpush1.xpose.msra.mxu0 0.0
        %3002 = vmatprep.subr.mxu0 0.0
        %3003 = vmatpush1.xpose.msra.mxu0 0.0
        %3004 = vmatprep.subr.mxu0 0.0
        %3005 = vmatpush1.xpose.msra.mxu0 0.0
        %3006 = vmatprep.subr.mxu0 0.0
        %3007 = vmatpush1.xpose.msra.mxu0 0.0
        %3008 = vmatprep.subr.mxu0 0.0
        %3009 = vmatpush1.xpose.msra.mxu0 0.0
        %3010 = vmatprep.subr.mxu0 0.0
        %3011 = vmatpush1.xpose.msra.mxu0 0.0
        %3012 = vmatprep.subr.mxu0 0.0
        %3013 = vmatpush1.xpose.msra.mxu0 0.0
        %3014 = vmatprep.mubr.f32.mxu0 0.0
        %3015 = vmatmul.mubr.f32.gmra.mrb[0].mxu0 %v2944
        %v3016 = vpop.f32.mrb[0].mxu0
        %v3017 = vadd.f32 0.0, %v3016
        %v3018 = vpop.f32.mrb[0].mxu0
        %3019 = vdwg.mxu0
        %v3020 = vsel %vm2453, %v3017, -inf
        %3021 = vmax.xlane.f32.xlu0 %v3020
        %v3022 = vpop.xlane.xlu0 %3021
        %v3023 = vsub.f32 %v3017, %v3022
        %v3024 = vmul.f32 %v3023, 1.442695
        %v3025 = vpow.pop %v3024
        %v3026 = vsel %vm2453, %v3025, 0.0
        %3027 = vadd.xlane.f32.xlu0 %v3026
        %v3028 = vpop.xlane.xlu0 %3027
        %v3029 = vrcp.pop %v3028
        %v3030 = vmul.f32 %v3025, %v3029
        %3031 = vrot.lane.b32.xlu0 %v2365, 104
        %v3032 = vpop.permute.xlu0 %3031
        %3033 = vrot.lane.b32.xlu0 %v2370, 104
        %v3034 = vpop.permute.xlu0 %3033
        %v3038 = vsel %vm2453, %v3030, 0
        %3040 = vmatprep.subr.mxu0 0.0
        %3041 = vmatpush1.msra.mxu0 %v3032
        %3042 = vmatprep.subr.mxu0 0.0
        %3043 = vmatpush1.msra.mxu0 %v3034
        %3044 = vmatprep.subr.mxu0 0.0
        %3045 = vmatpush1.msra.mxu0 0.0
        %3046 = vmatprep.subr.mxu0 0.0
        %3047 = vmatpush1.msra.mxu0 0.0
        %3048 = vmatprep.subr.mxu0 0.0
        %3049 = vmatpush1.msra.mxu0 0.0
        %3050 = vmatprep.subr.mxu0 0.0
        %3051 = vmatpush1.msra.mxu0 0.0
        %3052 = vmatprep.subr.mxu0 0.0
        %3053 = vmatpush1.msra.mxu0 0.0
        %3054 = vmatprep.subr.mxu0 0.0
        %3055 = vmatpush1.msra.mxu0 0.0
        %3056 = vmatprep.subr.mxu0 0.0
        %3057 = vmatpush1.msra.mxu0 0.0
        %3058 = vmatprep.subr.mxu0 0.0
        %3059 = vmatpush1.msra.mxu0 0.0
        %3060 = vmatprep.subr.mxu0 0.0
        %3061 = vmatpush1.msra.mxu0 0.0
        %3062 = vmatprep.subr.mxu0 0.0
        %3063 = vmatpush1.msra.mxu0 0.0
        %3064 = vmatprep.subr.mxu0 0.0
        %3065 = vmatpush1.msra.mxu0 0.0
        %3066 = vmatprep.subr.mxu0 0.0
        %3067 = vmatpush1.msra.mxu0 0.0
        %3068 = vmatprep.subr.mxu0 0.0
        %3069 = vmatpush1.msra.mxu0 0.0
        %3070 = vmatprep.subr.mxu0 0.0
        %3071 = vmatpush1.msra.mxu0 0.0
        %3072 = vmatprep.subr.mxu0 0.0
        %3073 = vmatpush1.msra.mxu0 0.0
        %3074 = vmatprep.subr.mxu0 0.0
        %3075 = vmatpush1.msra.mxu0 0.0
        %3076 = vmatprep.subr.mxu0 0.0
        %3077 = vmatpush1.msra.mxu0 0.0
        %3078 = vmatprep.subr.mxu0 0.0
        %3079 = vmatpush1.msra.mxu0 0.0
        %3080 = vmatprep.subr.mxu0 0.0
        %3081 = vmatpush1.msra.mxu0 0.0
        %3082 = vmatprep.subr.mxu0 0.0
        %3083 = vmatpush1.msra.mxu0 0.0
        %3084 = vmatprep.subr.mxu0 0.0
        %3085 = vmatpush1.msra.mxu0 0.0
        %3086 = vmatprep.subr.mxu0 0.0
        %3087 = vmatpush1.msra.mxu0 0.0
        %3088 = vmatprep.subr.mxu0 0.0
        %3089 = vmatpush1.msra.mxu0 0.0
        %3090 = vmatprep.subr.mxu0 0.0
        %3091 = vmatpush1.msra.mxu0 0.0
        %3092 = vmatprep.subr.mxu0 0.0
        %3093 = vmatpush1.msra.mxu0 0.0
        %3094 = vmatprep.subr.mxu0 0.0
        %3095 = vmatpush1.msra.mxu0 0.0
        %3096 = vmatprep.subr.mxu0 0.0
        %3097 = vmatpush1.msra.mxu0 0.0
        %3098 = vmatprep.subr.mxu0 0.0
        %3099 = vmatpush1.msra.mxu0 0.0
        %3100 = vmatprep.subr.mxu0 0.0
        %3101 = vmatpush1.msra.mxu0 0.0
        %3102 = vmatprep.subr.mxu0 0.0
        %3103 = vmatpush1.msra.mxu0 0.0
        %3104 = vmatprep.mubr.f32.mxu0 0.0
        %3105 = vmatmul.mubr.f32.gmra.mrb[0].mxu0 %v3038
        %v3106 = vpop.f32.mrb[0].mxu0
        %v3107 = vadd.f32 0.0, %v3106
        %v3108 = vpop.f32.mrb[0].mxu0
        %3109 = vdwg.mxu0
        %3110 = vst.msk [vmem:[#allocation2 + $0x6] sm:$0x1] %vm1438, %v3107
        %3112 = vrot.lane.b32.xlu0 %v3107, 8
        %v3113 = vpop.permute.xlu0 %3112
        %3115 = vst.msk [vmem:[#allocation2 + $0x5] sm:$0x2] %vm1444, %v3113
        %3116 = vrot.lane.b32.xlu0 %v3107, 16
        %v3117 = vpop.permute.xlu0 %3116
        %3119 = vst.msk [vmem:[#allocation2 + $0x4] sm:$0x4] %vm1449, %v3117
        %3120 = vrot.lane.b32.xlu0 %v3107, 24
        %v3121 = vpop.permute.xlu0 %3120
        %3123 = vst.msk [vmem:[#allocation2 + $0x3] sm:$0x8] %vm1454, %v3121
        %3124 = vst.msk [vmem:[#allocation2 + $0x3] sm:$0x10] %vm1456, %v3107
        %3125 = vst.msk [vmem:[#allocation2 + $0x2] sm:$0x20] %vm1458, %v3113
        %3126 = vst.msk [vmem:[#allocation2 + $0x1] sm:$0x40] %vm1460, %v3117
        %3127 = vst.msk [vmem:[#allocation2] sm:$0x80] %vm1462, %v3121
        %v3128 = vld [vmem:[#allocation2] sm:$0xff]
        %v3129 = vld [vmem:[#allocation24] sm:$0xff]
        %v3130 = vld [vmem:[#allocation24 + $0x8] sm:$0xff]
        %v3131 = vld [vmem:[#allocation24 + $0x10] sm:$0xff]
        %v3132 = vld [vmem:[#allocation24 + $0x18] sm:$0xff]
        %v3133 = vld [vmem:[#allocation26] sm:$0x1]
        %v3135 = vlaneseq
        %v3136 = vshrl.u32 %v3135, 7
        %v3137 = vsub.s32 0, %v3136
        %v3138 = vrot.slane %v3133, %v3137
        %v3141 = vsel %vm1062, %v3128, 0
        %3143 = vmatprep.subr.mxu0 0.0
        %3144 = vmatpush1.msra.mxu0 %v3129
        %3145 = vmatprep.subr.mxu0 0.0
        %3146 = vmatpush1.msra.mxu0 %v3130
        %3147 = vmatprep.subr.mxu0 0.0
        %3148 = vmatpush1.msra.mxu0 %v3131
        %3149 = vmatprep.subr.mxu0 0.0
        %3150 = vmatpush1.msra.mxu0 %v3132
        %3151 = vmatprep.subr.mxu0 0.0
        %3152 = vmatpush1.msra.mxu0 0.0
        %3153 = vmatprep.subr.mxu0 0.0
        %3154 = vmatpush1.msra.mxu0 0.0
        %3155 = vmatprep.subr.mxu0 0.0
        %3156 = vmatpush1.msra.mxu0 0.0
        %3157 = vmatprep.subr.mxu0 0.0
        %3158 = vmatpush1.msra.mxu0 0.0
        %3159 = vmatprep.subr.mxu0 0.0
        %3160 = vmatpush1.msra.mxu0 0.0
        %3161 = vmatprep.subr.mxu0 0.0
        %3162 = vmatpush1.msra.mxu0 0.0
        %3163 = vmatprep.subr.mxu0 0.0
        %3164 = vmatpush1.msra.mxu0 0.0
        %3165 = vmatprep.subr.mxu0 0.0
        %3166 = vmatpush1.msra.mxu0 0.0
        %3167 = vmatprep.subr.mxu0 0.0
        %3168 = vmatpush1.msra.mxu0 0.0
        %3169 = vmatprep.subr.mxu0 0.0
        %3170 = vmatpush1.msra.mxu0 0.0
        %3171 = vmatprep.subr.mxu0 0.0
        %3172 = vmatpush1.msra.mxu0 0.0
        %3173 = vmatprep.subr.mxu0 0.0
        %3174 = vmatpush1.msra.mxu0 0.0
        %3175 = vmatprep.subr.mxu0 0.0
        %3176 = vmatpush1.msra.mxu0 0.0
        %3177 = vmatprep.subr.mxu0 0.0
        %3178 = vmatpush1.msra.mxu0 0.0
        %3179 = vmatprep.subr.mxu0 0.0
        %3180 = vmatpush1.msra.mxu0 0.0
        %3181 = vmatprep.subr.mxu0 0.0
        %3182 = vmatpush1.msra.mxu0 0.0
        %3183 = vmatprep.subr.mxu0 0.0
        %3184 = vmatpush1.msra.mxu0 0.0
        %3185 = vmatprep.subr.mxu0 0.0
        %3186 = vmatpush1.msra.mxu0 0.0
        %3187 = vmatprep.subr.mxu0 0.0
        %3188 = vmatpush1.msra.mxu0 0.0
        %3189 = vmatprep.subr.mxu0 0.0
        %3190 = vmatpush1.msra.mxu0 0.0
        %3191 = vmatprep.subr.mxu0 0.0
        %3192 = vmatpush1.msra.mxu0 0.0
        %3193 = vmatprep.subr.mxu0 0.0
        %3194 = vmatpush1.msra.mxu0 0.0
        %3195 = vmatprep.subr.mxu0 0.0
        %3196 = vmatpush1.msra.mxu0 0.0
        %3197 = vmatprep.subr.mxu0 0.0
        %3198 = vmatpush1.msra.mxu0 0.0
        %3199 = vmatprep.subr.mxu0 0.0
        %3200 = vmatpush1.msra.mxu0 0.0
        %3201 = vmatprep.subr.mxu0 0.0
        %3202 = vmatpush1.msra.mxu0 0.0
        %3203 = vmatprep.subr.mxu0 0.0
        %3204 = vmatpush1.msra.mxu0 0.0
        %3205 = vmatprep.subr.mxu0 0.0
        %3206 = vmatpush1.msra.mxu0 0.0
        %3207 = vmatprep.mubr.f32.mxu0 0.0
        %3208 = vmatmul.mubr.f32.gmra.mrb[0].mxu0 %v3141
        %v3209 = vpop.f32.mrb[0].mxu0
        %v3210 = vadd.f32 %v3138, %v3209
        %v3211 = vpop.f32.mrb[0].mxu0
        %3212 = vdwg.mxu0
        %v3213 = vadd.f32 %v2129, %v3210
        %v3214 = vld [vmem:[#allocation27] sm:$0x1]
        %v3215 = vld [vmem:[#allocation29] sm:$0x1]
        %v3216 = vsel %vm1062, %v3213, 0.0
        %3217 = vadd.xlane.f32.xlu0 %v3216
        %v3218 = vpop.xlane.xlu0 %3217
        %v3219 = vmul.f32 %v3218, %v2105
        %v3220 = vsub.f32 %v3213, %v3219
        %v3221 = vmul.f32 %v3220, %v3220
        %v3222 = vsel %vm1062, %v3221, 0.0
        %3223 = vadd.xlane.f32.xlu0 %v3222
        %v3224 = vpop.xlane.xlu0 %3223
        %v3225 = vmul.f32 %v3224, %v2105
        %v3226 = vadd.f32 %v3225, 1e-05
        %v3227 = vrsqrt.pop %v3226
        %v3228 = vmul.f32 %v3220, %v3227
        %v3230 = vlaneseq
        %v3231 = vshrl.u32 %v3230, 7
        %v3232 = vsub.s32 0, %v3231
        %v3233 = vrot.slane %v3214, %v3232
        %v3235 = vmul.f32 %v3228, %v3233
        %v3237 = vlaneseq
        %v3238 = vshrl.u32 %v3237, 7
        %v3239 = vsub.s32 0, %v3238
        %v3240 = vrot.slane %v3215, %v3239
        %v3242 = vadd.f32 %v3235, %v3240
        %v3243 = vld [vmem:[#allocation30] sm:$0xff]
        %v3244 = vld [vmem:[#allocation30 + $0x8] sm:$0xff]
        %v3245 = vld [vmem:[#allocation30 + $0x10] sm:$0xff]
        %v3246 = vld [vmem:[#allocation30 + $0x18] sm:$0xff]
        %v3247 = vld [vmem:[#allocation32] sm:$0x1]
        %v3249 = vlaneseq
        %v3250 = vshrl.u32 %v3249, 7
        %v3251 = vsub.s32 0, %v3250
        %v3252 = vrot.slane %v3247, %v3251
        %v3255 = vsel %vm1062, %v3242, 0
        %3257 = vmatprep.subr.mxu0 0.0
        %3258 = vmatpush1.msra.mxu0 %v3243
        %3259 = vmatprep.subr.mxu0 0.0
        %3260 = vmatpush1.msra.mxu0 %v3244
        %3261 = vmatprep.subr.mxu0 0.0
        %3262 = vmatpush1.msra.mxu0 %v3245
        %3263 = vmatprep.subr.mxu0 0.0
        %3264 = vmatpush1.msra.mxu0 %v3246
        %3265 = vmatprep.subr.mxu0 0.0
        %3266 = vmatpush1.msra.mxu0 0.0
        %3267 = vmatprep.subr.mxu0 0.0
        %3268 = vmatpush1.msra.mxu0 0.0
        %3269 = vmatprep.subr.mxu0 0.0
        %3270 = vmatpush1.msra.mxu0 0.0
        %3271 = vmatprep.subr.mxu0 0.0
        %3272 = vmatpush1.msra.mxu0 0.0
        %3273 = vmatprep.subr.mxu0 0.0
        %3274 = vmatpush1.msra.mxu0 0.0
        %3275 = vmatprep.subr.mxu0 0.0
        %3276 = vmatpush1.msra.mxu0 0.0
        %3277 = vmatprep.subr.mxu0 0.0
        %3278 = vmatpush1.msra.mxu0 0.0
        %3279 = vmatprep.subr.mxu0 0.0
        %3280 = vmatpush1.msra.mxu0 0.0
        %3281 = vmatprep.subr.mxu0 0.0
        %3282 = vmatpush1.msra.mxu0 0.0
        %3283 = vmatprep.subr.mxu0 0.0
        %3284 = vmatpush1.msra.mxu0 0.0
        %3285 = vmatprep.subr.mxu0 0.0
        %3286 = vmatpush1.msra.mxu0 0.0
        %3287 = vmatprep.subr.mxu0 0.0
        %3288 = vmatpush1.msra.mxu0 0.0
        %3289 = vmatprep.subr.mxu0 0.0
        %3290 = vmatpush1.msra.mxu0 0.0
        %3291 = vmatprep.subr.mxu0 0.0
        %3292 = vmatpush1.msra.mxu0 0.0
        %3293 = vmatprep.subr.mxu0 0.0
        %3294 = vmatpush1.msra.mxu0 0.0
        %3295 = vmatprep.subr.mxu0 0.0
        %3296 = vmatpush1.msra.mxu0 0.0
        %3297 = vmatprep.subr.mxu0 0.0
        %3298 = vmatpush1.msra.mxu0 0.0
        %3299 = vmatprep.subr.mxu0 0.0
        %3300 = vmatpush1.msra.mxu0 0.0
        %3301 = vmatprep.subr.mxu0 0.0
        %3302 = vmatpush1.msra.mxu0 0.0
        %3303 = vmatprep.subr.mxu0 0.0
        %3304 = vmatpush1.msra.mxu0 0.0
        %3305 = vmatprep.subr.mxu0 0.0
        %3306 = vmatpush1.msra.mxu0 0.0
        %3307 = vmatprep.subr.mxu0 0.0
        %3308 = vmatpush1.msra.mxu0 0.0
        %3309 = vmatprep.subr.mxu0 0.0
        %3310 = vmatpush1.msra.mxu0 0.0
        %3311 = vmatprep.subr.mxu0 0.0
        %3312 = vmatpush1.msra.mxu0 0.0
        %3313 = vmatprep.subr.mxu0 0.0
        %3314 = vmatpush1.msra.mxu0 0.0
        %3315 = vmatprep.subr.mxu0 0.0
        %3316 = vmatpush1.msra.mxu0 0.0
        %3317 = vmatprep.subr.mxu0 0.0
        %3318 = vmatpush1.msra.mxu0 0.0
        %3319 = vmatprep.subr.mxu0 0.0
        %3320 = vmatpush1.msra.mxu0 0.0
        %3321 = vmatprep.mubr.f32.mxu0 0.0
        %3322 = vmatmul.mubr.f32.gmra.mrb[0].mxu0 %v3255
        %v3323 = vpop.f32.mrb[0].mxu0
        %v3324 = vadd.f32 %v3252, %v3323
        %v3325 = vpop.f32.mrb[0].mxu0
        %3326 = vdwg.mxu0
        %v3327 = vmax.f32 %v3324, 0.0
        %v3328 = vld [vmem:[#allocation33] sm:$0xff]
        %v3329 = vld [vmem:[#allocation33 + $0x8] sm:$0xff]
        %v3330 = vld [vmem:[#allocation33 + $0x10] sm:$0xff]
        %v3331 = vld [vmem:[#allocation33 + $0x18] sm:$0xff]
        %v3332 = vld [vmem:[#allocation33 + $0x20] sm:$0xff]
        %v3333 = vld [vmem:[#allocation33 + $0x28] sm:$0xff]
        %v3334 = vld [vmem:[#allocation33 + $0x30] sm:$0xff]
        %v3335 = vld [vmem:[#allocation33 + $0x38] sm:$0xff]
        %v3336 = vld [vmem:[#allocation35] sm:$0x1]
        %v3338 = vlaneseq
        %v3339 = vshrl.u32 %v3338, 7
        %v3340 = vsub.s32 0, %v3339
        %v3341 = vrot.slane %v3336, %v3340
        %vm3343 = vcmask 523264
        %v3345 = vsel %vm3343, %v3327, 0
        %3347 = vmatprep.subr.mxu0 0.0
        %3348 = vmatpush1.msra.mxu0 %v3328
        %3349 = vmatprep.subr.mxu0 0.0
        %3350 = vmatpush1.msra.mxu0 %v3329
        %3351 = vmatprep.subr.mxu0 0.0
        %3352 = vmatpush1.msra.mxu0 %v3330
        %3353 = vmatprep.subr.mxu0 0.0
        %3354 = vmatpush1.msra.mxu0 %v3331
        %3355 = vmatprep.subr.mxu0 0.0
        %3356 = vmatpush1.msra.mxu0 %v3332
        %3357 = vmatprep.subr.mxu0 0.0
        %3358 = vmatpush1.msra.mxu0 %v3333
        %3359 = vmatprep.subr.mxu0 0.0
        %3360 = vmatpush1.msra.mxu0 %v3334
        %3361 = vmatprep.subr.mxu0 0.0
        %3362 = vmatpush1.msra.mxu0 %v3335
        %3363 = vmatprep.subr.mxu0 0.0
        %3364 = vmatpush1.msra.mxu0 0.0
        %3365 = vmatprep.subr.mxu0 0.0
        %3366 = vmatpush1.msra.mxu0 0.0
        %3367 = vmatprep.subr.mxu0 0.0
        %3368 = vmatpush1.msra.mxu0 0.0
        %3369 = vmatprep.subr.mxu0 0.0
        %3370 = vmatpush1.msra.mxu0 0.0
        %3371 = vmatprep.subr.mxu0 0.0
        %3372 = vmatpush1.msra.mxu0 0.0
        %3373 = vmatprep.subr.mxu0 0.0
        %3374 = vmatpush1.msra.mxu0 0.0
        %3375 = vmatprep.subr.mxu0 0.0
        %3376 = vmatpush1.msra.mxu0 0.0
        %3377 = vmatprep.subr.mxu0 0.0
        %3378 = vmatpush1.msra.mxu0 0.0
        %3379 = vmatprep.subr.mxu0 0.0
        %3380 = vmatpush1.msra.mxu0 0.0
        %3381 = vmatprep.subr.mxu0 0.0
        %3382 = vmatpush1.msra.mxu0 0.0
        %3383 = vmatprep.subr.mxu0 0.0
        %3384 = vmatpush1.msra.mxu0 0.0
        %3385 = vmatprep.subr.mxu0 0.0
        %3386 = vmatpush1.msra.mxu0 0.0
        %3387 = vmatprep.subr.mxu0 0.0
        %3388 = vmatpush1.msra.mxu0 0.0
        %3389 = vmatprep.subr.mxu0 0.0
        %3390 = vmatpush1.msra.mxu0 0.0
        %3391 = vmatprep.subr.mxu0 0.0
        %3392 = vmatpush1.msra.mxu0 0.0
        %3393 = vmatprep.subr.mxu0 0.0
        %3394 = vmatpush1.msra.mxu0 0.0
        %3395 = vmatprep.subr.mxu0 0.0
        %3396 = vmatpush1.msra.mxu0 0.0
        %3397 = vmatprep.subr.mxu0 0.0
        %3398 = vmatpush1.msra.mxu0 0.0
        %3399 = vmatprep.subr.mxu0 0.0
        %3400 = vmatpush1.msra.mxu0 0.0
        %3401 = vmatprep.subr.mxu0 0.0
        %3402 = vmatpush1.msra.mxu0 0.0
        %3403 = vmatprep.subr.mxu0 0.0
        %3404 = vmatpush1.msra.mxu0 0.0
        %3405 = vmatprep.subr.mxu0 0.0
        %3406 = vmatpush1.msra.mxu0 0.0
        %3407 = vmatprep.subr.mxu0 0.0
        %3408 = vmatpush1.msra.mxu0 0.0
        %3409 = vmatprep.subr.mxu0 0.0
        %3410 = vmatpush1.msra.mxu0 0.0
        %3411 = vmatprep.mubr.f32.mxu0 0.0
        %3412 = vmatmul.mubr.f32.gmra.mrb[0].mxu0 %v3345
        %v3413 = vpop.f32.mrb[0].mxu0
        %v3414 = vadd.f32 %v3341, %v3413
        %v3415 = vpop.f32.mrb[0].mxu0
        %3416 = vdwg.mxu0
        %v3417 = vadd.f32 %v3242, %v3414
        %v3418 = vld [vmem:[#allocation36] sm:$0x1]
        %v3419 = vld [vmem:[#allocation38] sm:$0x1]
        %v3420 = vsel %vm1062, %v3417, 0.0
        %3421 = vadd.xlane.f32.xlu0 %v3420
        %v3422 = vpop.xlane.xlu0 %3421
        %v3423 = vmul.f32 %v3422, %v2105
        %v3424 = vsub.f32 %v3417, %v3423
        %v3425 = vmul.f32 %v3424, %v3424
        %v3426 = vsel %vm1062, %v3425, 0.0
        %3427 = vadd.xlane.f32.xlu0 %v3426
        %v3428 = vpop.xlane.xlu0 %3427
        %v3429 = vmul.f32 %v3428, %v2105
        %v3430 = vadd.f32 %v3429, 1e-05
        %v3431 = vrsqrt.pop %v3430
        %v3432 = vmul.f32 %v3424, %v3431
        %v3434 = vlaneseq
        %v3435 = vshrl.u32 %v3434, 7
        %v3436 = vsub.s32 0, %v3435
        %v3437 = vrot.slane %v3418, %v3436
        %v3439 = vmul.f32 %v3432, %v3437
        %v3441 = vlaneseq
        %v3442 = vshrl.u32 %v3441, 7
        %v3443 = vsub.s32 0, %v3442
        %v3444 = vrot.slane %v3419, %v3443
        %v3446 = vadd.f32 %v3439, %v3444
        %3447 = vst.msk [vmem:[%s1047] sm:$0xff] %vm1062, %v3446
        %s3448 = sand.u32 %s554, 1
        %s3449 = scalar_lea.sflag [#allocation5], %s3448
        %s3450 = sand.u32 %s554, 1
        %s3451 = smul.addr %s3450, 8
        %s3452 = scalar_lea.vmem [#allocation39], %s3451
        // Predicated region
        $region205: #{decoder_layer.1} parent=111 // pred_check
          %p3453 = pneg %p564
        $region206: #{decoder_layer.1} parent=111 // pred_check_branch
          %3455 = sbr.rel (%p3453) target = $region208
        $region207: #{decoder_layer.1} parent=111 // pred_region
          %s3457 = ssub.s32 128, 128
          %3458 = vsyncadd %s3449, %s3457
          %s3459 = smul.addr %s53, 128
          %s3460 = scalar_lea.hbm %s23, %s3459
          %s3462 = sshll.u32 %s3452, 4
          %s3463 = int_to_ptr.vmem [resolvable:$true] %s3462
          %3465 = dma.vmem_to_hbm [thread:$0]  %s3463, 128, %s3460, %s3449
        $region208: #{decoder_layer.1} parent=111 // pred_fallthru
          _
      $region112: #{decoder_layer.1} parent=5 // pred_fallthru
        _
      %p3466 = scmp.le.s32.totalorder 2, %s48
      // Predicated region
      $region209: #{decoder_layer.1} parent=5 // pred_check
        %p3467 = pneg %p3466
      $region210: #{decoder_layer.1} parent=5 // pred_check_branch
        %3469 = sbr.rel (%p3467) target = $region212
      $region211: #{decoder_layer.1} parent=5 // pred_region
        %s3470 = ssub.s32 %s48, 2
        // Predicated region
        $region213: #{decoder_layer.1} parent=211 // pred_check
          %p3471 = pneg %p570
        $region214: #{decoder_layer.1} parent=211 // pred_check_branch
          %3473 = sbr.rel (%p3471) target = $region216
        $region215: #{decoder_layer.1} parent=211 // pred_region
          %s3474 = sand.u32 %s555, 1
          %s3475 = scalar_lea.sflag [#allocation5], %s3474
          %s3476 = sand.u32 %s555, 1
          %s3477 = smul.addr %s3476, 8
          %s3478 = scalar_lea.vmem [#allocation39], %s3477
          %3479 = dma.done %s3475, 128
        $region216: #{decoder_layer.1} parent=211 // pred_fallthru
          _
      $region212: #{decoder_layer.1} parent=5 // pred_fallthru
        _
    $region6: #{decoder_layer.1} parent=1 // loop_footer
      %s52 = sadd.s32 1, %s48
    $region7: #{decoder_layer.1} parent=1 // loop_footer_branch
      %47 = sbr.rel target = $region3
    $region8: #{decoder_layer.1} parent=1 // loop_exit
      _
    %3480 = vsyncpa [#allocation4], 1
    %s3481 = scalar_lea.sflag [#allocation4], 1
    %3482 = vsyncpa %s3481, 1
    %3483 = vsyncpa [#allocation7], 1
    %s3484 = scalar_lea.sflag [#allocation7], 1
    %3485 = vsyncpa %s3484, 1
    %3486 = vsyncpa [#allocation10], 1
    %3487 = vsyncpa [#allocation13], 1
    %3488 = vsyncpa [#allocation16], 1
    %3489 = vsyncpa [#allocation19], 1
    %3490 = vsyncpa [#allocation22], 1
    %3491 = vsyncpa [#allocation25], 1
    %3492 = vsyncpa [#allocation28], 1
    %3493 = vsyncpa [#allocation31], 1
    %3494 = vsyncpa [#allocation34], 1
    %3495 = vsyncpa [#allocation37], 1
    %3496 = vsyncpa [#allocation5], 1
    %s3497 = scalar_lea.sflag [#allocation5], 1
    %3498 = vsyncpa %s3497, 1

</llo_original>
